<compile_context>
chip_gen: v6e
topology: v6e:2x2x1
jax: 0.10.0
libtpu: 0.0.40
codegen_flags: <defaults>
</compile_context>

<pallas_src>
import functools

import jax
import jax.numpy as jnp
from jax.experimental import pallas as pl
from jax.experimental.pallas import tpu as pltpu


# --------------------------------------------------------------------------
# helpers
# --------------------------------------------------------------------------
def _hardswish(x):
    return x * jnp.clip(x + 3.0, 0.0, 6.0) * (1.0 / 6.0)


def _choose_tk(d_total):
    """Largest K-tile (multiple of 128) giving >=2 reduction steps.

    Never falls back to a non-128-multiple tile; callers zero-pad the
    contraction dim up to a multiple of the returned tile.
    """
    for cand in (4096, 2048, 1024, 512, 256, 128):
        if d_total >= 2 * cand:
            return cand
    return 128


def _im2col_stride2(x_nhwc, k=3, pad=1, kpad=32):
    """Patches for the 3x3 stride-2 stem conv; contraction dim padded to kpad."""
    B, H, W, C = x_nhwc.shape
    xp = jnp.pad(x_nhwc, ((0, 0), (pad, pad), (pad, pad), (0, 0)))
    Ho = (H + 2 * pad - k) // 2 + 1
    Wo = (W + 2 * pad - k) // 2 + 1
    cols = []
    for ky in range(k):
        for kx in range(k):
            cols.append(xp[:, ky:ky + 2 * Ho:2, kx:kx + 2 * Wo:2, :])
    patches = jnp.concatenate(cols, axis=-1).reshape(B, Ho * Wo, k * k * C)
    patches = jnp.pad(patches, ((0, 0), (0, 0), (0, kpad - k * k * C)))
    return patches, Ho, Wo


# --------------------------------------------------------------------------
# Kernel 1: fused feature path (stem conv -> dw conv -> pw conv -> GAP)
# --------------------------------------------------------------------------
def _feature_kernel(patches_ref, w_stem_ref, b_stem_ref, w_dw_ref, b_dw_ref,
                    w_pw_ref, b_pw_ref, feat_ref, hpad_ref,
                    *, Ho, Wo, cstem, cfeat):
    # stem 3x3 stride-2 conv as ONE matmul on pre-extracted patches (bf16 MXU)
    h1 = jnp.dot(patches_ref[0], w_stem_ref[...],
                 preferred_element_type=jnp.float32)          # (Ho*Wo, cstem)
    h1 = _hardswish(h1 + b_stem_ref[...])

    # zero-padded activation buffer in VMEM: one zero-init + one block store
    hpad_ref[...] = jnp.zeros_like(hpad_ref)
    hpad_ref[1:Ho + 1, 1:Wo + 1, :] = h1.reshape(Ho, Wo, cstem)

    # depthwise 3x3 (+relu): sum of 9 statically shifted slabs (vectorized)
    # TODO(synk): cstem=16 (<128 lanes); a lane-dense (W*C) packing would
    # raise lane utilization, but this stage is negligible at these sizes.
    d = jnp.zeros((Ho, Wo, cstem), jnp.float32)
    for ky in range(3):
        for kx in range(3):
            idx = ky * 3 + kx
            d = d + hpad_ref[ky:ky + Ho, kx:kx + Wo, :] * w_dw_ref[idx:idx + 1, :]
    d = jnp.maximum(d + b_dw_ref[...], 0.0)
    d = d.reshape(Ho * Wo, cstem).astype(jnp.bfloat16)

    # pointwise 1x1 to cfeat (+hardswish): ONE (Ho*Wo, cstem)x(cstem, cfeat)
    r = jnp.dot(d, w_pw_ref[...], preferred_element_type=jnp.float32)
    r = _hardswish(r + b_pw_ref[...])                          # (Ho*Wo, cfeat)

    # global average pool -> (1, 1, cfeat)
    pooled = jnp.mean(r, axis=0, keepdims=True)
    feat_ref[...] = pooled[None, :, :].astype(feat_ref.dtype)


def feature_extractor(patches, p, Ho, Wo):
    B, _, kp = patches.shape
    cstem = p["w_stem"].shape[1]
    cfeat = p["w_pw"].shape[1]
    kern = functools.partial(_feature_kernel, Ho=Ho, Wo=Wo,
                             cstem=cstem, cfeat=cfeat)
    return pl.pallas_call(
        kern,
        out_shape=jax.ShapeDtypeStruct((B, 1, cfeat), jnp.bfloat16),
        grid=(B,),
        in_specs=[
            pl.BlockSpec((1, Ho * Wo, kp), lambda b: (b, 0, 0)),
            pl.BlockSpec((kp, cstem), lambda b: (0, 0)),
            pl.BlockSpec((1, cstem), lambda b: (0, 0)),
            pl.BlockSpec((9, cstem), lambda b: (0, 0)),
            pl.BlockSpec((1, cstem), lambda b: (0, 0)),
            pl.BlockSpec((cstem, cfeat), lambda b: (0, 0)),
            pl.BlockSpec((1, cfeat), lambda b: (0, 0)),
        ],
        out_specs=pl.BlockSpec((1, 1, cfeat), lambda b: (b, 0, 0)),
        scratch_shapes=[pltpu.VMEM((Ho + 2, Wo + 2, cstem), jnp.float32)],
        compiler_params=pltpu.CompilerParams(
            dimension_semantics=("parallel",)),
    )(patches, p["w_stem"], p["b_stem"], p["w_dw"], p["b_dw"],
      p["w_pw"], p["b_pw"])


# --------------------------------------------------------------------------
# Kernel 2: fc1 as a K-tiled, batch-folded, column-split GEMM
# --------------------------------------------------------------------------
def _fc1_kernel(z_ref, w1_ref, b1_ref, h1_ref, acc_ref):
    k = pl.program_id(1)

    @pl.when(k == 0)
    def _init():
        acc_ref[...] = jnp.zeros_like(acc_ref)

    # whole batch in one block; w1 column-block streamed over K exactly once
    acc_ref[...] += jnp.dot(z_ref[...], w1_ref[...],
                            preferred_element_type=jnp.float32)

    @pl.when(k == pl.num_programs(1) - 1)
    def _finalize():
        # fc1 bias + relu (dropout is identity in eval mode)
        h1_ref[...] = jnp.maximum(acc_ref[...] + b1_ref[...],
                                  0.0).astype(h1_ref.dtype)


def fc1_gemv(z, p):
    B, dpad = z.shape
    tk = p["tk"]
    kt = dpad // tk
    ncb = p["n_col_blocks"]
    cb = p["b1"].shape[1] // ncb
    return pl.pallas_call(
        _fc1_kernel,
        out_shape=jax.ShapeDtypeStruct((B, p["b1"].shape[1]), jnp.bfloat16),
        grid=(ncb, kt),                     # column blocks parallel, K inner
        in_specs=[
            pl.BlockSpec((B, tk), lambda c, k: (0, k)),    # activations (tiny)
            pl.BlockSpec((tk, cb), lambda c, k: (k, c)),   # big weight, 1 pass
            pl.BlockSpec((1, cb), lambda c, k: (0, c)),
        ],
        out_specs=pl.BlockSpec((B, cb), lambda c, k: (0, c)),
        scratch_shapes=[pltpu.VMEM((B, cb), jnp.float32)],
        compiler_params=pltpu.CompilerParams(
            dimension_semantics=("parallel", "arbitrary"),
            vmem_limit_bytes=48 * 1024 * 1024),
    )(z, p["w1"], p["b1"])


# --------------------------------------------------------------------------
# Kernel 3: tiny fc2 (+relu) -> fc3 head, single block
# --------------------------------------------------------------------------
def _fc23_kernel(h1_ref, w2_ref, b2_ref, w3_ref, b3_ref, out_ref):
    h2 = jnp.dot(h1_ref[...], w2_ref[...],
                 preferred_element_type=jnp.float32) + b2_ref[...]
    h2 = jnp.maximum(h2, 0.0).astype(jnp.bfloat16)             # fc2 + relu
    out_ref[...] = (jnp.dot(h2, w3_ref[...],
                            preferred_element_type=jnp.float32)
                    + b3_ref[...]).astype(out_ref.dtype)        # fc3


def fc23_head(h1, p):
    B, d1 = h1.shape
    d2 = p["w2"].shape[1]
    npad = p["b3"].shape[1]
    return pl.pallas_call(
        _fc23_kernel,
        out_shape=jax.ShapeDtypeStruct((B, npad), jnp.float32),
        grid=(1,),
        in_specs=[
            pl.BlockSpec((B, d1), lambda i: (0, 0)),
            pl.BlockSpec((d1, d2), lambda i: (0, 0)),
            pl.BlockSpec((1, d2), lambda i: (0, 0)),
            pl.BlockSpec((d2, npad), lambda i: (0, 0)),
            pl.BlockSpec((1, npad), lambda i: (0, 0)),
        ],
        out_specs=pl.BlockSpec((B, npad), lambda i: (0, 0)),
    )(h1, p["w2"], p["b2"], p["w3"], p["b3"])


# --------------------------------------------------------------------------
# Parameters (deterministic, synthetic)
# --------------------------------------------------------------------------
def init_params(key, num_classes, *, cin=3, cstem=16, cfeat=576,
                hist_size=768, texture_size=1536):
    ks = jax.random.split(key, 9)

    def w(k, shape, fan_in, dtype=jnp.float32):
        return (jax.random.normal(k, shape, jnp.float32) /
                jnp.sqrt(float(fan_in))).astype(dtype)

    d_total = cfeat + hist_size + texture_size
    tk = _choose_tk(d_total)
    dpad = ((d_total + tk - 1) // tk) * tk
    npad = ((num_classes + 127) // 128) * 128
    kk = 3 * 3 * cin
    kp = ((kk + 7) // 8) * 8

    p = {"num_classes": num_classes, "tk": tk, "d_padded": dpad,
         "n_col_blocks": 2}

    # feature-path weights (bf16 matmul operands, f32 biases / dw weights)
    p["w_stem"] = jnp.pad(w(ks[0], (kk, cstem), kk),
                          ((0, kp - kk), (0, 0))).astype(jnp.bfloat16)
    p["b_stem"] = jnp.zeros((1, cstem), jnp.float32)
    p["w_dw"] = w(ks[1], (9, cstem), 9)
    p["b_dw"] = jnp.zeros((1, cstem), jnp.float32)
    p["w_pw"] = w(ks[2], (cstem, cfeat), cstem, jnp.bfloat16)
    p["b_pw"] = jnp.zeros((1, cfeat), jnp.float32)

    # head: fc1 weight pre-stacked over [feat | hist | texture] rows and
    # zero-padded to a multiple of the K tile (bf16 MXU operands, f32 biases)
    w1 = w(ks[3], (d_total, 1024), d_total, jnp.bfloat16)
    p["w1"] = jnp.pad(w1, ((0, dpad - d_total), (0, 0)))
    p["b1"] = w(ks[4], (1, 1024), d_total)
    p["w2"] = w(ks[5], (1024, 512), 1024, jnp.bfloat16)
    p["b2"] = w(ks[6], (1, 512), 1024)
    p["w3"] = w(ks[7], (512, npad), 512, jnp.bfloat16)
    p["b3"] = w(ks[8], (1, npad), 512)
    return p


# --------------------------------------------------------------------------
# Forward pass (mirrors MobileNetWithTextureHist.forward, eval mode)
# --------------------------------------------------------------------------
def mobilenet_with_texture_hist(params, x_nchw, hist, texture):
    num_classes = params["num_classes"]

    # NCHW -> NHWC once + patch extraction for the stride-2 stem conv (tiny)
    x = jnp.transpose(x_nchw, (0, 2, 3, 1))
    patches, Ho, Wo = _im2col_stride2(x, kpad=params["w_stem"].shape[0])
    patches = patches.astype(jnp.bfloat16)

    # fused backbone features + global avg pool -> (B, 1, 576) bf16
    feat = feature_extractor(patches, params, Ho, Wo)

    # torch.cat((x, hist, texture), dim=1) done once here; fc1 weight is
    # pre-stacked so the huge contraction is a single K-tiled stream.
    if hist.ndim == 1:
        hist = hist[None, :]
    if texture.ndim == 1:
        texture = texture[None, :]
    z = jnp.concatenate([feat[:, 0, :],
                         hist.astype(jnp.bfloat16),
                         texture.astype(jnp.bfloat16)], axis=1)
    dpad = params["d_padded"]
    if z.shape[1] < dpad:
        z = jnp.pad(z, ((0, 0), (0, dpad - z.shape[1])))

    h1 = fc1_gemv(z, params)            # (B, 1024) bf16, relu'd
    out = fc23_head(h1, params)         # (B, NPAD) f32
    return out[:, :num_classes]


# --------------------------------------------------------------------------
if __name__ == "__main__":
    key = jax.random.PRNGKey(0)
    k_x, k_h, k_t, k_p = jax.random.split(key, 4)

    B = 2
    num_classes = 6
    hist_size = 768                 # as in the module
    texture_size = 1536             # scaled down from 602112 for a small demo

    x = jax.random.normal(k_x, (B, 3, 16, 16), jnp.float32)       # NCHW input
    hist = jax.random.normal(k_h, (B, hist_size), jnp.float32)
    texture = jax.random.normal(k_t, (B, texture_size), jnp.float32)

    params = init_params(k_p, num_classes,
                         hist_size=hist_size, texture_size=texture_size)

    fwd = jax.jit(functools.partial(mobilenet_with_texture_hist, params))
    out = fwd(x, hist, texture)
    jax.block_until_ready(out)

    assert out.shape == (B, num_classes), out.shape
    assert bool(jnp.all(jnp.isfinite(out)))
    print("KERNEL_OK")
</pallas_src>

<mosaic_0001>
module attributes {stable_mosaic.version = 11 : i64} {
  func.func @_feature_kernel(%arg0: i32, %arg1: memref<1x64x32xbf16, #tpu.memory_space<vmem>>, %arg2: memref<32x16xbf16, #tpu.memory_space<vmem>>, %arg3: memref<1x16xf32, #tpu.memory_space<vmem>>, %arg4: memref<9x16xf32, #tpu.memory_space<vmem>>, %arg5: memref<1x16xf32, #tpu.memory_space<vmem>>, %arg6: memref<16x576xbf16, #tpu.memory_space<vmem>>, %arg7: memref<1x576xf32, #tpu.memory_space<vmem>>, %arg8: memref<1x1x576xbf16, #tpu.memory_space<vmem>>, %arg9: memref<10x10x16xf32, #tpu.memory_space<vmem>>) attributes {dimension_semantics = [#tpu.dimension_semantics<parallel>], iteration_bounds = array<i64: 2>, scalar_prefetch = 0 : i64, scratch_operands = 1 : i64, tpu.core_type = #tpu.core_type<tc>, window_params = [{transform_indices = @transform_0, window_bounds = array<i64: 1, 64, 32>}, {pipeline_mode = #tpu.pipeline_mode<synchronous>, transform_indices = @transform_1, window_bounds = array<i64: 32, 16>}, {pipeline_mode = #tpu.pipeline_mode<synchronous>, transform_indices = @transform_2, window_bounds = array<i64: 1, 16>}, {pipeline_mode = #tpu.pipeline_mode<synchronous>, transform_indices = @transform_3, window_bounds = array<i64: 9, 16>}, {pipeline_mode = #tpu.pipeline_mode<synchronous>, transform_indices = @transform_4, window_bounds = array<i64: 1, 16>}, {pipeline_mode = #tpu.pipeline_mode<synchronous>, transform_indices = @transform_5, window_bounds = array<i64: 16, 576>}, {pipeline_mode = #tpu.pipeline_mode<synchronous>, transform_indices = @transform_6, window_bounds = array<i64: 1, 576>}, {transform_indices = @transform_7, window_bounds = array<i64: 1, 1, 576>}]} {
    %c0 = arith.constant 0 : index
    %c0_0 = arith.constant 0 : index
    %c0_1 = arith.constant 0 : index
    %0 = vector.load %arg1[%c0, %c0_0, %c0_1] : memref<1x64x32xbf16, #tpu.memory_space<vmem>>, vector<1x64x32xbf16>
    %1 = vector.shape_cast %0 : vector<1x64x32xbf16> to vector<64x32xbf16>
    %c0_2 = arith.constant 0 : index
    %c0_3 = arith.constant 0 : index
    %2 = vector.load %arg2[%c0_2, %c0_3] : memref<32x16xbf16, #tpu.memory_space<vmem>>, vector<32x16xbf16>
    %cst = arith.constant dense<0.000000e+00> : vector<64x16xf32>
    %3 = tpu.matmul %1, %2, %cst {dimension_numbers = #tpu.dot_dimension_numbers<[1], [0], [0], [1], [0, 0, 1, 1], [], []>} : vector<64x32xbf16>, vector<32x16xbf16>, vector<64x16xf32> -> vector<64x16xf32>
    %c0_4 = arith.constant 0 : index
    %c0_5 = arith.constant 0 : index
    %4 = vector.load %arg3[%c0_4, %c0_5] : memref<1x16xf32, #tpu.memory_space<vmem>>, vector<1x16xf32>
    %5 = vector.broadcast %4 : vector<1x16xf32> to vector<64x16xf32>
    %6 = arith.addf %3, %5 : vector<64x16xf32>
    %cst_6 = arith.constant 3.000000e+00 : f32
    %7 = vector.broadcast %cst_6 : f32 to vector<64x16xf32>
    %8 = arith.addf %6, %7 : vector<64x16xf32>
    %cst_7 = arith.constant 0.000000e+00 : f32
    %cst_8 = arith.constant 6.000000e+00 : f32
    %9 = vector.broadcast %cst_7 : f32 to vector<64x16xf32>
    %10 = arith.maximumf %9, %8 : vector<64x16xf32>
    %11 = vector.broadcast %cst_8 : f32 to vector<64x16xf32>
    %12 = arith.minimumf %11, %10 : vector<64x16xf32>
    %13 = arith.mulf %6, %12 : vector<64x16xf32>
    %cst_9 = arith.constant 0.166666672 : f32
    %14 = vector.broadcast %cst_9 : f32 to vector<64x16xf32>
    %15 = arith.mulf %13, %14 : vector<64x16xf32>
    %cst_10 = arith.constant 0.000000e+00 : f32
    %16 = vector.broadcast %cst_10 : f32 to vector<10x10x16xf32>
    %c0_11 = arith.constant 0 : index
    %c0_12 = arith.constant 0 : index
    %c0_13 = arith.constant 0 : index
    %17 = vector.load %arg9[%c0_11, %c0_12, %c0_13] : memref<10x10x16xf32, #tpu.memory_space<vmem>>, vector<10x10x16xf32>
    tpu.vector_store %arg9[%c0_11, %c0_12, %c0_13], %16 {strides = array<i32>} : memref<10x10x16xf32, #tpu.memory_space<vmem>>, vector<10x10x16xf32>,
    %18 = vector.shape_cast %15 : vector<64x16xf32> to vector<8x8x16xf32>
    %c1 = arith.constant 1 : index
    %c1_14 = arith.constant 1 : index
    %c0_15 = arith.constant 0 : index
    %19 = vector.load %arg9[%c1, %c1_14, %c0_15] : memref<10x10x16xf32, #tpu.memory_space<vmem>>, vector<8x8x16xf32>
    tpu.vector_store %arg9[%c1, %c1_14, %c0_15], %18 {strides = array<i32>} : memref<10x10x16xf32, #tpu.memory_space<vmem>>, vector<8x8x16xf32>,
    %cst_16 = arith.constant 0.000000e+00 : f32
    %20 = vector.broadcast %cst_16 : f32 to vector<8x8x16xf32>
    %c0_17 = arith.constant 0 : index
    %c0_18 = arith.constant 0 : index
    %c0_19 = arith.constant 0 : index
    %21 = vector.load %arg9[%c0_17, %c0_18, %c0_19] : memref<10x10x16xf32, #tpu.memory_space<vmem>>, vector<8x8x16xf32>
    %c0_20 = arith.constant 0 : index
    %c0_21 = arith.constant 0 : index
    %22 = vector.load %arg4[%c0_20, %c0_21] : memref<9x16xf32, #tpu.memory_space<vmem>>, vector<1x16xf32>
    %23 = vector.shape_cast %22 : vector<1x16xf32> to vector<1x1x16xf32>
    %24 = vector.broadcast %23 : vector<1x1x16xf32> to vector<8x8x16xf32>
    %25 = arith.mulf %21, %24 : vector<8x8x16xf32>
    %26 = arith.addf %20, %25 : vector<8x8x16xf32>
    %c0_22 = arith.constant 0 : index
    %c1_23 = arith.constant 1 : index
    %c0_24 = arith.constant 0 : index
    %27 = vector.load %arg9[%c0_22, %c1_23, %c0_24] : memref<10x10x16xf32, #tpu.memory_space<vmem>>, vector<8x8x16xf32>
    %c1_25 = arith.constant 1 : index
    %c0_26 = arith.constant 0 : index
    %28 = vector.load %arg4[%c1_25, %c0_26] : memref<9x16xf32, #tpu.memory_space<vmem>>, vector<1x16xf32>
    %29 = vector.shape_cast %28 : vector<1x16xf32> to vector<1x1x16xf32>
    %30 = vector.broadcast %29 : vector<1x1x16xf32> to vector<8x8x16xf32>
    %31 = arith.mulf %27, %30 : vector<8x8x16xf32>
    %32 = arith.addf %26, %31 : vector<8x8x16xf32>
    %c0_27 = arith.constant 0 : index
    %c2 = arith.constant 2 : index
    %c0_28 = arith.constant 0 : index
    %33 = vector.load %arg9[%c0_27, %c2, %c0_28] : memref<10x10x16xf32, #tpu.memory_space<vmem>>, vector<8x8x16xf32>
    %c2_29 = arith.constant 2 : index
    %c0_30 = arith.constant 0 : index
    %34 = vector.load %arg4[%c2_29, %c0_30] : memref<9x16xf32, #tpu.memory_space<vmem>>, vector<1x16xf32>
    %35 = vector.shape_cast %34 : vector<1x16xf32> to vector<1x1x16xf32>
    %36 = vector.broadcast %35 : vector<1x1x16xf32> to vector<8x8x16xf32>
    %37 = arith.mulf %33, %36 : vector<8x8x16xf32>
    %38 = arith.addf %32, %37 : vector<8x8x16xf32>
    %c1_31 = arith.constant 1 : index
    %c0_32 = arith.constant 0 : index
    %c0_33 = arith.constant 0 : index
    %39 = vector.load %arg9[%c1_31, %c0_32, %c0_33] : memref<10x10x16xf32, #tpu.memory_space<vmem>>, vector<8x8x16xf32>
    %c3 = arith.constant 3 : index
    %c0_34 = arith.constant 0 : index
    %40 = vector.load %arg4[%c3, %c0_34] : memref<9x16xf32, #tpu.memory_space<vmem>>, vector<1x16xf32>
    %41 = vector.shape_cast %40 : vector<1x16xf32> to vector<1x1x16xf32>
    %42 = vector.broadcast %41 : vector<1x1x16xf32> to vector<8x8x16xf32>
    %43 = arith.mulf %39, %42 : vector<8x8x16xf32>
    %44 = arith.addf %38, %43 : vector<8x8x16xf32>
    %c1_35 = arith.constant 1 : index
    %c1_36 = arith.constant 1 : index
    %c0_37 = arith.constant 0 : index
    %45 = vector.load %arg9[%c1_35, %c1_36, %c0_37] : memref<10x10x16xf32, #tpu.memory_space<vmem>>, vector<8x8x16xf32>
    %c4 = arith.constant 4 : index
    %c0_38 = arith.constant 0 : index
    %46 = vector.load %arg4[%c4, %c0_38] : memref<9x16xf32, #tpu.memory_space<vmem>>, vector<1x16xf32>
    %47 = vector.shape_cast %46 : vector<1x16xf32> to vector<1x1x16xf32>
    %48 = vector.broadcast %47 : vector<1x1x16xf32> to vector<8x8x16xf32>
    %49 = arith.mulf %45, %48 : vector<8x8x16xf32>
    %50 = arith.addf %44, %49 : vector<8x8x16xf32>
    %c1_39 = arith.constant 1 : index
    %c2_40 = arith.constant 2 : index
    %c0_41 = arith.constant 0 : index
    %51 = vector.load %arg9[%c1_39, %c2_40, %c0_41] : memref<10x10x16xf32, #tpu.memory_space<vmem>>, vector<8x8x16xf32>
    %c5 = arith.constant 5 : index
    %c0_42 = arith.constant 0 : index
    %52 = vector.load %arg4[%c5, %c0_42] : memref<9x16xf32, #tpu.memory_space<vmem>>, vector<1x16xf32>
    %53 = vector.shape_cast %52 : vector<1x16xf32> to vector<1x1x16xf32>
    %54 = vector.broadcast %53 : vector<1x1x16xf32> to vector<8x8x16xf32>
    %55 = arith.mulf %51, %54 : vector<8x8x16xf32>
    %56 = arith.addf %50, %55 : vector<8x8x16xf32>
    %c2_43 = arith.constant 2 : index
    %c0_44 = arith.constant 0 : index
    %c0_45 = arith.constant 0 : index
    %57 = vector.load %arg9[%c2_43, %c0_44, %c0_45] : memref<10x10x16xf32, #tpu.memory_space<vmem>>, vector<8x8x16xf32>
    %c6 = arith.constant 6 : index
    %c0_46 = arith.constant 0 : index
    %58 = vector.load %arg4[%c6, %c0_46] : memref<9x16xf32, #tpu.memory_space<vmem>>, vector<1x16xf32>
    %59 = vector.shape_cast %58 : vector<1x16xf32> to vector<1x1x16xf32>
    %60 = vector.broadcast %59 : vector<1x1x16xf32> to vector<8x8x16xf32>
    %61 = arith.mulf %57, %60 : vector<8x8x16xf32>
    %62 = arith.addf %56, %61 : vector<8x8x16xf32>
    %c2_47 = arith.constant 2 : index
    %c1_48 = arith.constant 1 : index
    %c0_49 = arith.constant 0 : index
    %63 = vector.load %arg9[%c2_47, %c1_48, %c0_49] : memref<10x10x16xf32, #tpu.memory_space<vmem>>, vector<8x8x16xf32>
    %c7 = arith.constant 7 : index
    %c0_50 = arith.constant 0 : index
    %64 = vector.load %arg4[%c7, %c0_50] : memref<9x16xf32, #tpu.memory_space<vmem>>, vector<1x16xf32>
    %65 = vector.shape_cast %64 : vector<1x16xf32> to vector<1x1x16xf32>
    %66 = vector.broadcast %65 : vector<1x1x16xf32> to vector<8x8x16xf32>
    %67 = arith.mulf %63, %66 : vector<8x8x16xf32>
    %68 = arith.addf %62, %67 : vector<8x8x16xf32>
    %c2_51 = arith.constant 2 : index
    %c2_52 = arith.constant 2 : index
    %c0_53 = arith.constant 0 : index
    %69 = vector.load %arg9[%c2_51, %c2_52, %c0_53] : memref<10x10x16xf32, #tpu.memory_space<vmem>>, vector<8x8x16xf32>
    %c8 = arith.constant 8 : index
    %c0_54 = arith.constant 0 : index
    %70 = vector.load %arg4[%c8, %c0_54] : memref<9x16xf32, #tpu.memory_space<vmem>>, vector<1x16xf32>
    %71 = vector.shape_cast %70 : vector<1x16xf32> to vector<1x1x16xf32>
    %72 = vector.broadcast %71 : vector<1x1x16xf32> to vector<8x8x16xf32>
    %73 = arith.mulf %69, %72 : vector<8x8x16xf32>
    %74 = arith.addf %68, %73 : vector<8x8x16xf32>
    %c0_55 = arith.constant 0 : index
    %c0_56 = arith.constant 0 : index
    %75 = vector.load %arg5[%c0_55, %c0_56] : memref<1x16xf32, #tpu.memory_space<vmem>>, vector<1x16xf32>
    %76 = vector.shape_cast %75 : vector<1x16xf32> to vector<1x1x16xf32>
    %77 = vector.broadcast %76 : vector<1x1x16xf32> to vector<8x8x16xf32>
    %78 = arith.addf %74, %77 : vector<8x8x16xf32>
    %cst_57 = arith.constant 0.000000e+00 : f32
    %79 = vector.broadcast %cst_57 : f32 to vector<8x8x16xf32>
    %80 = arith.maximumf %78, %79 : vector<8x8x16xf32>
    %81 = vector.shape_cast %80 : vector<8x8x16xf32> to vector<64x16xf32>
    %82 = arith.truncf %81 : vector<64x16xf32> to vector<64x16xbf16>
    %c0_58 = arith.constant 0 : index
    %c0_59 = arith.constant 0 : index
    %83 = vector.load %arg6[%c0_58, %c0_59] : memref<16x576xbf16, #tpu.memory_space<vmem>>, vector<16x576xbf16>
    %cst_60 = arith.constant dense<0.000000e+00> : vector<64x576xf32>
    %84 = tpu.matmul %82, %83, %cst_60 {dimension_numbers = #tpu.dot_dimension_numbers<[1], [0], [0], [1], [0, 0, 1, 1], [], []>} : vector<64x16xbf16>, vector<16x576xbf16>, vector<64x576xf32> -> vector<64x576xf32>
    %c0_61 = arith.constant 0 : index
    %c0_62 = arith.constant 0 : index
    %85 = vector.load %arg7[%c0_61, %c0_62] : memref<1x576xf32, #tpu.memory_space<vmem>>, vector<1x576xf32>
    %86 = vector.broadcast %85 : vector<1x576xf32> to vector<64x576xf32>
    %87 = arith.addf %84, %86 : vector<64x576xf32>
    %cst_63 = arith.constant 3.000000e+00 : f32
    %88 = vector.broadcast %cst_63 : f32 to vector<64x576xf32>
    %89 = arith.addf %87, %88 : vector<64x576xf32>
    %cst_64 = arith.constant 0.000000e+00 : f32
    %cst_65 = arith.constant 6.000000e+00 : f32
    %90 = vector.broadcast %cst_64 : f32 to vector<64x576xf32>
    %91 = arith.maximumf %90, %89 : vector<64x576xf32>
    %92 = vector.broadcast %cst_65 : f32 to vector<64x576xf32>
    %93 = arith.minimumf %92, %91 : vector<64x576xf32>
    %94 = arith.mulf %87, %93 : vector<64x576xf32>
    %cst_66 = arith.constant 0.166666672 : f32
    %95 = vector.broadcast %cst_66 : f32 to vector<64x576xf32>
    %96 = arith.mulf %94, %95 : vector<64x576xf32>
    %cst_67 = arith.constant dense<0.000000e+00> : vector<576xf32>
    %97 = vector.multi_reduction <add>, %96, %cst_67 [0] : vector<64x576xf32> to vector<576xf32>
    %98 = vector.shape_cast %97 : vector<576xf32> to vector<1x576xf32>
    %cst_68 = arith.constant 6.400000e+01 : f32
    %99 = vector.broadcast %cst_68 : f32 to vector<1x576xf32>
    %100 = arith.divf %98, %99 : vector<1x576xf32>
    %101 = vector.shape_cast %100 : vector<1x576xf32> to vector<1x1x576xf32>
    %102 = arith.truncf %101 : vector<1x1x576xf32> to vector<1x1x576xbf16>
    %c0_69 = arith.constant 0 : index
    %c0_70 = arith.constant 0 : index
    %c0_71 = arith.constant 0 : index
    %103 = vector.load %arg8[%c0_69, %c0_70, %c0_71] : memref<1x1x576xbf16, #tpu.memory_space<vmem>>, vector<1x1x576xbf16>
    tpu.vector_store %arg8[%c0_69, %c0_70, %c0_71], %102 {strides = array<i32>} : memref<1x1x576xbf16, #tpu.memory_space<vmem>>, vector<1x1x576xbf16>,
    return
  }
  func.func @transform_0(%arg0: i32) -> (i32, i32, i32) {
    %c0_i32 = arith.constant 0 : i32
    %c0_i32_0 = arith.constant 0 : i32
    %c0_i32_1 = arith.constant 0 : i32
    return %arg0, %c0_i32, %c0_i32_0 : i32, i32, i32
  }
  func.func @transform_1(%arg0: i32) -> (i32, i32) {
    %c0_i32 = arith.constant 0 : i32
    %c0_i32_0 = arith.constant 0 : i32
    %c0_i32_1 = arith.constant 0 : i32
    return %c0_i32, %c0_i32_0 : i32, i32
  }
  func.func @transform_2(%arg0: i32) -> (i32, i32) {
    %c0_i32 = arith.constant 0 : i32
    %c0_i32_0 = arith.constant 0 : i32
    %c0_i32_1 = arith.constant 0 : i32
    return %c0_i32, %c0_i32_0 : i32, i32
  }
  func.func @transform_3(%arg0: i32) -> (i32, i32) {
    %c0_i32 = arith.constant 0 : i32
    %c0_i32_0 = arith.constant 0 : i32
    %c0_i32_1 = arith.constant 0 : i32
    return %c0_i32, %c0_i32_0 : i32, i32
  }
  func.func @transform_4(%arg0: i32) -> (i32, i32) {
    %c0_i32 = arith.constant 0 : i32
    %c0_i32_0 = arith.constant 0 : i32
    %c0_i32_1 = arith.constant 0 : i32
    return %c0_i32, %c0_i32_0 : i32, i32
  }
  func.func @transform_5(%arg0: i32) -> (i32, i32) {
    %c0_i32 = arith.constant 0 : i32
    %c0_i32_0 = arith.constant 0 : i32
    %c0_i32_1 = arith.constant 0 : i32
    return %c0_i32, %c0_i32_0 : i32, i32
  }
  func.func @transform_6(%arg0: i32) -> (i32, i32) {
    %c0_i32 = arith.constant 0 : i32
    %c0_i32_0 = arith.constant 0 : i32
    %c0_i32_1 = arith.constant 0 : i32
    return %c0_i32, %c0_i32_0 : i32, i32
  }
  func.func @transform_7(%arg0: i32) -> (i32, i32, i32) {
    %c0_i32 = arith.constant 0 : i32
    %c0_i32_0 = arith.constant 0 : i32
    %c0_i32_1 = arith.constant 0 : i32
    return %arg0, %c0_i32, %c0_i32_0 : i32, i32, i32
  }
}

module attributes {stable_mosaic.version = 11 : i64} {
  func.func @_fc1_kernel(%arg0: i32, %arg1: i32, %arg2: memref<2x1024xbf16, #tpu.memory_space<vmem>>, %arg3: memref<1024x512xbf16, #tpu.memory_space<vmem>>, %arg4: memref<1x512xf32, #tpu.memory_space<vmem>>, %arg5: memref<2x512xbf16, #tpu.memory_space<vmem>>, %arg6: memref<2x512xf32, #tpu.memory_space<vmem>>) attributes {dimension_semantics = [#tpu.dimension_semantics<parallel>, #tpu.dimension_semantics<arbitrary>], iteration_bounds = array<i64: 2, 3>, scalar_prefetch = 0 : i64, scratch_operands = 1 : i64, tpu.core_type = #tpu.core_type<tc>, window_params = [{transform_indices = @transform_0, window_bounds = array<i64: 2, 1024>}, {transform_indices = @transform_1, window_bounds = array<i64: 1024, 512>}, {transform_indices = @transform_2, window_bounds = array<i64: 1, 512>}, {transform_indices = @transform_3, window_bounds = array<i64: 2, 512>}]} {
    %c0_i32 = arith.constant 0 : i32
    %0 = arith.cmpi eq, %arg1, %c0_i32 : i32
    %1 = arith.extui %0 : i1 to i32
    %c0_i32_0 = arith.constant 0 : i32
    %2 = arith.cmpi ne, %1, %c0_i32_0 : i32
    scf.if %2 {
      %cst_9 = arith.constant 0.000000e+00 : f32
      %12 = vector.broadcast %cst_9 : f32 to vector<2x512xf32>
      %c0_10 = arith.constant 0 : index
      %c0_11 = arith.constant 0 : index
      %13 = vector.load %arg6[%c0_10, %c0_11] : memref<2x512xf32, #tpu.memory_space<vmem>>, vector<2x512xf32>
      tpu.vector_store %arg6[%c0_10, %c0_11], %12 {strides = array<i32>} : memref<2x512xf32, #tpu.memory_space<vmem>>, vector<2x512xf32>,
    } else {
    }
    %c0 = arith.constant 0 : index
    %c0_1 = arith.constant 0 : index
    %3 = vector.load %arg6[%c0, %c0_1] : memref<2x512xf32, #tpu.memory_space<vmem>>, vector<2x512xf32>
    %c0_2 = arith.constant 0 : index
    %c0_3 = arith.constant 0 : index
    %4 = vector.load %arg2[%c0_2, %c0_3] : memref<2x1024xbf16, #tpu.memory_space<vmem>>, vector<2x1024xbf16>
    %c0_4 = arith.constant 0 : index
    %c0_5 = arith.constant 0 : index
    %5 = vector.load %arg3[%c0_4, %c0_5] : memref<1024x512xbf16, #tpu.memory_space<vmem>>, vector<1024x512xbf16>
    %cst = arith.constant dense<0.000000e+00> : vector<2x512xf32>
    %6 = tpu.matmul %4, %5, %cst {dimension_numbers = #tpu.dot_dimension_numbers<[1], [0], [0], [1], [0, 0, 1, 1], [], []>} : vector<2x1024xbf16>, vector<1024x512xbf16>, vector<2x512xf32> -> vector<2x512xf32>
    %7 = arith.addf %3, %6 : vector<2x512xf32>
    %c0_6 = arith.constant 0 : index
    %c0_7 = arith.constant 0 : index
    %8 = vector.load %arg6[%c0_6, %c0_7] : memref<2x512xf32, #tpu.memory_space<vmem>>, vector<2x512xf32>
    tpu.vector_store %arg6[%c0_6, %c0_7], %7 {strides = array<i32>} : memref<2x512xf32, #tpu.memory_space<vmem>>, vector<2x512xf32>,
    %c2_i32 = arith.constant 2 : i32
    %9 = arith.cmpi eq, %arg1, %c2_i32 : i32
    %10 = arith.extui %9 : i1 to i32
    %c0_i32_8 = arith.constant 0 : i32
    %11 = arith.cmpi ne, %10, %c0_i32_8 : i32
    scf.if %11 {
      %c0_9 = arith.constant 0 : index
      %c0_10 = arith.constant 0 : index
      %12 = vector.load %arg6[%c0_9, %c0_10] : memref<2x512xf32, #tpu.memory_space<vmem>>, vector<2x512xf32>
      %c0_11 = arith.constant 0 : index
      %c0_12 = arith.constant 0 : index
      %13 = vector.load %arg4[%c0_11, %c0_12] : memref<1x512xf32, #tpu.memory_space<vmem>>, vector<1x512xf32>
      %14 = vector.broadcast %13 : vector<1x512xf32> to vector<2x512xf32>
      %15 = arith.addf %12, %14 : vector<2x512xf32>
      %cst_13 = arith.constant 0.000000e+00 : f32
      %16 = vector.broadcast %cst_13 : f32 to vector<2x512xf32>
      %17 = arith.maximumf %15, %16 : vector<2x512xf32>
      %18 = arith.truncf %17 : vector<2x512xf32> to vector<2x512xbf16>
      %c0_14 = arith.constant 0 : index
      %c0_15 = arith.constant 0 : index
      %19 = vector.load %arg5[%c0_14, %c0_15] : memref<2x512xbf16, #tpu.memory_space<vmem>>, vector<2x512xbf16>
      tpu.vector_store %arg5[%c0_14, %c0_15], %18 {strides = array<i32>} : memref<2x512xbf16, #tpu.memory_space<vmem>>, vector<2x512xbf16>,
    } else {
    }
    return
  }
  func.func @transform_0(%arg0: i32, %arg1: i32) -> (i32, i32) {
    %c0_i32 = arith.constant 0 : i32
    %c0_i32_0 = arith.constant 0 : i32
    return %c0_i32, %arg1 : i32, i32
  }
  func.func @transform_1(%arg0: i32, %arg1: i32) -> (i32, i32) {
    %c0_i32 = arith.constant 0 : i32
    return %arg1, %arg0 : i32, i32
  }
  func.func @transform_2(%arg0: i32, %arg1: i32) -> (i32, i32) {
    %c0_i32 = arith.constant 0 : i32
    %c0_i32_0 = arith.constant 0 : i32
    return %c0_i32, %arg0 : i32, i32
  }
  func.func @transform_3(%arg0: i32, %arg1: i32) -> (i32, i32) {
    %c0_i32 = arith.constant 0 : i32
    %c0_i32_0 = arith.constant 0 : i32
    return %c0_i32, %arg0 : i32, i32
  }
}

module attributes {stable_mosaic.version = 11 : i64} {
  func.func @_fc23_kernel(%arg0: i32, %arg1: memref<2x1024xbf16, #tpu.memory_space<vmem>>, %arg2: memref<1024x512xbf16, #tpu.memory_space<vmem>>, %arg3: memref<1x512xf32, #tpu.memory_space<vmem>>, %arg4: memref<512x128xbf16, #tpu.memory_space<vmem>>, %arg5: memref<1x128xf32, #tpu.memory_space<vmem>>, %arg6: memref<2x128xf32, #tpu.memory_space<vmem>>) attributes {dimension_semantics = [#tpu.dimension_semantics<arbitrary>], iteration_bounds = array<i64: 1>, scalar_prefetch = 0 : i64, scratch_operands = 0 : i64, tpu.core_type = #tpu.core_type<tc>, window_params = [{pipeline_mode = #tpu.pipeline_mode<synchronous>, transform_indices = @transform_0, window_bounds = array<i64: 2, 1024>}, {pipeline_mode = #tpu.pipeline_mode<synchronous>, transform_indices = @transform_1, window_bounds = array<i64: 1024, 512>}, {pipeline_mode = #tpu.pipeline_mode<synchronous>, transform_indices = @transform_2, window_bounds = array<i64: 1, 512>}, {pipeline_mode = #tpu.pipeline_mode<synchronous>, transform_indices = @transform_3, window_bounds = array<i64: 512, 128>}, {pipeline_mode = #tpu.pipeline_mode<synchronous>, transform_indices = @transform_4, window_bounds = array<i64: 1, 128>}, {pipeline_mode = #tpu.pipeline_mode<synchronous>, transform_indices = @transform_5, window_bounds = array<i64: 2, 128>}]} {
    %c0 = arith.constant 0 : index
    %c0_0 = arith.constant 0 : index
    %0 = vector.load %arg1[%c0, %c0_0] : memref<2x1024xbf16, #tpu.memory_space<vmem>>, vector<2x1024xbf16>
    %c0_1 = arith.constant 0 : index
    %c0_2 = arith.constant 0 : index
    %1 = vector.load %arg2[%c0_1, %c0_2] : memref<1024x512xbf16, #tpu.memory_space<vmem>>, vector<1024x512xbf16>
    %cst = arith.constant dense<0.000000e+00> : vector<2x512xf32>
    %2 = tpu.matmul %0, %1, %cst {dimension_numbers = #tpu.dot_dimension_numbers<[1], [0], [0], [1], [0, 0, 1, 1], [], []>} : vector<2x1024xbf16>, vector<1024x512xbf16>, vector<2x512xf32> -> vector<2x512xf32>
    %c0_3 = arith.constant 0 : index
    %c0_4 = arith.constant 0 : index
    %3 = vector.load %arg3[%c0_3, %c0_4] : memref<1x512xf32, #tpu.memory_space<vmem>>, vector<1x512xf32>
    %4 = vector.broadcast %3 : vector<1x512xf32> to vector<2x512xf32>
    %5 = arith.addf %2, %4 : vector<2x512xf32>
    %cst_5 = arith.constant 0.000000e+00 : f32
    %6 = vector.broadcast %cst_5 : f32 to vector<2x512xf32>
    %7 = arith.maximumf %5, %6 : vector<2x512xf32>
    %8 = arith.truncf %7 : vector<2x512xf32> to vector<2x512xbf16>
    %c0_6 = arith.constant 0 : index
    %c0_7 = arith.constant 0 : index
    %9 = vector.load %arg4[%c0_6, %c0_7] : memref<512x128xbf16, #tpu.memory_space<vmem>>, vector<512x128xbf16>
    %cst_8 = arith.constant dense<0.000000e+00> : vector<2x128xf32>
    %10 = tpu.matmul %8, %9, %cst_8 {dimension_numbers = #tpu.dot_dimension_numbers<[1], [0], [0], [1], [0, 0, 1, 1], [], []>} : vector<2x512xbf16>, vector<512x128xbf16>, vector<2x128xf32> -> vector<2x128xf32>
    %c0_9 = arith.constant 0 : index
    %c0_10 = arith.constant 0 : index
    %11 = vector.load %arg5[%c0_9, %c0_10] : memref<1x128xf32, #tpu.memory_space<vmem>>, vector<1x128xf32>
    %12 = vector.broadcast %11 : vector<1x128xf32> to vector<2x128xf32>
    %13 = arith.addf %10, %12 : vector<2x128xf32>
    %c0_11 = arith.constant 0 : index
    %c0_12 = arith.constant 0 : index
    %14 = vector.load %arg6[%c0_11, %c0_12] : memref<2x128xf32, #tpu.memory_space<vmem>>, vector<2x128xf32>
    tpu.vector_store %arg6[%c0_11, %c0_12], %13 {strides = array<i32>} : memref<2x128xf32, #tpu.memory_space<vmem>>, vector<2x128xf32>,
    return
  }
  func.func @transform_0(%arg0: i32) -> (i32, i32) {
    %c0_i32 = arith.constant 0 : i32
    %c0_i32_0 = arith.constant 0 : i32
    %c0_i32_1 = arith.constant 0 : i32
    return %c0_i32, %c0_i32_0 : i32, i32
  }
  func.func @transform_1(%arg0: i32) -> (i32, i32) {
    %c0_i32 = arith.constant 0 : i32
    %c0_i32_0 = arith.constant 0 : i32
    %c0_i32_1 = arith.constant 0 : i32
    return %c0_i32, %c0_i32_0 : i32, i32
  }
  func.func @transform_2(%arg0: i32) -> (i32, i32) {
    %c0_i32 = arith.constant 0 : i32
    %c0_i32_0 = arith.constant 0 : i32
    %c0_i32_1 = arith.constant 0 : i32
    return %c0_i32, %c0_i32_0 : i32, i32
  }
  func.func @transform_3(%arg0: i32) -> (i32, i32) {
    %c0_i32 = arith.constant 0 : i32
    %c0_i32_0 = arith.constant 0 : i32
    %c0_i32_1 = arith.constant 0 : i32
    return %c0_i32, %c0_i32_0 : i32, i32
  }
  func.func @transform_4(%arg0: i32) -> (i32, i32) {
    %c0_i32 = arith.constant 0 : i32
    %c0_i32_0 = arith.constant 0 : i32
    %c0_i32_1 = arith.constant 0 : i32
    return %c0_i32, %c0_i32_0 : i32, i32
  }
  func.func @transform_5(%arg0: i32) -> (i32, i32) {
    %c0_i32 = arith.constant 0 : i32
    %c0_i32_0 = arith.constant 0 : i32
    %c0_i32_1 = arith.constant 0 : i32
    return %c0_i32, %c0_i32_0 : i32, i32
  }
}

</mosaic_0001>

<llo_original>
// kernel: mobilenet_with_texture_hist.3
$region0: #{mobilenet_with_texture_hist.3}
  #allocation0 [shape = 'u32[]', space=smem, size = 0x4, offset = 0x4, fixed_abs, tag = 'smem constant byte address 0x4 - core index']
  #allocation1 [shape = 'u32[144,128]{1,0:T(1,128)}', space=vmem, size = 0x12000, scoped, tag = 'internal scratch']
  #allocation2 [shape = 'f32[10,10,16]{2,1,0:T(8,128)}', space=vmem, size = 0x14000, scoped, tag = 'scratch operand']
  %s0 = inlined_call_operand.vmem [shape: bf16[2,64,32], index: 0, kind: input, shape index: {}]
  %s1 = inlined_call_operand.hbm [shape: bf16[32,16], index: 1, kind: input, shape index: {}]
  %s2 = inlined_call_operand.vmem [shape: f32[1,16], index: 2, kind: input, shape index: {}, may-alias: {2,4}]
  %s3 = inlined_call_operand.hbm [shape: f32[9,16], index: 3, kind: input, shape index: {}]
  %s4 = inlined_call_operand.vmem [shape: f32[1,16], index: 4, kind: input, shape index: {}, may-alias: {2,4}]
  %s5 = inlined_call_operand.hbm [shape: bf16[16,576], index: 5, kind: input, shape index: {}]
  %s6 = inlined_call_operand.vmem [shape: f32[1,576], index: 6, kind: input, shape index: {}]
  %s7 = inlined_call_operand.vmem [shape: bf16[2,1,576], index: 7, kind: output, shape index: {}]
  %s8 = sld [smem:[#allocation0]]
  $region73: #{mobilenet_with_texture_hist.3} parent=0
    _
  %s10 = ssub.s32 1, %s8
  %s11 = scalar_select 0, %s10, %s8
  $region1: #{mobilenet_with_texture_hist.3} parent=0
    #allocation3 [shape = 'u8[8192]{0}', space=vmem, size = 0x2000, scoped, tag = 'input window, operand 1, single buffered']
    #allocation4 [shape = 's32[2]{0}', space=sflag, size = 0x8, scoped, tag = 'scoped memory for mobilenet_with_texture_hist.3']
    #allocation5 [shape = 'u8[8192]{0}', space=vmem, size = 0x2000, scoped, tag = 'input window, operand 3, single buffered']
    #allocation6 [shape = 's32[1]{0}', space=sflag, size = 0x4, scoped, tag = 'scoped memory for mobilenet_with_texture_hist.3']
    #allocation7 [shape = 'u8[20480]{0}', space=vmem, size = 0x5000, scoped, tag = 'input window, operand 5, single buffered']
    %12 = vsyncpa [#allocation4], 0
    %13 = vsyncpa [#allocation6], 0
    loop: start=0, step=1, limit=4
    $region2: #{mobilenet_with_texture_hist.3} parent=1 // loop_pre_header
      _
    $region3: #{mobilenet_with_texture_hist.3} parent=1 // loop_header
      %s15 = sphi 0, %s19
      %p16 = scmp.ge.s32.totalorder %s15, 4
      %s25 = sphi 0, %s27
      %s28 = sphi 0, %s25
      %s29 = sphi 0, %s28
      %s45 = sphi 0, %s29
      %s49 = sphi 0, %s49
      %s51 = sphi 0, %s49
      %s52 = sphi 0, %s51
      %s66 = sphi 0, %s52
      %s70 = sphi 0, %s70
      %s72 = sphi 0, %s70
      %s73 = sphi 0, %s72
      %s87 = sphi 0, %s73
      %s91 = sphi 0, %s91
      %s93 = sphi 0, %s91
      %s94 = sphi 0, %s93
      %s108 = sphi 0, %s94
      %s112 = sphi 0, %s112
      %s114 = sphi 0, %s112
      %s115 = sphi 0, %s114
      %s129 = sphi 0, %s115
      %s133 = sphi 0, %s133
      %s135 = sphi 0, %s133
      %s136 = sphi 0, %s135
      %s150 = sphi 0, %s136
      %s154 = sphi 0, %s154
      %s156 = sphi 0, %s154
      %s157 = sphi 0, %s156
      %s171 = sphi 0, %s157
      %s177 = sphi 0, %s179
      %s180 = sphi 0, %s177
      %s181 = sphi 0, %s180
      %s197 = sphi 0, %s181
    $region4: #{mobilenet_with_texture_hist.3} parent=1 // loop_header_branch
      %18 = sbr.rel (%p16) target = $region8
    $region5: #{mobilenet_with_texture_hist.3} parent=1 // loop_body
      %s20 = ssub.s32 %s15, 1
      %s21 = ssub.s32 %s15, 2
      %s22 = sadd.s32 %s15, 1
      %s23 = ssub.s32 %s15, %s22
      %p24 = scmp.eq.s32.totalorder %s23, 0
      %s26 = sadd.s32 %s25, 1
      %s27 = scalar_select %p24, %s25, %s26
      %p30 = pneg %p24
      %p31 = scmp.eq.s32.totalorder %s15, 1
      %p32 = por %p30, %p31
      %p33 = scmp.ne.s32.totalorder %s25, %s28
      %p34 = scmp.eq.s32.totalorder %s15, 0
      %p35 = por %p33, %p34
      %p36 = scmp.ne.s32.totalorder %s25, %s28
      %p37 = scmp.eq.s32.totalorder %s20, 1
      %p38 = por %p36, %p37
      %p39 = scmp.ne.s32.totalorder %s28, %s29
      %p40 = scmp.eq.s32.totalorder %s20, 0
      %p41 = por %p39, %p40
      %p42 = scmp.ne.s32.totalorder %s28, %s29
      %p43 = scmp.eq.s32.totalorder %s21, 1
      %p44 = por %p42, %p43
      %p46 = scmp.ne.s32.totalorder %s29, %s45
      %p47 = scmp.eq.s32.totalorder %s21, 0
      %p48 = por %p46, %p47
      %s50 = sadd.s32 %s49, 1
      %p53 = scmp.eq.s32.totalorder %s15, 1
      %p54 = scmp.ne.s32.totalorder %s49, %s51
      %p55 = scmp.eq.s32.totalorder %s15, 0
      %p56 = por %p54, %p55
      %p57 = scmp.ne.s32.totalorder %s49, %s51
      %p58 = scmp.eq.s32.totalorder %s20, 1
      %p59 = por %p57, %p58
      %p60 = scmp.ne.s32.totalorder %s51, %s52
      %p61 = scmp.eq.s32.totalorder %s20, 0
      %p62 = por %p60, %p61
      %p63 = scmp.ne.s32.totalorder %s51, %s52
      %p64 = scmp.eq.s32.totalorder %s21, 1
      %p65 = por %p63, %p64
      %p67 = scmp.ne.s32.totalorder %s52, %s66
      %p68 = scmp.eq.s32.totalorder %s21, 0
      %p69 = por %p67, %p68
      %s71 = sadd.s32 %s70, 1
      %p74 = scmp.eq.s32.totalorder %s15, 1
      %p75 = scmp.ne.s32.totalorder %s70, %s72
      %p76 = scmp.eq.s32.totalorder %s15, 0
      %p77 = por %p75, %p76
      %p78 = scmp.ne.s32.totalorder %s70, %s72
      %p79 = scmp.eq.s32.totalorder %s20, 1
      %p80 = por %p78, %p79
      %p81 = scmp.ne.s32.totalorder %s72, %s73
      %p82 = scmp.eq.s32.totalorder %s20, 0
      %p83 = por %p81, %p82
      %p84 = scmp.ne.s32.totalorder %s72, %s73
      %p85 = scmp.eq.s32.totalorder %s21, 1
      %p86 = por %p84, %p85
      %p88 = scmp.ne.s32.totalorder %s73, %s87
      %p89 = scmp.eq.s32.totalorder %s21, 0
      %p90 = por %p88, %p89
      %s92 = sadd.s32 %s91, 1
      %p95 = scmp.eq.s32.totalorder %s15, 1
      %p96 = scmp.ne.s32.totalorder %s91, %s93
      %p97 = scmp.eq.s32.totalorder %s15, 0
      %p98 = por %p96, %p97
      %p99 = scmp.ne.s32.totalorder %s91, %s93
      %p100 = scmp.eq.s32.totalorder %s20, 1
      %p101 = por %p99, %p100
      %p102 = scmp.ne.s32.totalorder %s93, %s94
      %p103 = scmp.eq.s32.totalorder %s20, 0
      %p104 = por %p102, %p103
      %p105 = scmp.ne.s32.totalorder %s93, %s94
      %p106 = scmp.eq.s32.totalorder %s21, 1
      %p107 = por %p105, %p106
      %p109 = scmp.ne.s32.totalorder %s94, %s108
      %p110 = scmp.eq.s32.totalorder %s21, 0
      %p111 = por %p109, %p110
      %s113 = sadd.s32 %s112, 1
      %p116 = scmp.eq.s32.totalorder %s15, 1
      %p117 = scmp.ne.s32.totalorder %s112, %s114
      %p118 = scmp.eq.s32.totalorder %s15, 0
      %p119 = por %p117, %p118
      %p120 = scmp.ne.s32.totalorder %s112, %s114
      %p121 = scmp.eq.s32.totalorder %s20, 1
      %p122 = por %p120, %p121
      %p123 = scmp.ne.s32.totalorder %s114, %s115
      %p124 = scmp.eq.s32.totalorder %s20, 0
      %p125 = por %p123, %p124
      %p126 = scmp.ne.s32.totalorder %s114, %s115
      %p127 = scmp.eq.s32.totalorder %s21, 1
      %p128 = por %p126, %p127
      %p130 = scmp.ne.s32.totalorder %s115, %s129
      %p131 = scmp.eq.s32.totalorder %s21, 0
      %p132 = por %p130, %p131
      %s134 = sadd.s32 %s133, 1
      %p137 = scmp.eq.s32.totalorder %s15, 1
      %p138 = scmp.ne.s32.totalorder %s133, %s135
      %p139 = scmp.eq.s32.totalorder %s15, 0
      %p140 = por %p138, %p139
      %p141 = scmp.ne.s32.totalorder %s133, %s135
      %p142 = scmp.eq.s32.totalorder %s20, 1
      %p143 = por %p141, %p142
      %p144 = scmp.ne.s32.totalorder %s135, %s136
      %p145 = scmp.eq.s32.totalorder %s20, 0
      %p146 = por %p144, %p145
      %p147 = scmp.ne.s32.totalorder %s135, %s136
      %p148 = scmp.eq.s32.totalorder %s21, 1
      %p149 = por %p147, %p148
      %p151 = scmp.ne.s32.totalorder %s136, %s150
      %p152 = scmp.eq.s32.totalorder %s21, 0
      %p153 = por %p151, %p152
      %s155 = sadd.s32 %s154, 1
      %p158 = scmp.eq.s32.totalorder %s15, 1
      %p159 = scmp.ne.s32.totalorder %s154, %s156
      %p160 = scmp.eq.s32.totalorder %s15, 0
      %p161 = por %p159, %p160
      %p162 = scmp.ne.s32.totalorder %s154, %s156
      %p163 = scmp.eq.s32.totalorder %s20, 1
      %p164 = por %p162, %p163
      %p165 = scmp.ne.s32.totalorder %s156, %s157
      %p166 = scmp.eq.s32.totalorder %s20, 0
      %p167 = por %p165, %p166
      %p168 = scmp.ne.s32.totalorder %s156, %s157
      %p169 = scmp.eq.s32.totalorder %s21, 1
      %p170 = por %p168, %p169
      %p172 = scmp.ne.s32.totalorder %s157, %s171
      %p173 = scmp.eq.s32.totalorder %s21, 0
      %p174 = por %p172, %p173
      %s175 = ssub.s32 %s15, %s22
      %p176 = scmp.eq.s32.totalorder %s175, 0
      %s178 = sadd.s32 %s177, 1
      %s179 = scalar_select %p176, %s177, %s178
      %p182 = pneg %p176
      %p183 = scmp.eq.s32.totalorder %s15, 1
      %p184 = por %p182, %p183
      %p185 = scmp.ne.s32.totalorder %s177, %s180
      %p186 = scmp.eq.s32.totalorder %s15, 0
      %p187 = por %p185, %p186
      %p188 = scmp.ne.s32.totalorder %s177, %s180
      %p189 = scmp.eq.s32.totalorder %s20, 1
      %p190 = por %p188, %p189
      %p191 = scmp.ne.s32.totalorder %s180, %s181
      %p192 = scmp.eq.s32.totalorder %s20, 0
      %p193 = por %p191, %p192
      %p194 = scmp.ne.s32.totalorder %s180, %s181
      %p195 = scmp.eq.s32.totalorder %s21, 1
      %p196 = por %p194, %p195
      %p198 = scmp.ne.s32.totalorder %s181, %s197
      %p199 = scmp.eq.s32.totalorder %s21, 0
      %p200 = por %p198, %p199
      %p201 = scmp.le.s32.totalorder 1, %s15
      %p202 = scmp.lt.s32.totalorder %s15, 3
      %p203 = pnand %p201, %p202
      %p204 = pneg %p203
      // Predicated region
      $region9: #{mobilenet_with_texture_hist.3} parent=5 // pred_check
        _
      $region10: #{mobilenet_with_texture_hist.3} parent=5 // pred_check_branch
        %206 = sbr.rel (%p203) target = $region12
      $region11: #{mobilenet_with_texture_hist.3} parent=5 // pred_region
        %s207 = ssub.s32 %s15, 1
        // Predicated region
        $region13: #{mobilenet_with_texture_hist.3} parent=11 // pred_check
          %p208 = pneg %p62
        $region14: #{mobilenet_with_texture_hist.3} parent=11 // pred_check_branch
          %210 = sbr.rel (%p208) target = $region16
        $region15: #{mobilenet_with_texture_hist.3} parent=11 // pred_region
          %s212 = ssub.s32 256, 256
          %213 = vsyncadd [#allocation4], %s212
          %s214 = sshll.u32 [#allocation3], 4
          %s215 = int_to_ptr.vmem [resolvable:$true] %s214
          %220 = dma.hbm_to_vmem [thread:$0]  %s1, 256, %s215, [#allocation4], 64, 64, 4
        $region16: #{mobilenet_with_texture_hist.3} parent=11 // pred_fallthru
          _
        // Predicated region
        $region17: #{mobilenet_with_texture_hist.3} parent=11 // pred_check
          %p221 = pneg %p83
        $region18: #{mobilenet_with_texture_hist.3} parent=11 // pred_check_branch
          %223 = sbr.rel (%p221) target = $region20
        $region19: #{mobilenet_with_texture_hist.3} parent=11 // pred_region
          _
        $region20: #{mobilenet_with_texture_hist.3} parent=11 // pred_fallthru
          _
        // Predicated region
        $region21: #{mobilenet_with_texture_hist.3} parent=11 // pred_check
          %p224 = pneg %p104
        $region22: #{mobilenet_with_texture_hist.3} parent=11 // pred_check_branch
          %226 = sbr.rel (%p224) target = $region24
        $region23: #{mobilenet_with_texture_hist.3} parent=11 // pred_region
          %s228 = ssub.s32 256, 256
          %229 = vsyncadd [#allocation6], %s228
          %s230 = sshll.u32 [#allocation5], 4
          %s231 = int_to_ptr.vmem [resolvable:$true] %s230
          %236 = dma.hbm_to_vmem [thread:$0]  %s3, 256, %s231, [#allocation6], 128, 128, 8
        $region24: #{mobilenet_with_texture_hist.3} parent=11 // pred_fallthru
          _
        // Predicated region
        $region25: #{mobilenet_with_texture_hist.3} parent=11 // pred_check
          %p237 = pneg %p125
        $region26: #{mobilenet_with_texture_hist.3} parent=11 // pred_check_branch
          %239 = sbr.rel (%p237) target = $region28
        $region27: #{mobilenet_with_texture_hist.3} parent=11 // pred_region
          _
        $region28: #{mobilenet_with_texture_hist.3} parent=11 // pred_fallthru
          _
        // Predicated region
        $region29: #{mobilenet_with_texture_hist.3} parent=11 // pred_check
          %p240 = pneg %p146
        $region30: #{mobilenet_with_texture_hist.3} parent=11 // pred_check_branch
          %242 = sbr.rel (%p240) target = $region32
        $region31: #{mobilenet_with_texture_hist.3} parent=11 // pred_region
          %s244 = ssub.s32 640, 640
          %245 = vsyncadd [#allocation6], %s244
          %s246 = sshll.u32 [#allocation7], 4
          %s247 = int_to_ptr.vmem [resolvable:$true] %s246
          %252 = dma.hbm_to_vmem [thread:$0]  %s5, 640, %s247, [#allocation6], 320, 320, 20
        $region32: #{mobilenet_with_texture_hist.3} parent=11 // pred_fallthru
          _
        // Predicated region
        $region33: #{mobilenet_with_texture_hist.3} parent=11 // pred_check
          %p253 = pneg %p167
        $region34: #{mobilenet_with_texture_hist.3} parent=11 // pred_check_branch
          %255 = sbr.rel (%p253) target = $region36
        $region35: #{mobilenet_with_texture_hist.3} parent=11 // pred_region
          _
        $region36: #{mobilenet_with_texture_hist.3} parent=11 // pred_fallthru
          _
      $region12: #{mobilenet_with_texture_hist.3} parent=5 // pred_fallthru
        _
      %p256 = scmp.lt.s32.totalorder %s15, 2
      // Predicated region
      $region37: #{mobilenet_with_texture_hist.3} parent=5 // pred_check
        %p257 = pneg %p256
      $region38: #{mobilenet_with_texture_hist.3} parent=5 // pred_check_branch
        %259 = sbr.rel (%p257) target = $region40
      $region39: #{mobilenet_with_texture_hist.3} parent=5 // pred_region
        // Predicated region
        $region41: #{mobilenet_with_texture_hist.3} parent=39 // pred_check
          %p260 = pneg %p35
        $region42: #{mobilenet_with_texture_hist.3} parent=39 // pred_check_branch
          %262 = sbr.rel (%p260) target = $region44
        $region43: #{mobilenet_with_texture_hist.3} parent=39 // pred_region
          %p263 = scmp.lt.s32.totalorder %s15, 1
          %s264 = scalar_select %p263, %s15, 1
          %s265 = smul.addr %s264, 8
          %s266 = smul.addr %s265, 4
          %s267 = scalar_lea.vmem %s0, %s266
        $region44: #{mobilenet_with_texture_hist.3} parent=39 // pred_fallthru
          _
      $region40: #{mobilenet_with_texture_hist.3} parent=5 // pred_fallthru
        _
      %p268 = scmp.le.s32.totalorder 1, %s15
      %p269 = scmp.lt.s32.totalorder %s15, 3
      %p270 = pnand %p268, %p269
      %p271 = pneg %p270
      // Predicated region
      $region45: #{mobilenet_with_texture_hist.3} parent=5 // pred_check
        _
      $region46: #{mobilenet_with_texture_hist.3} parent=5 // pred_check_branch
        %273 = sbr.rel (%p270) target = $region48
      $region47: #{mobilenet_with_texture_hist.3} parent=5 // pred_region
        %s274 = ssub.s32 %s15, 1
        // Predicated region
        $region49: #{mobilenet_with_texture_hist.3} parent=47 // pred_check
          %p275 = pneg %p62
        $region50: #{mobilenet_with_texture_hist.3} parent=47 // pred_check_branch
          %277 = sbr.rel (%p275) target = $region52
        $region51: #{mobilenet_with_texture_hist.3} parent=47 // pred_region
          %278 = dma.done [#allocation4], 256
        $region52: #{mobilenet_with_texture_hist.3} parent=47 // pred_fallthru
          _
        // Predicated region
        $region53: #{mobilenet_with_texture_hist.3} parent=47 // pred_check
          %p279 = pneg %p104
        $region54: #{mobilenet_with_texture_hist.3} parent=47 // pred_check_branch
          %281 = sbr.rel (%p279) target = $region56
        $region55: #{mobilenet_with_texture_hist.3} parent=47 // pred_region
          %282 = dma.done [#allocation6], 256
        $region56: #{mobilenet_with_texture_hist.3} parent=47 // pred_fallthru
          _
        // Predicated region
        $region57: #{mobilenet_with_texture_hist.3} parent=47 // pred_check
          %p283 = pneg %p146
        $region58: #{mobilenet_with_texture_hist.3} parent=47 // pred_check_branch
          %285 = sbr.rel (%p283) target = $region60
        $region59: #{mobilenet_with_texture_hist.3} parent=47 // pred_region
          %286 = dma.done [#allocation6], 640
        $region60: #{mobilenet_with_texture_hist.3} parent=47 // pred_fallthru
          _
        %p287 = scmp.lt.s32.totalorder %s20, 1
        %s288 = scalar_select %p287, %s20, 1
        %s289 = smul.addr %s288, 8
        %s290 = smul.addr %s289, 4
        %s291 = scalar_lea.vmem %s0, %s290
        %p292 = pneg %p41
        %p293 = pneg %p38
        %p294 = pneg %p62
        %p295 = pneg %p59
        %p296 = pneg %p83
        %p297 = pneg %p80
        %p298 = pneg %p104
        %p299 = pneg %p101
        %p300 = pneg %p125
        %p301 = pneg %p122
        %p302 = pneg %p146
        %p303 = pneg %p143
        %p304 = pneg %p167
        %p305 = pneg %p164
        %p306 = pneg %p193
        %p307 = pneg %p190
        %p308 = scmp.lt.s32.totalorder %s20, 1
        %s309 = scalar_select %p308, %s20, 1
        %s310 = smul.addr %s309, 5
        %s311 = scalar_lea.vmem %s7, %s310
        %p312 = scmp.lt.s32.totalorder %s20, 1
        %s313 = scalar_select %p312, %s20, 1
        %s314 = smul.addr %s313, 8
        %s315 = smul.addr %s314, 4
        %s316 = scalar_lea.vmem %s0, %s315
        %p317 = scmp.lt.s32.totalorder %s20, 1
        %s318 = scalar_select %p317, %s20, 1
        %s319 = smul.addr %s318, 5
        %s320 = scalar_lea.vmem %s7, %s319
        %v322 = vld [vmem:[%s316] sm:$0xf]
        %v323 = vld [vmem:[%s316 + $0x4] sm:$0xf]
        %v324 = vld [vmem:[%s316 + $0x8] sm:$0xf]
        %v325 = vld [vmem:[%s316 + $0xc] sm:$0xf]
        %v326 = vld [vmem:[%s316 + $0x10] sm:$0xf]
        %v327 = vld [vmem:[%s316 + $0x14] sm:$0xf]
        %v328 = vld [vmem:[%s316 + $0x18] sm:$0xf]
        %v329 = vld [vmem:[%s316 + $0x1c] sm:$0xf]
        %v330 = vld [vmem:[#allocation3] sm:$0xf]
        %v331 = vld [vmem:[#allocation3 + $0x4] sm:$0xf]
        %v332 = vld [vmem:[#allocation3 + $0x8] sm:$0xf]
        %v333 = vld [vmem:[#allocation3 + $0xc] sm:$0xf]
        %v334 = vld [vmem:[%s2] sm:$0x1]
        %v336 = vlaneseq
        %v337 = vshrl.u32 %v336, 7
        %v338 = vsub.s32 0, %v337
        %v339 = vrot.slane %v334, %v338
        %v349 = vunpack.c.l.b16 %v322
        %v350 = vunpack.c.l.b16 %v323
        %v351 = vunpack.c.l.b16 %v324
        %v352 = vunpack.c.l.b16 %v325
        %v353 = vunpack.c.l.b16 %v326
        %v354 = vunpack.c.l.b16 %v327
        %v355 = vunpack.c.l.b16 %v328
        %v356 = vunpack.c.l.b16 %v329
        %v357 = vpack.c.b16 %v350, %v349
        %v358 = vpack.c.b16 %v352, %v351
        %v359 = vpack.c.b16 %v354, %v353
        %v360 = vpack.c.b16 %v356, %v355
        %v365 = vunpack.c.l.b16 %v330
        %v366 = vunpack.c.l.b16 %v331
        %v367 = vunpack.c.l.b16 %v332
        %v368 = vunpack.c.l.b16 %v333
        %v369 = vpack.c.b16 %v366, %v365
        %v370 = vpack.c.b16 %v368, %v367
        %vm373 = vcmask 261120
        %v375 = vsel %vm373, %v357, 0
        %v378 = vsel %vm373, %v358, 0
        %v381 = vsel %vm373, %v359, 0
        %v384 = vsel %vm373, %v360, 0
        %386 = vmatprep.subr.bf16.mxu0 0
        %387 = vmatpush1.bf16.msra.mxu0 0
        %388 = vmatprep.subr.bf16.mxu0 0
        %389 = vmatpush1.bf16.msra.mxu0 0
        %390 = vmatprep.subr.bf16.mxu0 0
        %391 = vmatpush1.bf16.msra.mxu0 0
        %392 = vmatprep.subr.bf16.mxu0 0
        %393 = vmatpush1.bf16.msra.mxu0 0
        %394 = vmatprep.subr.bf16.mxu0 0
        %395 = vmatpush1.bf16.msra.mxu0 0
        %396 = vmatprep.subr.bf16.mxu0 0
        %397 = vmatpush1.bf16.msra.mxu0 0
        %398 = vmatprep.subr.bf16.mxu0 0
        %399 = vmatpush1.bf16.msra.mxu0 %v370
        %400 = vmatprep.subr.bf16.mxu0 0
        %401 = vmatpush1.bf16.msra.mxu0 %v369
        %402 = vmatprep.subr.bf16.mxu0 0
        %403 = vmatpush2.bf16.msra.mxu0 0
        %404 = vmatprep.subr.bf16.mxu0 0
        %405 = vmatpush2.bf16.msra.mxu0 0
        %406 = vmatprep.subr.bf16.mxu0 0
        %407 = vmatpush2.bf16.msra.mxu0 0
        %408 = vmatprep.subr.bf16.mxu0 0
        %409 = vmatpush2.bf16.msra.mxu0 0
        %410 = vmatprep.subr.bf16.mxu0 0
        %411 = vmatpush2.bf16.msra.mxu0 0
        %412 = vmatprep.subr.bf16.mxu0 0
        %413 = vmatpush2.bf16.msra.mxu0 0
        %414 = vmatprep.subr.bf16.mxu0 0
        %415 = vmatpush2.bf16.msra.mxu0 0
        %416 = vmatprep.subr.bf16.mxu0 0
        %417 = vmatpush2.bf16.msra.mxu0 0
        %418 = vmatprep.mubr.bf16.mxu0 0
        %419 = vmatmul.mubr.bf16.gmra.mxu0 %v375
        %v420 = vpop.f32.mrf.mxu0
        %v421 = vadd.f32 %v339, %v420
        %v422 = vpop.f32.mrf.mxu0
        %v423 = vpop.f32.mrf.mxu0
        %v424 = vadd.f32 %v339, %v423
        %v425 = vpop.f32.mrf.mxu0
        %426 = vmatprep.mubr.bf16.mxu0 0
        %427 = vmatmul.mubr.bf16.gmra.mxu0 %v378
        %v428 = vpop.f32.mrf.mxu0
        %v429 = vadd.f32 %v339, %v428
        %v430 = vpop.f32.mrf.mxu0
        %v431 = vpop.f32.mrf.mxu0
        %v432 = vadd.f32 %v339, %v431
        %v433 = vpop.f32.mrf.mxu0
        %434 = vmatprep.mubr.bf16.mxu0 0
        %435 = vmatmul.mubr.bf16.gmra.mxu0 %v381
        %v436 = vpop.f32.mrf.mxu0
        %v437 = vadd.f32 %v339, %v436
        %v438 = vpop.f32.mrf.mxu0
        %v439 = vpop.f32.mrf.mxu0
        %v440 = vadd.f32 %v339, %v439
        %v441 = vpop.f32.mrf.mxu0
        %442 = vmatprep.mubr.bf16.mxu0 0
        %443 = vmatmul.mubr.bf16.gmra.mxu0 %v384
        %v444 = vpop.f32.mrf.mxu0
        %v445 = vadd.f32 %v339, %v444
        %v446 = vpop.f32.mrf.mxu0
        %v447 = vpop.f32.mrf.mxu0
        %v448 = vadd.f32 %v339, %v447
        %v449 = vpop.f32.mrf.mxu0
        %450 = vdwg.mxu0
        %v451 = vadd.f32 %v421, 3.0
        %v452 = vadd.f32 %v424, 3.0
        %v453 = vadd.f32 %v429, 3.0
        %v454 = vadd.f32 %v432, 3.0
        %v455 = vadd.f32 %v437, 3.0
        %v456 = vadd.f32 %v440, 3.0
        %v457 = vadd.f32 %v445, 3.0
        %v458 = vadd.f32 %v448, 3.0
        %v459 = vmax.f32 %v451, 0.0
        %v460 = vmax.f32 %v452, 0.0
        %v461 = vmax.f32 %v453, 0.0
        %v462 = vmax.f32 %v454, 0.0
        %v463 = vmax.f32 %v455, 0.0
        %v464 = vmax.f32 %v456, 0.0
        %v465 = vmax.f32 %v457, 0.0
        %v466 = vmax.f32 %v458, 0.0
        %v467 = vmin.f32 %v459, 6.0
        %v468 = vmin.f32 %v460, 6.0
        %v469 = vmin.f32 %v461, 6.0
        %v470 = vmin.f32 %v462, 6.0
        %v471 = vmin.f32 %v463, 6.0
        %v472 = vmin.f32 %v464, 6.0
        %v473 = vmin.f32 %v465, 6.0
        %v474 = vmin.f32 %v466, 6.0
        %v475 = vmul.f32 %v421, %v467
        %v476 = vmul.f32 %v424, %v468
        %v477 = vmul.f32 %v429, %v469
        %v478 = vmul.f32 %v432, %v470
        %v479 = vmul.f32 %v437, %v471
        %v480 = vmul.f32 %v440, %v472
        %v481 = vmul.f32 %v445, %v473
        %v482 = vmul.f32 %v448, %v474
        %v483 = vmul.f32 %v475, 0.16666667
        %v484 = vmul.f32 %v476, 0.16666667
        %v485 = vmul.f32 %v477, 0.16666667
        %v486 = vmul.f32 %v478, 0.16666667
        %v487 = vmul.f32 %v479, 0.16666667
        %v488 = vmul.f32 %v480, 0.16666667
        %v489 = vmul.f32 %v481, 0.16666667
        %v490 = vmul.f32 %v482, 0.16666667
        %vm491 = vcmask 130048
        %492 = vst.msk [vmem:[#allocation2] sm:$0xff] %vm491, 0.0
        %vm493 = vcmask 123904
        %494 = vst.msk [vmem:[#allocation2 + $0x8] sm:$0x3] %vm493, 0.0
        %495 = vst.msk [vmem:[#allocation2 + $0x10] sm:$0xff] %vm491, 0.0
        %496 = vst.msk [vmem:[#allocation2 + $0x18] sm:$0x3] %vm493, 0.0
        %497 = vst.msk [vmem:[#allocation2 + $0x20] sm:$0xff] %vm491, 0.0
        %498 = vst.msk [vmem:[#allocation2 + $0x28] sm:$0x3] %vm493, 0.0
        %499 = vst.msk [vmem:[#allocation2 + $0x30] sm:$0xff] %vm491, 0.0
        %500 = vst.msk [vmem:[#allocation2 + $0x38] sm:$0x3] %vm493, 0.0
        %501 = vst.msk [vmem:[#allocation2 + $0x40] sm:$0xff] %vm491, 0.0
        %502 = vst.msk [vmem:[#allocation2 + $0x48] sm:$0x3] %vm493, 0.0
        %503 = vst.msk [vmem:[#allocation2 + $0x50] sm:$0xff] %vm491, 0.0
        %504 = vst.msk [vmem:[#allocation2 + $0x58] sm:$0x3] %vm493, 0.0
        %505 = vst.msk [vmem:[#allocation2 + $0x60] sm:$0xff] %vm491, 0.0
        %506 = vst.msk [vmem:[#allocation2 + $0x68] sm:$0x3] %vm493, 0.0
        %507 = vst.msk [vmem:[#allocation2 + $0x70] sm:$0xff] %vm491, 0.0
        %508 = vst.msk [vmem:[#allocation2 + $0x78] sm:$0x3] %vm493, 0.0
        %509 = vst.msk [vmem:[#allocation2 + $0x80] sm:$0xff] %vm491, 0.0
        %510 = vst.msk [vmem:[#allocation2 + $0x88] sm:$0x3] %vm493, 0.0
        %511 = vst.msk [vmem:[#allocation2 + $0x90] sm:$0xff] %vm491, 0.0
        %512 = vst.msk [vmem:[#allocation2 + $0x98] sm:$0x3] %vm493, 0.0
        %s513 = scalar_lea.vmem [#allocation2], 16
        %514 = vst.msk [vmem:[%s513 + $0x1] sm:$0xff] %vm491, %v483
        %515 = vst.msk [vmem:[%s513 + $0x11] sm:$0xff] %vm491, %v484
        %516 = vst.msk [vmem:[%s513 + $0x21] sm:$0xff] %vm491, %v485
        %517 = vst.msk [vmem:[%s513 + $0x31] sm:$0xff] %vm491, %v486
        %518 = vst.msk [vmem:[%s513 + $0x41] sm:$0xff] %vm491, %v487
        %519 = vst.msk [vmem:[%s513 + $0x51] sm:$0xff] %vm491, %v488
        %520 = vst.msk [vmem:[%s513 + $0x61] sm:$0xff] %vm491, %v489
        %521 = vst.msk [vmem:[%s513 + $0x71] sm:$0xff] %vm491, %v490
        %v522 = vld [vmem:[#allocation2] sm:$0xff]
        %v523 = vld [vmem:[#allocation2 + $0x10] sm:$0xff]
        %v524 = vld [vmem:[#allocation2 + $0x20] sm:$0xff]
        %v525 = vld [vmem:[#allocation2 + $0x30] sm:$0xff]
        %v526 = vld [vmem:[#allocation2 + $0x40] sm:$0xff]
        %v527 = vld [vmem:[#allocation2 + $0x50] sm:$0xff]
        %v528 = vld [vmem:[#allocation2 + $0x60] sm:$0xff]
        %v529 = vld [vmem:[#allocation2 + $0x70] sm:$0xff]
        %v530 = vld [vmem:[#allocation5] sm:$0x1]
        %v531 = vlaneseq
        %v532 = vshrl.u32 %v531, 7
        %v533 = vsub.s32 0, %v532
        %v534 = vrot.slane %v530, %v533
        %v535 = vmul.f32 %v522, %v534
        %v536 = vmul.f32 %v523, %v534
        %v537 = vmul.f32 %v524, %v534
        %v538 = vmul.f32 %v525, %v534
        %v539 = vmul.f32 %v526, %v534
        %v540 = vmul.f32 %v527, %v534
        %v541 = vmul.f32 %v528, %v534
        %v542 = vmul.f32 %v529, %v534
        %v543 = vadd.f32 %v535, 0.0
        %v544 = vadd.f32 %v536, 0.0
        %v545 = vadd.f32 %v537, 0.0
        %v546 = vadd.f32 %v538, 0.0
        %v547 = vadd.f32 %v539, 0.0
        %v548 = vadd.f32 %v540, 0.0
        %v549 = vadd.f32 %v541, 0.0
        %v550 = vadd.f32 %v542, 0.0
        %v551 = vld [vmem:[#allocation2 + $0x1] sm:$0xff]
        %v552 = vld [vmem:[#allocation2 + $0x11] sm:$0xff]
        %v553 = vld [vmem:[#allocation2 + $0x21] sm:$0xff]
        %v554 = vld [vmem:[#allocation2 + $0x31] sm:$0xff]
        %v555 = vld [vmem:[#allocation2 + $0x41] sm:$0xff]
        %v556 = vld [vmem:[#allocation2 + $0x51] sm:$0xff]
        %v557 = vld [vmem:[#allocation2 + $0x61] sm:$0xff]
        %v558 = vld [vmem:[#allocation2 + $0x71] sm:$0xff]
        %v559 = vld [vmem:[#allocation5 + $0x1] sm:$0x1]
        %v560 = vlaneseq
        %v561 = vshrl.u32 %v560, 7
        %v562 = vsub.s32 0, %v561
        %v563 = vrot.slane %v559, %v562
        %v564 = vmul.f32 %v551, %v563
        %v565 = vmul.f32 %v552, %v563
        %v566 = vmul.f32 %v553, %v563
        %v567 = vmul.f32 %v554, %v563
        %v568 = vmul.f32 %v555, %v563
        %v569 = vmul.f32 %v556, %v563
        %v570 = vmul.f32 %v557, %v563
        %v571 = vmul.f32 %v558, %v563
        %v572 = vadd.f32 %v543, %v564
        %v573 = vadd.f32 %v544, %v565
        %v574 = vadd.f32 %v545, %v566
        %v575 = vadd.f32 %v546, %v567
        %v576 = vadd.f32 %v547, %v568
        %v577 = vadd.f32 %v548, %v569
        %v578 = vadd.f32 %v549, %v570
        %v579 = vadd.f32 %v550, %v571
        %v580 = vld [vmem:[#allocation2 + $0x2] sm:$0xff]
        %v581 = vld [vmem:[#allocation2 + $0x12] sm:$0xff]
        %v582 = vld [vmem:[#allocation2 + $0x22] sm:$0xff]
        %v583 = vld [vmem:[#allocation2 + $0x32] sm:$0xff]
        %v584 = vld [vmem:[#allocation2 + $0x42] sm:$0xff]
        %v585 = vld [vmem:[#allocation2 + $0x52] sm:$0xff]
        %v586 = vld [vmem:[#allocation2 + $0x62] sm:$0xff]
        %v587 = vld [vmem:[#allocation2 + $0x72] sm:$0xff]
        %v588 = vld [vmem:[#allocation5 + $0x2] sm:$0x1]
        %v589 = vlaneseq
        %v590 = vshrl.u32 %v589, 7
        %v591 = vsub.s32 0, %v590
        %v592 = vrot.slane %v588, %v591
        %v593 = vmul.f32 %v580, %v592
        %v594 = vmul.f32 %v581, %v592
        %v595 = vmul.f32 %v582, %v592
        %v596 = vmul.f32 %v583, %v592
        %v597 = vmul.f32 %v584, %v592
        %v598 = vmul.f32 %v585, %v592
        %v599 = vmul.f32 %v586, %v592
        %v600 = vmul.f32 %v587, %v592
        %v601 = vadd.f32 %v572, %v593
        %v602 = vadd.f32 %v573, %v594
        %v603 = vadd.f32 %v574, %v595
        %v604 = vadd.f32 %v575, %v596
        %v605 = vadd.f32 %v576, %v597
        %v606 = vadd.f32 %v577, %v598
        %v607 = vadd.f32 %v578, %v599
        %v608 = vadd.f32 %v579, %v600
        %v609 = vld [vmem:[%s513] sm:$0xff]
        %v610 = vld [vmem:[%s513 + $0x10] sm:$0xff]
        %v611 = vld [vmem:[%s513 + $0x20] sm:$0xff]
        %v612 = vld [vmem:[%s513 + $0x30] sm:$0xff]
        %v613 = vld [vmem:[%s513 + $0x40] sm:$0xff]
        %v614 = vld [vmem:[%s513 + $0x50] sm:$0xff]
        %v615 = vld [vmem:[%s513 + $0x60] sm:$0xff]
        %v616 = vld [vmem:[%s513 + $0x70] sm:$0xff]
        %v617 = vld [vmem:[#allocation5 + $0x3] sm:$0x1]
        %v618 = vlaneseq
        %v619 = vshrl.u32 %v618, 7
        %v620 = vsub.s32 0, %v619
        %v621 = vrot.slane %v617, %v620
        %v622 = vmul.f32 %v609, %v621
        %v623 = vmul.f32 %v610, %v621
        %v624 = vmul.f32 %v611, %v621
        %v625 = vmul.f32 %v612, %v621
        %v626 = vmul.f32 %v613, %v621
        %v627 = vmul.f32 %v614, %v621
        %v628 = vmul.f32 %v615, %v621
        %v629 = vmul.f32 %v616, %v621
        %v630 = vadd.f32 %v601, %v622
        %v631 = vadd.f32 %v602, %v623
        %v632 = vadd.f32 %v603, %v624
        %v633 = vadd.f32 %v604, %v625
        %v634 = vadd.f32 %v605, %v626
        %v635 = vadd.f32 %v606, %v627
        %v636 = vadd.f32 %v607, %v628
        %v637 = vadd.f32 %v608, %v629
        %v638 = vld [vmem:[%s513 + $0x1] sm:$0xff]
        %v639 = vld [vmem:[%s513 + $0x11] sm:$0xff]
        %v640 = vld [vmem:[%s513 + $0x21] sm:$0xff]
        %v641 = vld [vmem:[%s513 + $0x31] sm:$0xff]
        %v642 = vld [vmem:[%s513 + $0x41] sm:$0xff]
        %v643 = vld [vmem:[%s513 + $0x51] sm:$0xff]
        %v644 = vld [vmem:[%s513 + $0x61] sm:$0xff]
        %v645 = vld [vmem:[%s513 + $0x71] sm:$0xff]
        %v646 = vld [vmem:[#allocation5 + $0x4] sm:$0x1]
        %v647 = vlaneseq
        %v648 = vshrl.u32 %v647, 7
        %v649 = vsub.s32 0, %v648
        %v650 = vrot.slane %v646, %v649
        %v651 = vmul.f32 %v638, %v650
        %v652 = vmul.f32 %v639, %v650
        %v653 = vmul.f32 %v640, %v650
        %v654 = vmul.f32 %v641, %v650
        %v655 = vmul.f32 %v642, %v650
        %v656 = vmul.f32 %v643, %v650
        %v657 = vmul.f32 %v644, %v650
        %v658 = vmul.f32 %v645, %v650
        %v659 = vadd.f32 %v630, %v651
        %v660 = vadd.f32 %v631, %v652
        %v661 = vadd.f32 %v632, %v653
        %v662 = vadd.f32 %v633, %v654
        %v663 = vadd.f32 %v634, %v655
        %v664 = vadd.f32 %v635, %v656
        %v665 = vadd.f32 %v636, %v657
        %v666 = vadd.f32 %v637, %v658
        %v667 = vld [vmem:[%s513 + $0x2] sm:$0xff]
        %v668 = vld [vmem:[%s513 + $0x12] sm:$0xff]
        %v669 = vld [vmem:[%s513 + $0x22] sm:$0xff]
        %v670 = vld [vmem:[%s513 + $0x32] sm:$0xff]
        %v671 = vld [vmem:[%s513 + $0x42] sm:$0xff]
        %v672 = vld [vmem:[%s513 + $0x52] sm:$0xff]
        %v673 = vld [vmem:[%s513 + $0x62] sm:$0xff]
        %v674 = vld [vmem:[%s513 + $0x72] sm:$0xff]
        %v675 = vld [vmem:[#allocation5 + $0x5] sm:$0x1]
        %v676 = vlaneseq
        %v677 = vshrl.u32 %v676, 7
        %v678 = vsub.s32 0, %v677
        %v679 = vrot.slane %v675, %v678
        %v680 = vmul.f32 %v667, %v679
        %v681 = vmul.f32 %v668, %v679
        %v682 = vmul.f32 %v669, %v679
        %v683 = vmul.f32 %v670, %v679
        %v684 = vmul.f32 %v671, %v679
        %v685 = vmul.f32 %v672, %v679
        %v686 = vmul.f32 %v673, %v679
        %v687 = vmul.f32 %v674, %v679
        %v688 = vadd.f32 %v659, %v680
        %v689 = vadd.f32 %v660, %v681
        %v690 = vadd.f32 %v661, %v682
        %v691 = vadd.f32 %v662, %v683
        %v692 = vadd.f32 %v663, %v684
        %v693 = vadd.f32 %v664, %v685
        %v694 = vadd.f32 %v665, %v686
        %v695 = vadd.f32 %v666, %v687
        %s696 = scalar_lea.vmem [#allocation2], 32
        %v697 = vld [vmem:[%s696] sm:$0xff]
        %v698 = vld [vmem:[%s696 + $0x10] sm:$0xff]
        %v699 = vld [vmem:[%s696 + $0x20] sm:$0xff]
        %v700 = vld [vmem:[%s696 + $0x30] sm:$0xff]
        %v701 = vld [vmem:[%s696 + $0x40] sm:$0xff]
        %v702 = vld [vmem:[%s696 + $0x50] sm:$0xff]
        %v703 = vld [vmem:[%s696 + $0x60] sm:$0xff]
        %v704 = vld [vmem:[%s696 + $0x70] sm:$0xff]
        %v705 = vld [vmem:[#allocation5 + $0x6] sm:$0x1]
        %v706 = vlaneseq
        %v707 = vshrl.u32 %v706, 7
        %v708 = vsub.s32 0, %v707
        %v709 = vrot.slane %v705, %v708
        %v710 = vmul.f32 %v697, %v709
        %v711 = vmul.f32 %v698, %v709
        %v712 = vmul.f32 %v699, %v709
        %v713 = vmul.f32 %v700, %v709
        %v714 = vmul.f32 %v701, %v709
        %v715 = vmul.f32 %v702, %v709
        %v716 = vmul.f32 %v703, %v709
        %v717 = vmul.f32 %v704, %v709
        %v718 = vadd.f32 %v688, %v710
        %v719 = vadd.f32 %v689, %v711
        %v720 = vadd.f32 %v690, %v712
        %v721 = vadd.f32 %v691, %v713
        %v722 = vadd.f32 %v692, %v714
        %v723 = vadd.f32 %v693, %v715
        %v724 = vadd.f32 %v694, %v716
        %v725 = vadd.f32 %v695, %v717
        %v726 = vld [vmem:[%s696 + $0x1] sm:$0xff]
        %v727 = vld [vmem:[%s696 + $0x11] sm:$0xff]
        %v728 = vld [vmem:[%s696 + $0x21] sm:$0xff]
        %v729 = vld [vmem:[%s696 + $0x31] sm:$0xff]
        %v730 = vld [vmem:[%s696 + $0x41] sm:$0xff]
        %v731 = vld [vmem:[%s696 + $0x51] sm:$0xff]
        %v732 = vld [vmem:[%s696 + $0x61] sm:$0xff]
        %v733 = vld [vmem:[%s696 + $0x71] sm:$0xff]
        %v734 = vld [vmem:[#allocation5 + $0x7] sm:$0x1]
        %v735 = vlaneseq
        %v736 = vshrl.u32 %v735, 7
        %v737 = vsub.s32 0, %v736
        %v738 = vrot.slane %v734, %v737
        %v739 = vmul.f32 %v726, %v738
        %v740 = vmul.f32 %v727, %v738
        %v741 = vmul.f32 %v728, %v738
        %v742 = vmul.f32 %v729, %v738
        %v743 = vmul.f32 %v730, %v738
        %v744 = vmul.f32 %v731, %v738
        %v745 = vmul.f32 %v732, %v738
        %v746 = vmul.f32 %v733, %v738
        %v747 = vadd.f32 %v718, %v739
        %v748 = vadd.f32 %v719, %v740
        %v749 = vadd.f32 %v720, %v741
        %v750 = vadd.f32 %v721, %v742
        %v751 = vadd.f32 %v722, %v743
        %v752 = vadd.f32 %v723, %v744
        %v753 = vadd.f32 %v724, %v745
        %v754 = vadd.f32 %v725, %v746
        %v755 = vld [vmem:[%s696 + $0x2] sm:$0xff]
        %v756 = vld [vmem:[%s696 + $0x12] sm:$0xff]
        %v757 = vld [vmem:[%s696 + $0x22] sm:$0xff]
        %v758 = vld [vmem:[%s696 + $0x32] sm:$0xff]
        %v759 = vld [vmem:[%s696 + $0x42] sm:$0xff]
        %v760 = vld [vmem:[%s696 + $0x52] sm:$0xff]
        %v761 = vld [vmem:[%s696 + $0x62] sm:$0xff]
        %v762 = vld [vmem:[%s696 + $0x72] sm:$0xff]
        %v763 = vld [vmem:[#allocation5 + $0x8] sm:$0x1]
        %v764 = vlaneseq
        %v765 = vshrl.u32 %v764, 7
        %v766 = vsub.s32 0, %v765
        %v767 = vrot.slane %v763, %v766
        %v768 = vmul.f32 %v755, %v767
        %v769 = vmul.f32 %v756, %v767
        %v770 = vmul.f32 %v757, %v767
        %v771 = vmul.f32 %v758, %v767
        %v772 = vmul.f32 %v759, %v767
        %v773 = vmul.f32 %v760, %v767
        %v774 = vmul.f32 %v761, %v767
        %v775 = vmul.f32 %v762, %v767
        %v776 = vadd.f32 %v747, %v768
        %v777 = vadd.f32 %v748, %v769
        %v778 = vadd.f32 %v749, %v770
        %v779 = vadd.f32 %v750, %v771
        %v780 = vadd.f32 %v751, %v772
        %v781 = vadd.f32 %v752, %v773
        %v782 = vadd.f32 %v753, %v774
        %v783 = vadd.f32 %v754, %v775
        %v784 = vld [vmem:[%s4] sm:$0x1]
        %v786 = vlaneseq
        %v787 = vshrl.u32 %v786, 7
        %v788 = vsub.s32 0, %v787
        %v789 = vrot.slane %v784, %v788
        %v791 = vadd.f32 %v776, %v789
        %v792 = vadd.f32 %v777, %v789
        %v793 = vadd.f32 %v778, %v789
        %v794 = vadd.f32 %v779, %v789
        %v795 = vadd.f32 %v780, %v789
        %v796 = vadd.f32 %v781, %v789
        %v797 = vadd.f32 %v782, %v789
        %v798 = vadd.f32 %v783, %v789
        %v799 = vmax.f32 %v791, 0.0
        %v800 = vmax.f32 %v792, 0.0
        %v801 = vmax.f32 %v793, 0.0
        %v802 = vmax.f32 %v794, 0.0
        %v803 = vmax.f32 %v795, 0.0
        %v804 = vmax.f32 %v796, 0.0
        %v805 = vmax.f32 %v797, 0.0
        %v806 = vmax.f32 %v798, 0.0
        %v807 = vpack.c.bf16 %v800, %v799
        %v808 = vpack.c.bf16 %v802, %v801
        %v809 = vpack.c.bf16 %v804, %v803
        %v810 = vpack.c.bf16 %v806, %v805
        %v811 = vld [vmem:[#allocation7] sm:$0xff]
        %v812 = vld [vmem:[#allocation7 + $0x8] sm:$0xff]
        %v813 = vld [vmem:[#allocation7 + $0x10] sm:$0xf]
        %v814 = vld [vmem:[#allocation7 + $0x14] sm:$0xff]
        %v815 = vld [vmem:[#allocation7 + $0x1c] sm:$0xff]
        %v816 = vld [vmem:[#allocation7 + $0x24] sm:$0xf]
        %v817 = vld [vmem:[%s6] sm:$0x1f]
        %v819 = vlaneseq
        %v820 = vshrl.u32 %v819, 7
        %v821 = vsub.s32 0, %v820
        %v822 = vrot.slane %v817, %v821
        %v823 = vlaneseq
        %v824 = vshrl.u32 %v823, 7
        %v825 = vsub.s32 1, %v824
        %v826 = vrot.slane %v817, %v825
        %v827 = vlaneseq
        %v828 = vshrl.u32 %v827, 7
        %v829 = vsub.s32 2, %v828
        %v830 = vrot.slane %v817, %v829
        %v831 = vlaneseq
        %v832 = vshrl.u32 %v831, 7
        %v833 = vsub.s32 3, %v832
        %v834 = vrot.slane %v817, %v833
        %v835 = vlaneseq
        %v836 = vshrl.u32 %v835, 7
        %v837 = vsub.s32 4, %v836
        %v838 = vrot.slane %v817, %v837
        %v850 = vunpack.c.l.b16 %v811
        %v851 = vunpack.c.h.b16 %v811
        %v852 = vunpack.c.l.b16 %v812
        %v853 = vunpack.c.h.b16 %v812
        %v854 = vunpack.c.l.b16 %v813
        %v855 = vunpack.c.l.b16 %v814
        %v856 = vunpack.c.h.b16 %v814
        %v857 = vunpack.c.l.b16 %v815
        %v858 = vunpack.c.h.b16 %v815
        %v859 = vunpack.c.l.b16 %v816
        %v860 = vpack.c.b16 %v855, %v850
        %v861 = vpack.c.b16 %v856, %v851
        %v862 = vpack.c.b16 %v857, %v852
        %v863 = vpack.c.b16 %v858, %v853
        %v864 = vpack.c.b16 %v859, %v854
        %v871 = vsel %vm491, %v807, 0
        %v874 = vsel %vm491, %v808, 0
        %v877 = vsel %vm491, %v809, 0
        %v880 = vsel %vm491, %v810, 0
        %882 = vmatprep.subr.bf16.mxu0 0
        %883 = vmatpush1.bf16.msra.mxu0 0
        %884 = vmatprep.subr.bf16.mxu0 0
        %885 = vmatpush1.bf16.msra.mxu0 0
        %886 = vmatprep.subr.bf16.mxu0 0
        %887 = vmatpush1.bf16.msra.mxu0 0
        %888 = vmatprep.subr.bf16.mxu0 0
        %889 = vmatpush1.bf16.msra.mxu0 0
        %890 = vmatprep.subr.bf16.mxu0 0
        %891 = vmatpush1.bf16.msra.mxu0 0
        %892 = vmatprep.subr.bf16.mxu0 0
        %893 = vmatpush1.bf16.msra.mxu0 0
        %894 = vmatprep.subr.bf16.mxu0 0
        %895 = vmatpush1.bf16.msra.mxu0 0
        %896 = vmatprep.subr.bf16.mxu0 %v861
        %897 = vmatpush1.bf16.msra.mxu0 %v860
        %898 = vmatprep.subr.bf16.mxu0 0
        %899 = vmatpush2.bf16.msra.mxu0 0
        %900 = vmatprep.subr.bf16.mxu0 0
        %901 = vmatpush2.bf16.msra.mxu0 0
        %902 = vmatprep.subr.bf16.mxu0 0
        %903 = vmatpush2.bf16.msra.mxu0 0
        %904 = vmatprep.subr.bf16.mxu0 0
        %905 = vmatpush2.bf16.msra.mxu0 0
        %906 = vmatprep.subr.bf16.mxu0 0
        %907 = vmatpush2.bf16.msra.mxu0 0
        %908 = vmatprep.subr.bf16.mxu0 0
        %909 = vmatpush2.bf16.msra.mxu0 0
        %910 = vmatprep.subr.bf16.mxu0 0
        %911 = vmatpush2.bf16.msra.mxu0 0
        %912 = vmatprep.subr.bf16.mxu0 0
        %913 = vmatpush2.bf16.msra.mxu0 0
        %914 = vmatprep.mubr.bf16.mxu0 0
        %915 = vmatmul.mubr.bf16.gmra.mxu0 %v871
        %v916 = vpop.f32.mrf.mxu0
        %v917 = vadd.f32 %v822, %v916
        %v918 = vpop.f32.mrf.mxu0
        %v919 = vadd.f32 %v826, %v918
        %v920 = vpop.f32.mrf.mxu0
        %v921 = vadd.f32 %v822, %v920
        %v922 = vpop.f32.mrf.mxu0
        %v923 = vadd.f32 %v826, %v922
        %924 = vmatprep.mubr.bf16.mxu0 0
        %925 = vmatmul.mubr.bf16.gmra.mxu0 %v874
        %v926 = vpop.f32.mrf.mxu0
        %v927 = vadd.f32 %v822, %v926
        %v928 = vpop.f32.mrf.mxu0
        %v929 = vadd.f32 %v826, %v928
        %v930 = vpop.f32.mrf.mxu0
        %v931 = vadd.f32 %v822, %v930
        %v932 = vpop.f32.mrf.mxu0
        %v933 = vadd.f32 %v826, %v932
        %934 = vmatprep.mubr.bf16.mxu0 0
        %935 = vmatmul.mubr.bf16.gmra.mxu0 %v877
        %v936 = vpop.f32.mrf.mxu0
        %v937 = vadd.f32 %v822, %v936
        %v938 = vpop.f32.mrf.mxu0
        %v939 = vadd.f32 %v826, %v938
        %v940 = vpop.f32.mrf.mxu0
        %v941 = vadd.f32 %v822, %v940
        %v942 = vpop.f32.mrf.mxu0
        %v943 = vadd.f32 %v826, %v942
        %944 = vmatprep.mubr.bf16.mxu0 0
        %945 = vmatmul.mubr.bf16.gmra.mxu0 %v880
        %v946 = vpop.f32.mrf.mxu0
        %v947 = vadd.f32 %v822, %v946
        %v948 = vpop.f32.mrf.mxu0
        %v949 = vadd.f32 %v826, %v948
        %v950 = vpop.f32.mrf.mxu0
        %v951 = vadd.f32 %v822, %v950
        %v952 = vpop.f32.mrf.mxu0
        %v953 = vadd.f32 %v826, %v952
        %954 = vdwg.mxu0
        %955 = vmatprep.subr.bf16.mxu0 0
        %956 = vmatpush1.bf16.msra.mxu0 0
        %957 = vmatprep.subr.bf16.mxu0 0
        %958 = vmatpush1.bf16.msra.mxu0 0
        %959 = vmatprep.subr.bf16.mxu0 0
        %960 = vmatpush1.bf16.msra.mxu0 0
        %961 = vmatprep.subr.bf16.mxu0 0
        %962 = vmatpush1.bf16.msra.mxu0 0
        %963 = vmatprep.subr.bf16.mxu0 0
        %964 = vmatpush1.bf16.msra.mxu0 0
        %965 = vmatprep.subr.bf16.mxu0 0
        %966 = vmatpush1.bf16.msra.mxu0 0
        %967 = vmatprep.subr.bf16.mxu0 0
        %968 = vmatpush1.bf16.msra.mxu0 0
        %969 = vmatprep.subr.bf16.mxu0 %v863
        %970 = vmatpush1.bf16.msra.mxu0 %v862
        %971 = vmatprep.subr.bf16.mxu0 0
        %972 = vmatpush2.bf16.msra.mxu0 0
        %973 = vmatprep.subr.bf16.mxu0 0
        %974 = vmatpush2.bf16.msra.mxu0 0
        %975 = vmatprep.subr.bf16.mxu0 0
        %976 = vmatpush2.bf16.msra.mxu0 0
        %977 = vmatprep.subr.bf16.mxu0 0
        %978 = vmatpush2.bf16.msra.mxu0 0
        %979 = vmatprep.subr.bf16.mxu0 0
        %980 = vmatpush2.bf16.msra.mxu0 0
        %981 = vmatprep.subr.bf16.mxu0 0
        %982 = vmatpush2.bf16.msra.mxu0 0
        %983 = vmatprep.subr.bf16.mxu0 0
        %984 = vmatpush2.bf16.msra.mxu0 0
        %985 = vmatprep.subr.bf16.mxu0 0
        %986 = vmatpush2.bf16.msra.mxu0 0
        %987 = vmatprep.mubr.bf16.mxu0 0
        %988 = vmatmul.mubr.bf16.gmra.mxu0 %v871
        %v989 = vpop.f32.mrf.mxu0
        %v990 = vadd.f32 %v830, %v989
        %v991 = vpop.f32.mrf.mxu0
        %v992 = vadd.f32 %v834, %v991
        %v993 = vpop.f32.mrf.mxu0
        %v994 = vadd.f32 %v830, %v993
        %v995 = vpop.f32.mrf.mxu0
        %v996 = vadd.f32 %v834, %v995
        %997 = vmatprep.mubr.bf16.mxu0 0
        %998 = vmatmul.mubr.bf16.gmra.mxu0 %v874
        %v999 = vpop.f32.mrf.mxu0
        %v1000 = vadd.f32 %v830, %v999
        %v1001 = vpop.f32.mrf.mxu0
        %v1002 = vadd.f32 %v834, %v1001
        %v1003 = vpop.f32.mrf.mxu0
        %v1004 = vadd.f32 %v830, %v1003
        %v1005 = vpop.f32.mrf.mxu0
        %v1006 = vadd.f32 %v834, %v1005
        %1007 = vmatprep.mubr.bf16.mxu0 0
        %1008 = vmatmul.mubr.bf16.gmra.mxu0 %v877
        %v1009 = vpop.f32.mrf.mxu0
        %v1010 = vadd.f32 %v830, %v1009
        %v1011 = vpop.f32.mrf.mxu0
        %v1012 = vadd.f32 %v834, %v1011
        %v1013 = vpop.f32.mrf.mxu0
        %v1014 = vadd.f32 %v830, %v1013
        %v1015 = vpop.f32.mrf.mxu0
        %v1016 = vadd.f32 %v834, %v1015
        %1017 = vmatprep.mubr.bf16.mxu0 0
        %1018 = vmatmul.mubr.bf16.gmra.mxu0 %v880
        %v1019 = vpop.f32.mrf.mxu0
        %v1020 = vadd.f32 %v830, %v1019
        %v1021 = vpop.f32.mrf.mxu0
        %v1022 = vadd.f32 %v834, %v1021
        %v1023 = vpop.f32.mrf.mxu0
        %v1024 = vadd.f32 %v830, %v1023
        %v1025 = vpop.f32.mrf.mxu0
        %v1026 = vadd.f32 %v834, %v1025
        %1027 = vdwg.mxu0
        %1028 = vmatprep.subr.bf16.mxu0 0
        %1029 = vmatpush1.bf16.msra.mxu0 0
        %1030 = vmatprep.subr.bf16.mxu0 0
        %1031 = vmatpush1.bf16.msra.mxu0 0
        %1032 = vmatprep.subr.bf16.mxu0 0
        %1033 = vmatpush1.bf16.msra.mxu0 0
        %1034 = vmatprep.subr.bf16.mxu0 0
        %1035 = vmatpush1.bf16.msra.mxu0 0
        %1036 = vmatprep.subr.bf16.mxu0 0
        %1037 = vmatpush1.bf16.msra.mxu0 0
        %1038 = vmatprep.subr.bf16.mxu0 0
        %1039 = vmatpush1.bf16.msra.mxu0 0
        %1040 = vmatprep.subr.bf16.mxu0 0
        %1041 = vmatpush1.bf16.msra.mxu0 0
        %1042 = vmatprep.subr.bf16.mxu0 0
        %1043 = vmatpush1.bf16.msra.mxu0 %v864
        %1044 = vmatprep.subr.bf16.mxu0 0
        %1045 = vmatpush2.bf16.msra.mxu0 0
        %1046 = vmatprep.subr.bf16.mxu0 0
        %1047 = vmatpush2.bf16.msra.mxu0 0
        %1048 = vmatprep.subr.bf16.mxu0 0
        %1049 = vmatpush2.bf16.msra.mxu0 0
        %1050 = vmatprep.subr.bf16.mxu0 0
        %1051 = vmatpush2.bf16.msra.mxu0 0
        %1052 = vmatprep.subr.bf16.mxu0 0
        %1053 = vmatpush2.bf16.msra.mxu0 0
        %1054 = vmatprep.subr.bf16.mxu0 0
        %1055 = vmatpush2.bf16.msra.mxu0 0
        %1056 = vmatprep.subr.bf16.mxu0 0
        %1057 = vmatpush2.bf16.msra.mxu0 0
        %1058 = vmatprep.subr.bf16.mxu0 0
        %1059 = vmatpush2.bf16.msra.mxu0 0
        %1060 = vmatprep.mubr.bf16.mxu0 0
        %1061 = vmatmul.mubr.bf16.gmra.mxu0 %v871
        %v1062 = vpop.f32.mrf.mxu0
        %v1063 = vadd.f32 %v838, %v1062
        %v1064 = vpop.f32.mrf.mxu0
        %v1065 = vpop.f32.mrf.mxu0
        %v1066 = vadd.f32 %v838, %v1065
        %v1067 = vpop.f32.mrf.mxu0
        %1068 = vmatprep.mubr.bf16.mxu0 0
        %1069 = vmatmul.mubr.bf16.gmra.mxu0 %v874
        %v1070 = vpop.f32.mrf.mxu0
        %v1071 = vadd.f32 %v838, %v1070
        %v1072 = vpop.f32.mrf.mxu0
        %v1073 = vpop.f32.mrf.mxu0
        %v1074 = vadd.f32 %v838, %v1073
        %v1075 = vpop.f32.mrf.mxu0
        %1076 = vmatprep.mubr.bf16.mxu0 0
        %1077 = vmatmul.mubr.bf16.gmra.mxu0 %v877
        %v1078 = vpop.f32.mrf.mxu0
        %v1079 = vadd.f32 %v838, %v1078
        %v1080 = vpop.f32.mrf.mxu0
        %v1081 = vpop.f32.mrf.mxu0
        %v1082 = vadd.f32 %v838, %v1081
        %v1083 = vpop.f32.mrf.mxu0
        %1084 = vmatprep.mubr.bf16.mxu0 0
        %1085 = vmatmul.mubr.bf16.gmra.mxu0 %v880
        %v1086 = vpop.f32.mrf.mxu0
        %v1087 = vadd.f32 %v838, %v1086
        %v1088 = vpop.f32.mrf.mxu0
        %v1089 = vpop.f32.mrf.mxu0
        %v1090 = vadd.f32 %v838, %v1089
        %v1091 = vpop.f32.mrf.mxu0
        %1092 = vdwg.mxu0
        %v1093 = vadd.f32 %v917, 3.0
        %v1094 = vadd.f32 %v919, 3.0
        %v1095 = vadd.f32 %v990, 3.0
        %v1096 = vadd.f32 %v992, 3.0
        %v1097 = vadd.f32 %v1063, 3.0
        %v1098 = vadd.f32 %v921, 3.0
        %v1099 = vadd.f32 %v923, 3.0
        %v1100 = vadd.f32 %v994, 3.0
        %v1101 = vadd.f32 %v996, 3.0
        %v1102 = vadd.f32 %v1066, 3.0
        %v1103 = vadd.f32 %v927, 3.0
        %v1104 = vadd.f32 %v929, 3.0
        %v1105 = vadd.f32 %v1000, 3.0
        %v1106 = vadd.f32 %v1002, 3.0
        %v1107 = vadd.f32 %v1071, 3.0
        %v1108 = vadd.f32 %v931, 3.0
        %v1109 = vadd.f32 %v933, 3.0
        %v1110 = vadd.f32 %v1004, 3.0
        %v1111 = vadd.f32 %v1006, 3.0
        %v1112 = vadd.f32 %v1074, 3.0
        %v1113 = vadd.f32 %v937, 3.0
        %v1114 = vadd.f32 %v939, 3.0
        %v1115 = vadd.f32 %v1010, 3.0
        %v1116 = vadd.f32 %v1012, 3.0
        %v1117 = vadd.f32 %v1079, 3.0
        %v1118 = vadd.f32 %v941, 3.0
        %v1119 = vadd.f32 %v943, 3.0
        %v1120 = vadd.f32 %v1014, 3.0
        %v1121 = vadd.f32 %v1016, 3.0
        %v1122 = vadd.f32 %v1082, 3.0
        %v1123 = vadd.f32 %v947, 3.0
        %v1124 = vadd.f32 %v949, 3.0
        %v1125 = vadd.f32 %v1020, 3.0
        %v1126 = vadd.f32 %v1022, 3.0
        %v1127 = vadd.f32 %v1087, 3.0
        %v1128 = vadd.f32 %v951, 3.0
        %v1129 = vadd.f32 %v953, 3.0
        %v1130 = vadd.f32 %v1024, 3.0
        %v1131 = vadd.f32 %v1026, 3.0
        %v1132 = vadd.f32 %v1090, 3.0
        %v1133 = vmax.f32 %v1093, 0.0
        %v1134 = vmax.f32 %v1094, 0.0
        %v1135 = vmax.f32 %v1095, 0.0
        %v1136 = vmax.f32 %v1096, 0.0
        %v1137 = vmax.f32 %v1097, 0.0
        %v1138 = vmax.f32 %v1098, 0.0
        %v1139 = vmax.f32 %v1099, 0.0
        %v1140 = vmax.f32 %v1100, 0.0
        %v1141 = vmax.f32 %v1101, 0.0
        %v1142 = vmax.f32 %v1102, 0.0
        %v1143 = vmax.f32 %v1103, 0.0
        %v1144 = vmax.f32 %v1104, 0.0
        %v1145 = vmax.f32 %v1105, 0.0
        %v1146 = vmax.f32 %v1106, 0.0
        %v1147 = vmax.f32 %v1107, 0.0
        %v1148 = vmax.f32 %v1108, 0.0
        %v1149 = vmax.f32 %v1109, 0.0
        %v1150 = vmax.f32 %v1110, 0.0
        %v1151 = vmax.f32 %v1111, 0.0
        %v1152 = vmax.f32 %v1112, 0.0
        %v1153 = vmax.f32 %v1113, 0.0
        %v1154 = vmax.f32 %v1114, 0.0
        %v1155 = vmax.f32 %v1115, 0.0
        %v1156 = vmax.f32 %v1116, 0.0
        %v1157 = vmax.f32 %v1117, 0.0
        %v1158 = vmax.f32 %v1118, 0.0
        %v1159 = vmax.f32 %v1119, 0.0
        %v1160 = vmax.f32 %v1120, 0.0
        %v1161 = vmax.f32 %v1121, 0.0
        %v1162 = vmax.f32 %v1122, 0.0
        %v1163 = vmax.f32 %v1123, 0.0
        %v1164 = vmax.f32 %v1124, 0.0
        %v1165 = vmax.f32 %v1125, 0.0
        %v1166 = vmax.f32 %v1126, 0.0
        %v1167 = vmax.f32 %v1127, 0.0
        %v1168 = vmax.f32 %v1128, 0.0
        %v1169 = vmax.f32 %v1129, 0.0
        %v1170 = vmax.f32 %v1130, 0.0
        %v1171 = vmax.f32 %v1131, 0.0
        %v1172 = vmax.f32 %v1132, 0.0
        %v1173 = vmin.f32 %v1133, 6.0
        %v1174 = vmin.f32 %v1134, 6.0
        %v1175 = vmin.f32 %v1135, 6.0
        %v1176 = vmin.f32 %v1136, 6.0
        %v1177 = vmin.f32 %v1137, 6.0
        %v1178 = vmin.f32 %v1138, 6.0
        %v1179 = vmin.f32 %v1139, 6.0
        %v1180 = vmin.f32 %v1140, 6.0
        %v1181 = vmin.f32 %v1141, 6.0
        %v1182 = vmin.f32 %v1142, 6.0
        %v1183 = vmin.f32 %v1143, 6.0
        %v1184 = vmin.f32 %v1144, 6.0
        %v1185 = vmin.f32 %v1145, 6.0
        %v1186 = vmin.f32 %v1146, 6.0
        %v1187 = vmin.f32 %v1147, 6.0
        %v1188 = vmin.f32 %v1148, 6.0
        %v1189 = vmin.f32 %v1149, 6.0
        %v1190 = vmin.f32 %v1150, 6.0
        %v1191 = vmin.f32 %v1151, 6.0
        %v1192 = vmin.f32 %v1152, 6.0
        %v1193 = vmin.f32 %v1153, 6.0
        %v1194 = vmin.f32 %v1154, 6.0
        %v1195 = vmin.f32 %v1155, 6.0
        %v1196 = vmin.f32 %v1156, 6.0
        %v1197 = vmin.f32 %v1157, 6.0
        %v1198 = vmin.f32 %v1158, 6.0
        %v1199 = vmin.f32 %v1159, 6.0
        %v1200 = vmin.f32 %v1160, 6.0
        %v1201 = vmin.f32 %v1161, 6.0
        %v1202 = vmin.f32 %v1162, 6.0
        %v1203 = vmin.f32 %v1163, 6.0
        %v1204 = vmin.f32 %v1164, 6.0
        %v1205 = vmin.f32 %v1165, 6.0
        %v1206 = vmin.f32 %v1166, 6.0
        %v1207 = vmin.f32 %v1167, 6.0
        %v1208 = vmin.f32 %v1168, 6.0
        %v1209 = vmin.f32 %v1169, 6.0
        %v1210 = vmin.f32 %v1170, 6.0
        %v1211 = vmin.f32 %v1171, 6.0
        %v1212 = vmin.f32 %v1172, 6.0
        %v1213 = vmul.f32 %v917, %v1173
        %v1214 = vmul.f32 %v919, %v1174
        %v1215 = vmul.f32 %v990, %v1175
        %v1216 = vmul.f32 %v992, %v1176
        %v1217 = vmul.f32 %v1063, %v1177
        %v1218 = vmul.f32 %v921, %v1178
        %v1219 = vmul.f32 %v923, %v1179
        %v1220 = vmul.f32 %v994, %v1180
        %v1221 = vmul.f32 %v996, %v1181
        %v1222 = vmul.f32 %v1066, %v1182
        %v1223 = vmul.f32 %v927, %v1183
        %v1224 = vmul.f32 %v929, %v1184
        %v1225 = vmul.f32 %v1000, %v1185
        %v1226 = vmul.f32 %v1002, %v1186
        %v1227 = vmul.f32 %v1071, %v1187
        %v1228 = vmul.f32 %v931, %v1188
        %v1229 = vmul.f32 %v933, %v1189
        %v1230 = vmul.f32 %v1004, %v1190
        %v1231 = vmul.f32 %v1006, %v1191
        %v1232 = vmul.f32 %v1074, %v1192
        %v1233 = vmul.f32 %v937, %v1193
        %v1234 = vmul.f32 %v939, %v1194
        %v1235 = vmul.f32 %v1010, %v1195
        %v1236 = vmul.f32 %v1012, %v1196
        %v1237 = vmul.f32 %v1079, %v1197
        %v1238 = vmul.f32 %v941, %v1198
        %v1239 = vmul.f32 %v943, %v1199
        %v1240 = vmul.f32 %v1014, %v1200
        %v1241 = vmul.f32 %v1016, %v1201
        %v1242 = vmul.f32 %v1082, %v1202
        %v1243 = vmul.f32 %v947, %v1203
        %v1244 = vmul.f32 %v949, %v1204
        %v1245 = vmul.f32 %v1020, %v1205
        %v1246 = vmul.f32 %v1022, %v1206
        %v1247 = vmul.f32 %v1087, %v1207
        %v1248 = vmul.f32 %v951, %v1208
        %v1249 = vmul.f32 %v953, %v1209
        %v1250 = vmul.f32 %v1024, %v1210
        %v1251 = vmul.f32 %v1026, %v1211
        %v1252 = vmul.f32 %v1090, %v1212
        %v1253 = vmul.f32 %v1213, 0.16666667
        %v1254 = vmul.f32 %v1214, 0.16666667
        %v1255 = vmul.f32 %v1215, 0.16666667
        %v1256 = vmul.f32 %v1216, 0.16666667
        %v1257 = vmul.f32 %v1217, 0.16666667
        %v1258 = vmul.f32 %v1218, 0.16666667
        %v1259 = vmul.f32 %v1219, 0.16666667
        %v1260 = vmul.f32 %v1220, 0.16666667
        %v1261 = vmul.f32 %v1221, 0.16666667
        %v1262 = vmul.f32 %v1222, 0.16666667
        %v1263 = vmul.f32 %v1223, 0.16666667
        %v1264 = vmul.f32 %v1224, 0.16666667
        %v1265 = vmul.f32 %v1225, 0.16666667
        %v1266 = vmul.f32 %v1226, 0.16666667
        %v1267 = vmul.f32 %v1227, 0.16666667
        %v1268 = vmul.f32 %v1228, 0.16666667
        %v1269 = vmul.f32 %v1229, 0.16666667
        %v1270 = vmul.f32 %v1230, 0.16666667
        %v1271 = vmul.f32 %v1231, 0.16666667
        %v1272 = vmul.f32 %v1232, 0.16666667
        %v1273 = vmul.f32 %v1233, 0.16666667
        %v1274 = vmul.f32 %v1234, 0.16666667
        %v1275 = vmul.f32 %v1235, 0.16666667
        %v1276 = vmul.f32 %v1236, 0.16666667
        %v1277 = vmul.f32 %v1237, 0.16666667
        %v1278 = vmul.f32 %v1238, 0.16666667
        %v1279 = vmul.f32 %v1239, 0.16666667
        %v1280 = vmul.f32 %v1240, 0.16666667
        %v1281 = vmul.f32 %v1241, 0.16666667
        %v1282 = vmul.f32 %v1242, 0.16666667
        %v1283 = vmul.f32 %v1243, 0.16666667
        %v1284 = vmul.f32 %v1244, 0.16666667
        %v1285 = vmul.f32 %v1245, 0.16666667
        %v1286 = vmul.f32 %v1246, 0.16666667
        %v1287 = vmul.f32 %v1247, 0.16666667
        %v1288 = vmul.f32 %v1248, 0.16666667
        %v1289 = vmul.f32 %v1249, 0.16666667
        %v1290 = vmul.f32 %v1250, 0.16666667
        %v1291 = vmul.f32 %v1251, 0.16666667
        %v1292 = vmul.f32 %v1252, 0.16666667
        %v1293 = vadd.f32 %v1253, %v1258
        %v1294 = vadd.f32 %v1293, %v1263
        %v1295 = vadd.f32 %v1294, %v1268
        %v1296 = vadd.f32 %v1295, %v1273
        %v1297 = vadd.f32 %v1296, %v1278
        %v1298 = vadd.f32 %v1297, %v1283
        %v1299 = vadd.f32 %v1298, %v1288
        %v1300 = vrot.slane %v1299, 4
        %v1301 = vadd.f32 %v1299, %v1300
        %v1302 = vrot.slane %v1301, 2
        %v1303 = vadd.f32 %v1301, %v1302
        %v1304 = vrot.slane %v1303, 1
        %v1305 = vadd.f32 %v1303, %v1304
        %v1306 = vadd.f32 %v1254, %v1259
        %v1307 = vadd.f32 %v1306, %v1264
        %v1308 = vadd.f32 %v1307, %v1269
        %v1309 = vadd.f32 %v1308, %v1274
        %v1310 = vadd.f32 %v1309, %v1279
        %v1311 = vadd.f32 %v1310, %v1284
        %v1312 = vadd.f32 %v1311, %v1289
        %v1313 = vrot.slane %v1312, 4
        %v1314 = vadd.f32 %v1312, %v1313
        %v1315 = vrot.slane %v1314, 2
        %v1316 = vadd.f32 %v1314, %v1315
        %v1317 = vrot.slane %v1316, 1
        %v1318 = vadd.f32 %v1316, %v1317
        %v1319 = vadd.f32 %v1255, %v1260
        %v1320 = vadd.f32 %v1319, %v1265
        %v1321 = vadd.f32 %v1320, %v1270
        %v1322 = vadd.f32 %v1321, %v1275
        %v1323 = vadd.f32 %v1322, %v1280
        %v1324 = vadd.f32 %v1323, %v1285
        %v1325 = vadd.f32 %v1324, %v1290
        %v1326 = vrot.slane %v1325, 4
        %v1327 = vadd.f32 %v1325, %v1326
        %v1328 = vrot.slane %v1327, 2
        %v1329 = vadd.f32 %v1327, %v1328
        %v1330 = vrot.slane %v1329, 1
        %v1331 = vadd.f32 %v1329, %v1330
        %v1332 = vadd.f32 %v1256, %v1261
        %v1333 = vadd.f32 %v1332, %v1266
        %v1334 = vadd.f32 %v1333, %v1271
        %v1335 = vadd.f32 %v1334, %v1276
        %v1336 = vadd.f32 %v1335, %v1281
        %v1337 = vadd.f32 %v1336, %v1286
        %v1338 = vadd.f32 %v1337, %v1291
        %v1339 = vrot.slane %v1338, 4
        %v1340 = vadd.f32 %v1338, %v1339
        %v1341 = vrot.slane %v1340, 2
        %v1342 = vadd.f32 %v1340, %v1341
        %v1343 = vrot.slane %v1342, 1
        %v1344 = vadd.f32 %v1342, %v1343
        %vm1345 = vcmask 523264
        %v1346 = vsel %vm1345, %v1257, 0.0
        %v1347 = vsel %vm1345, %v1262, 0.0
        %v1348 = vadd.f32 %v1346, %v1347
        %v1349 = vsel %vm1345, %v1267, 0.0
        %v1350 = vadd.f32 %v1348, %v1349
        %v1351 = vsel %vm1345, %v1272, 0.0
        %v1352 = vadd.f32 %v1350, %v1351
        %v1353 = vsel %vm1345, %v1277, 0.0
        %v1354 = vadd.f32 %v1352, %v1353
        %v1355 = vsel %vm1345, %v1282, 0.0
        %v1356 = vadd.f32 %v1354, %v1355
        %v1357 = vsel %vm1345, %v1287, 0.0
        %v1358 = vadd.f32 %v1356, %v1357
        %v1359 = vsel %vm1345, %v1292, 0.0
        %v1360 = vadd.f32 %v1358, %v1359
        %v1361 = vrot.slane %v1360, 4
        %v1362 = vadd.f32 %v1360, %v1361
        %v1363 = vrot.slane %v1362, 2
        %v1364 = vadd.f32 %v1362, %v1363
        %v1365 = vrot.slane %v1364, 1
        %v1366 = vadd.f32 %v1364, %v1365
        %v1367 = vrcp.pop 64.0
        %v1368 = vmul.f32 %v1305, %v1367
        %v1369 = vmul.f32 %v1318, %v1367
        %v1370 = vmul.f32 %v1331, %v1367
        %v1371 = vmul.f32 %v1344, %v1367
        %v1372 = vmul.f32 %v1366, %v1367
        %v1373 = vpack.c.bf16 %v1368, %v1368
        %v1374 = vpack.c.bf16 %v1369, %v1369
        %v1375 = vpack.c.bf16 %v1370, %v1370
        %v1376 = vpack.c.bf16 %v1371, %v1371
        %v1377 = vpack.c.bf16 %v1372, %v1372
        %v1383 = vcombine.low %v1373, %v1374
        %v1384 = vcombine.low %v1375, %v1376
        %v1386 = vunpack.c.l.s4 1966171168
        %v1387 = vunpack.c.0.s8 %v1386
        %v1388 = vlaneseq
        %v1389 = vshrl.u32 %v1388, 7
        %v1390 = vsub.s32 %v1387, %v1389
        %v1391 = vrot.slane %v1383, %v1390
        %v1393 = vunpack.c.l.s4 1966171168
        %v1394 = vunpack.c.0.s8 %v1393
        %v1395 = vlaneseq
        %v1396 = vshrl.u32 %v1395, 7
        %v1397 = vsub.s32 %v1394, %v1396
        %v1398 = vrot.slane %v1384, %v1397
        %v1400 = vunpack.c.l.s4 1966171168
        %v1401 = vunpack.c.0.s8 %v1400
        %v1402 = vlaneseq
        %v1403 = vshrl.u32 %v1402, 7
        %v1404 = vsub.s32 %v1401, %v1403
        %v1405 = vrot.slane %v1377, %v1404
        %v1406 = vcombine.low %v1391, %v1398
        %v1408 = vunpack.c.l.s4 1966171168
        %v1409 = vunpack.c.0.s8 %v1408
        %v1410 = vlaneseq
        %v1411 = vshrl.u32 %v1410, 7
        %v1412 = vsub.s32 %v1409, %v1411
        %v1413 = vrot.slane %v1406, %v1412
        %v1415 = vunpack.c.l.s4 1966171168
        %v1416 = vunpack.c.0.s8 %v1415
        %v1417 = vlaneseq
        %v1418 = vshrl.u32 %v1417, 7
        %v1419 = vsub.s32 %v1416, %v1418
        %v1420 = vrot.slane %v1405, %v1419
        %v1421 = vcombine.low %v1413, %v1420
        %vm1423 = vcmask 1040384
        %vm1424 = vsmask.f32 256
        %vm1425 = vmand %vm1423, %vm1424
        %vm1426 = vcmask 1041409
        %vm1427 = vsmask.f32 1280
        %vm1428 = vmand %vm1426, %vm1427
        %vm1429 = vmor %vm1428, %vm1425
        %vm1430 = vcmask 1042434
        %vm1431 = vsmask.f32 2304
        %vm1432 = vmand %vm1430, %vm1431
        %vm1433 = vmor %vm1432, %vm1429
        %vm1434 = vcmask 1043459
        %vm1435 = vsmask.f32 3328
        %vm1436 = vmand %vm1434, %vm1435
        %vm1437 = vmor %vm1436, %vm1433
        %vm1438 = vcmask 520196
        %vm1439 = vsmask.f32 4352
        %vm1440 = vmand %vm1438, %vm1439
        %vm1441 = vmor %vm1440, %vm1437
        %v1442 = vld [vmem:[%s320] sm:$0x1f]
        %v1443 = vsel %vm1441, %v1421, %v1442
        %1444 = vst [vmem:[%s320] sm:$0x1f] %v1443
        %p1445 = scmp.lt.s32.totalorder %s20, 1
        %s1446 = scalar_select %p1445, %s20, 1
        %s1447 = smul.addr %s1446, 5
        %s1448 = scalar_lea.vmem %s7, %s1447
        // Predicated region
        $region61: #{mobilenet_with_texture_hist.3} parent=47 // pred_check
          %p1449 = pneg %p190
        $region62: #{mobilenet_with_texture_hist.3} parent=47 // pred_check_branch
          %1451 = sbr.rel (%p1449) target = $region64
        $region63: #{mobilenet_with_texture_hist.3} parent=47 // pred_region
          _
        $region64: #{mobilenet_with_texture_hist.3} parent=47 // pred_fallthru
          _
      $region48: #{mobilenet_with_texture_hist.3} parent=5 // pred_fallthru
        _
      %p1452 = scmp.le.s32.totalorder 2, %s15
      // Predicated region
      $region65: #{mobilenet_with_texture_hist.3} parent=5 // pred_check
        %p1453 = pneg %p1452
      $region66: #{mobilenet_with_texture_hist.3} parent=5 // pred_check_branch
        %1455 = sbr.rel (%p1453) target = $region68
      $region67: #{mobilenet_with_texture_hist.3} parent=5 // pred_region
        %s1456 = ssub.s32 %s15, 2
        // Predicated region
        $region69: #{mobilenet_with_texture_hist.3} parent=67 // pred_check
          %p1457 = pneg %p196
        $region70: #{mobilenet_with_texture_hist.3} parent=67 // pred_check_branch
          %1459 = sbr.rel (%p1457) target = $region72
        $region71: #{mobilenet_with_texture_hist.3} parent=67 // pred_region
          %p1460 = scmp.lt.s32.totalorder %s21, 1
          %s1461 = scalar_select %p1460, %s21, 1
          %s1462 = smul.addr %s1461, 5
          %s1463 = scalar_lea.vmem %s7, %s1462
        $region72: #{mobilenet_with_texture_hist.3} parent=67 // pred_fallthru
          _
      $region68: #{mobilenet_with_texture_hist.3} parent=5 // pred_fallthru
        _
    $region6: #{mobilenet_with_texture_hist.3} parent=1 // loop_footer
      %s19 = sadd.s32 1, %s15
    $region7: #{mobilenet_with_texture_hist.3} parent=1 // loop_footer_branch
      %14 = sbr.rel target = $region3
    $region8: #{mobilenet_with_texture_hist.3} parent=1 // loop_exit
      _
    %1464 = vsyncpa [#allocation4], 1
    %s1465 = scalar_lea.sflag [#allocation4], 1
    %1466 = vsyncpa %s1465, 1
    %1467 = vsyncpa [#allocation6], 1

// kernel: mobilenet_with_texture_hist.5
$region0: #{mobilenet_with_texture_hist.5}
  #allocation0 [shape = 'u32[]', space=smem, size = 0x4, offset = 0x4, fixed_abs, tag = 'smem constant byte address 0x4 - core index']
  #allocation1 [shape = 'u32[144,128]{1,0:T(1,128)}', space=vmem, size = 0x12000, scoped, tag = 'internal scratch']
  %s0 = inlined_call_operand.vmem [shape: bf16[2,1024], index: 0, kind: input, shape index: {}]
  %s1 = inlined_call_operand.vmem [shape: bf16[1024,512], index: 1, kind: input, shape index: {}]
  %s2 = inlined_call_operand.vmem [shape: f32[1,512], index: 2, kind: input, shape index: {}]
  %s3 = inlined_call_operand.vmem [shape: bf16[512,128], index: 3, kind: input, shape index: {}]
  %s4 = inlined_call_operand.vmem [shape: f32[1,128], index: 4, kind: input, shape index: {}]
  %s5 = inlined_call_operand.hbm [shape: f32[2,128], index: 5, kind: output, shape index: {}]
  %s6 = sld [smem:[#allocation0]]
  $region30: #{mobilenet_with_texture_hist.5} parent=0
    _
  %s8 = ssub.s32 1, %s6
  %s9 = scalar_select 0, %s8, %s6
  $region1: #{mobilenet_with_texture_hist.5} parent=0
    #allocation2 [shape = 'u8[1024]{0}', space=vmem, size = 0x400, scoped, tag = 'output window, operand 0, single buffered']
    #allocation3 [shape = 's32[1]{0}', space=sflag, size = 0x4, scoped, tag = 'scoped memory for mobilenet_with_texture_hist.5']
    %10 = vsyncpa [#allocation3], 0
    // Predicated region
    $region2: #{mobilenet_with_texture_hist.5} parent=1 // pred_check
      _
    $region3: #{mobilenet_with_texture_hist.5} parent=1 // pred_check_branch
      %12 = sbr.rel (0) target = $region5
    $region4: #{mobilenet_with_texture_hist.5} parent=1 // pred_region
      _
    $region5: #{mobilenet_with_texture_hist.5} parent=1 // pred_fallthru
      _
    // Predicated region
    $region6: #{mobilenet_with_texture_hist.5} parent=1 // pred_check
      _
    $region7: #{mobilenet_with_texture_hist.5} parent=1 // pred_check_branch
      %14 = sbr.rel (0) target = $region9
    $region8: #{mobilenet_with_texture_hist.5} parent=1 // pred_region
      _
    $region9: #{mobilenet_with_texture_hist.5} parent=1 // pred_fallthru
      _
    // Predicated region
    $region10: #{mobilenet_with_texture_hist.5} parent=1 // pred_check
      _
    $region11: #{mobilenet_with_texture_hist.5} parent=1 // pred_check_branch
      %16 = sbr.rel (0) target = $region13
    $region12: #{mobilenet_with_texture_hist.5} parent=1 // pred_region
      _
    $region13: #{mobilenet_with_texture_hist.5} parent=1 // pred_fallthru
      _
    // Predicated region
    $region14: #{mobilenet_with_texture_hist.5} parent=1 // pred_check
      _
    $region15: #{mobilenet_with_texture_hist.5} parent=1 // pred_check_branch
      %18 = sbr.rel (0) target = $region17
    $region16: #{mobilenet_with_texture_hist.5} parent=1 // pred_region
      _
    $region17: #{mobilenet_with_texture_hist.5} parent=1 // pred_fallthru
      _
    // Predicated region
    $region18: #{mobilenet_with_texture_hist.5} parent=1 // pred_check
      _
    $region19: #{mobilenet_with_texture_hist.5} parent=1 // pred_check_branch
      %20 = sbr.rel (0) target = $region21
    $region20: #{mobilenet_with_texture_hist.5} parent=1 // pred_region
      _
    $region21: #{mobilenet_with_texture_hist.5} parent=1 // pred_fallthru
      _
    %v22 = vld [vmem:[%s0] sm:$0xff]
    %v23 = vld [vmem:[%s1] sm:$0xff]
    %v24 = vld [vmem:[%s1 + $0x8] sm:$0xff]
    %v25 = vld [vmem:[%s1 + $0x10] sm:$0xff]
    %v26 = vld [vmem:[%s1 + $0x18] sm:$0xff]
    %v27 = vld [vmem:[%s1 + $0x20] sm:$0xff]
    %v28 = vld [vmem:[%s1 + $0x28] sm:$0xff]
    %v29 = vld [vmem:[%s1 + $0x30] sm:$0xff]
    %v30 = vld [vmem:[%s1 + $0x38] sm:$0xff]
    %v31 = vld [vmem:[%s1 + $0x40] sm:$0xff]
    %v32 = vld [vmem:[%s1 + $0x48] sm:$0xff]
    %v33 = vld [vmem:[%s1 + $0x50] sm:$0xff]
    %v34 = vld [vmem:[%s1 + $0x58] sm:$0xff]
    %v35 = vld [vmem:[%s1 + $0x60] sm:$0xff]
    %v36 = vld [vmem:[%s1 + $0x68] sm:$0xff]
    %v37 = vld [vmem:[%s1 + $0x70] sm:$0xff]
    %v38 = vld [vmem:[%s1 + $0x78] sm:$0xff]
    %v39 = vld [vmem:[%s1 + $0x80] sm:$0xff]
    %v40 = vld [vmem:[%s1 + $0x88] sm:$0xff]
    %v41 = vld [vmem:[%s1 + $0x90] sm:$0xff]
    %v42 = vld [vmem:[%s1 + $0x98] sm:$0xff]
    %v43 = vld [vmem:[%s1 + $0xa0] sm:$0xff]
    %v44 = vld [vmem:[%s1 + $0xa8] sm:$0xff]
    %v45 = vld [vmem:[%s1 + $0xb0] sm:$0xff]
    %v46 = vld [vmem:[%s1 + $0xb8] sm:$0xff]
    %v47 = vld [vmem:[%s1 + $0xc0] sm:$0xff]
    %v48 = vld [vmem:[%s1 + $0xc8] sm:$0xff]
    %v49 = vld [vmem:[%s1 + $0xd0] sm:$0xff]
    %v50 = vld [vmem:[%s1 + $0xd8] sm:$0xff]
    %v51 = vld [vmem:[%s1 + $0xe0] sm:$0xff]
    %v52 = vld [vmem:[%s1 + $0xe8] sm:$0xff]
    %v53 = vld [vmem:[%s1 + $0xf0] sm:$0xff]
    %v54 = vld [vmem:[%s1 + $0xf8] sm:$0xff]
    %v55 = vld [vmem:[%s1 + $0x100] sm:$0xff]
    %v56 = vld [vmem:[%s1 + $0x108] sm:$0xff]
    %v57 = vld [vmem:[%s1 + $0x110] sm:$0xff]
    %v58 = vld [vmem:[%s1 + $0x118] sm:$0xff]
    %v59 = vld [vmem:[%s1 + $0x120] sm:$0xff]
    %v60 = vld [vmem:[%s1 + $0x128] sm:$0xff]
    %v61 = vld [vmem:[%s1 + $0x130] sm:$0xff]
    %v62 = vld [vmem:[%s1 + $0x138] sm:$0xff]
    %v63 = vld [vmem:[%s1 + $0x140] sm:$0xff]
    %v64 = vld [vmem:[%s1 + $0x148] sm:$0xff]
    %v65 = vld [vmem:[%s1 + $0x150] sm:$0xff]
    %v66 = vld [vmem:[%s1 + $0x158] sm:$0xff]
    %v67 = vld [vmem:[%s1 + $0x160] sm:$0xff]
    %v68 = vld [vmem:[%s1 + $0x168] sm:$0xff]
    %v69 = vld [vmem:[%s1 + $0x170] sm:$0xff]
    %v70 = vld [vmem:[%s1 + $0x178] sm:$0xff]
    %v71 = vld [vmem:[%s1 + $0x180] sm:$0xff]
    %v72 = vld [vmem:[%s1 + $0x188] sm:$0xff]
    %v73 = vld [vmem:[%s1 + $0x190] sm:$0xff]
    %v74 = vld [vmem:[%s1 + $0x198] sm:$0xff]
    %v75 = vld [vmem:[%s1 + $0x1a0] sm:$0xff]
    %v76 = vld [vmem:[%s1 + $0x1a8] sm:$0xff]
    %v77 = vld [vmem:[%s1 + $0x1b0] sm:$0xff]
    %v78 = vld [vmem:[%s1 + $0x1b8] sm:$0xff]
    %v79 = vld [vmem:[%s1 + $0x1c0] sm:$0xff]
    %v80 = vld [vmem:[%s1 + $0x1c8] sm:$0xff]
    %v81 = vld [vmem:[%s1 + $0x1d0] sm:$0xff]
    %v82 = vld [vmem:[%s1 + $0x1d8] sm:$0xff]
    %v83 = vld [vmem:[%s1 + $0x1e0] sm:$0xff]
    %v84 = vld [vmem:[%s1 + $0x1e8] sm:$0xff]
    %v85 = vld [vmem:[%s1 + $0x1f0] sm:$0xff]
    %v86 = vld [vmem:[%s1 + $0x1f8] sm:$0xff]
    %v87 = vld [vmem:[%s1 + $0x200] sm:$0xff]
    %v88 = vld [vmem:[%s1 + $0x208] sm:$0xff]
    %v89 = vld [vmem:[%s1 + $0x210] sm:$0xff]
    %v90 = vld [vmem:[%s1 + $0x218] sm:$0xff]
    %v91 = vld [vmem:[%s1 + $0x220] sm:$0xff]
    %v92 = vld [vmem:[%s1 + $0x228] sm:$0xff]
    %v93 = vld [vmem:[%s1 + $0x230] sm:$0xff]
    %v94 = vld [vmem:[%s1 + $0x238] sm:$0xff]
    %v95 = vld [vmem:[%s1 + $0x240] sm:$0xff]
    %v96 = vld [vmem:[%s1 + $0x248] sm:$0xff]
    %v97 = vld [vmem:[%s1 + $0x250] sm:$0xff]
    %v98 = vld [vmem:[%s1 + $0x258] sm:$0xff]
    %v99 = vld [vmem:[%s1 + $0x260] sm:$0xff]
    %v100 = vld [vmem:[%s1 + $0x268] sm:$0xff]
    %v101 = vld [vmem:[%s1 + $0x270] sm:$0xff]
    %v102 = vld [vmem:[%s1 + $0x278] sm:$0xff]
    %v103 = vld [vmem:[%s1 + $0x280] sm:$0xff]
    %v104 = vld [vmem:[%s1 + $0x288] sm:$0xff]
    %v105 = vld [vmem:[%s1 + $0x290] sm:$0xff]
    %v106 = vld [vmem:[%s1 + $0x298] sm:$0xff]
    %v107 = vld [vmem:[%s1 + $0x2a0] sm:$0xff]
    %v108 = vld [vmem:[%s1 + $0x2a8] sm:$0xff]
    %v109 = vld [vmem:[%s1 + $0x2b0] sm:$0xff]
    %v110 = vld [vmem:[%s1 + $0x2b8] sm:$0xff]
    %v111 = vld [vmem:[%s1 + $0x2c0] sm:$0xff]
    %v112 = vld [vmem:[%s1 + $0x2c8] sm:$0xff]
    %v113 = vld [vmem:[%s1 + $0x2d0] sm:$0xff]
    %v114 = vld [vmem:[%s1 + $0x2d8] sm:$0xff]
    %v115 = vld [vmem:[%s1 + $0x2e0] sm:$0xff]
    %v116 = vld [vmem:[%s1 + $0x2e8] sm:$0xff]
    %v117 = vld [vmem:[%s1 + $0x2f0] sm:$0xff]
    %v118 = vld [vmem:[%s1 + $0x2f8] sm:$0xff]
    %v119 = vld [vmem:[%s1 + $0x300] sm:$0xff]
    %v120 = vld [vmem:[%s1 + $0x308] sm:$0xff]
    %v121 = vld [vmem:[%s1 + $0x310] sm:$0xff]
    %v122 = vld [vmem:[%s1 + $0x318] sm:$0xff]
    %v123 = vld [vmem:[%s1 + $0x320] sm:$0xff]
    %v124 = vld [vmem:[%s1 + $0x328] sm:$0xff]
    %v125 = vld [vmem:[%s1 + $0x330] sm:$0xff]
    %v126 = vld [vmem:[%s1 + $0x338] sm:$0xff]
    %v127 = vld [vmem:[%s1 + $0x340] sm:$0xff]
    %v128 = vld [vmem:[%s1 + $0x348] sm:$0xff]
    %v129 = vld [vmem:[%s1 + $0x350] sm:$0xff]
    %v130 = vld [vmem:[%s1 + $0x358] sm:$0xff]
    %v131 = vld [vmem:[%s1 + $0x360] sm:$0xff]
    %v132 = vld [vmem:[%s1 + $0x368] sm:$0xff]
    %v133 = vld [vmem:[%s1 + $0x370] sm:$0xff]
    %v134 = vld [vmem:[%s1 + $0x378] sm:$0xff]
    %v135 = vld [vmem:[%s1 + $0x380] sm:$0xff]
    %v136 = vld [vmem:[%s1 + $0x388] sm:$0xff]
    %v137 = vld [vmem:[%s1 + $0x390] sm:$0xff]
    %v138 = vld [vmem:[%s1 + $0x398] sm:$0xff]
    %v139 = vld [vmem:[%s1 + $0x3a0] sm:$0xff]
    %v140 = vld [vmem:[%s1 + $0x3a8] sm:$0xff]
    %v141 = vld [vmem:[%s1 + $0x3b0] sm:$0xff]
    %v142 = vld [vmem:[%s1 + $0x3b8] sm:$0xff]
    %v143 = vld [vmem:[%s1 + $0x3c0] sm:$0xff]
    %v144 = vld [vmem:[%s1 + $0x3c8] sm:$0xff]
    %v145 = vld [vmem:[%s1 + $0x3d0] sm:$0xff]
    %v146 = vld [vmem:[%s1 + $0x3d8] sm:$0xff]
    %v147 = vld [vmem:[%s1 + $0x3e0] sm:$0xff]
    %v148 = vld [vmem:[%s1 + $0x3e8] sm:$0xff]
    %v149 = vld [vmem:[%s1 + $0x3f0] sm:$0xff]
    %v150 = vld [vmem:[%s1 + $0x3f8] sm:$0xff]
    %v151 = vld [vmem:[%s1 + $0x400] sm:$0xff]
    %v152 = vld [vmem:[%s1 + $0x408] sm:$0xff]
    %v153 = vld [vmem:[%s1 + $0x410] sm:$0xff]
    %v154 = vld [vmem:[%s1 + $0x418] sm:$0xff]
    %v155 = vld [vmem:[%s1 + $0x420] sm:$0xff]
    %v156 = vld [vmem:[%s1 + $0x428] sm:$0xff]
    %v157 = vld [vmem:[%s1 + $0x430] sm:$0xff]
    %v158 = vld [vmem:[%s1 + $0x438] sm:$0xff]
    %v159 = vld [vmem:[%s1 + $0x440] sm:$0xff]
    %v160 = vld [vmem:[%s1 + $0x448] sm:$0xff]
    %v161 = vld [vmem:[%s1 + $0x450] sm:$0xff]
    %v162 = vld [vmem:[%s1 + $0x458] sm:$0xff]
    %v163 = vld [vmem:[%s1 + $0x460] sm:$0xff]
    %v164 = vld [vmem:[%s1 + $0x468] sm:$0xff]
    %v165 = vld [vmem:[%s1 + $0x470] sm:$0xff]
    %v166 = vld [vmem:[%s1 + $0x478] sm:$0xff]
    %v167 = vld [vmem:[%s1 + $0x480] sm:$0xff]
    %v168 = vld [vmem:[%s1 + $0x488] sm:$0xff]
    %v169 = vld [vmem:[%s1 + $0x490] sm:$0xff]
    %v170 = vld [vmem:[%s1 + $0x498] sm:$0xff]
    %v171 = vld [vmem:[%s1 + $0x4a0] sm:$0xff]
    %v172 = vld [vmem:[%s1 + $0x4a8] sm:$0xff]
    %v173 = vld [vmem:[%s1 + $0x4b0] sm:$0xff]
    %v174 = vld [vmem:[%s1 + $0x4b8] sm:$0xff]
    %v175 = vld [vmem:[%s1 + $0x4c0] sm:$0xff]
    %v176 = vld [vmem:[%s1 + $0x4c8] sm:$0xff]
    %v177 = vld [vmem:[%s1 + $0x4d0] sm:$0xff]
    %v178 = vld [vmem:[%s1 + $0x4d8] sm:$0xff]
    %v179 = vld [vmem:[%s1 + $0x4e0] sm:$0xff]
    %v180 = vld [vmem:[%s1 + $0x4e8] sm:$0xff]
    %v181 = vld [vmem:[%s1 + $0x4f0] sm:$0xff]
    %v182 = vld [vmem:[%s1 + $0x4f8] sm:$0xff]
    %v183 = vld [vmem:[%s1 + $0x500] sm:$0xff]
    %v184 = vld [vmem:[%s1 + $0x508] sm:$0xff]
    %v185 = vld [vmem:[%s1 + $0x510] sm:$0xff]
    %v186 = vld [vmem:[%s1 + $0x518] sm:$0xff]
    %v187 = vld [vmem:[%s1 + $0x520] sm:$0xff]
    %v188 = vld [vmem:[%s1 + $0x528] sm:$0xff]
    %v189 = vld [vmem:[%s1 + $0x530] sm:$0xff]
    %v190 = vld [vmem:[%s1 + $0x538] sm:$0xff]
    %v191 = vld [vmem:[%s1 + $0x540] sm:$0xff]
    %v192 = vld [vmem:[%s1 + $0x548] sm:$0xff]
    %v193 = vld [vmem:[%s1 + $0x550] sm:$0xff]
    %v194 = vld [vmem:[%s1 + $0x558] sm:$0xff]
    %v195 = vld [vmem:[%s1 + $0x560] sm:$0xff]
    %v196 = vld [vmem:[%s1 + $0x568] sm:$0xff]
    %v197 = vld [vmem:[%s1 + $0x570] sm:$0xff]
    %v198 = vld [vmem:[%s1 + $0x578] sm:$0xff]
    %v199 = vld [vmem:[%s1 + $0x580] sm:$0xff]
    %v200 = vld [vmem:[%s1 + $0x588] sm:$0xff]
    %v201 = vld [vmem:[%s1 + $0x590] sm:$0xff]
    %v202 = vld [vmem:[%s1 + $0x598] sm:$0xff]
    %v203 = vld [vmem:[%s1 + $0x5a0] sm:$0xff]
    %v204 = vld [vmem:[%s1 + $0x5a8] sm:$0xff]
    %v205 = vld [vmem:[%s1 + $0x5b0] sm:$0xff]
    %v206 = vld [vmem:[%s1 + $0x5b8] sm:$0xff]
    %v207 = vld [vmem:[%s1 + $0x5c0] sm:$0xff]
    %v208 = vld [vmem:[%s1 + $0x5c8] sm:$0xff]
    %v209 = vld [vmem:[%s1 + $0x5d0] sm:$0xff]
    %v210 = vld [vmem:[%s1 + $0x5d8] sm:$0xff]
    %v211 = vld [vmem:[%s1 + $0x5e0] sm:$0xff]
    %v212 = vld [vmem:[%s1 + $0x5e8] sm:$0xff]
    %v213 = vld [vmem:[%s1 + $0x5f0] sm:$0xff]
    %v214 = vld [vmem:[%s1 + $0x5f8] sm:$0xff]
    %v215 = vld [vmem:[%s1 + $0x600] sm:$0xff]
    %v216 = vld [vmem:[%s1 + $0x608] sm:$0xff]
    %v217 = vld [vmem:[%s1 + $0x610] sm:$0xff]
    %v218 = vld [vmem:[%s1 + $0x618] sm:$0xff]
    %v219 = vld [vmem:[%s1 + $0x620] sm:$0xff]
    %v220 = vld [vmem:[%s1 + $0x628] sm:$0xff]
    %v221 = vld [vmem:[%s1 + $0x630] sm:$0xff]
    %v222 = vld [vmem:[%s1 + $0x638] sm:$0xff]
    %v223 = vld [vmem:[%s1 + $0x640] sm:$0xff]
    %v224 = vld [vmem:[%s1 + $0x648] sm:$0xff]
    %v225 = vld [vmem:[%s1 + $0x650] sm:$0xff]
    %v226 = vld [vmem:[%s1 + $0x658] sm:$0xff]
    %v227 = vld [vmem:[%s1 + $0x660] sm:$0xff]
    %v228 = vld [vmem:[%s1 + $0x668] sm:$0xff]
    %v229 = vld [vmem:[%s1 + $0x670] sm:$0xff]
    %v230 = vld [vmem:[%s1 + $0x678] sm:$0xff]
    %v231 = vld [vmem:[%s1 + $0x680] sm:$0xff]
    %v232 = vld [vmem:[%s1 + $0x688] sm:$0xff]
    %v233 = vld [vmem:[%s1 + $0x690] sm:$0xff]
    %v234 = vld [vmem:[%s1 + $0x698] sm:$0xff]
    %v235 = vld [vmem:[%s1 + $0x6a0] sm:$0xff]
    %v236 = vld [vmem:[%s1 + $0x6a8] sm:$0xff]
    %v237 = vld [vmem:[%s1 + $0x6b0] sm:$0xff]
    %v238 = vld [vmem:[%s1 + $0x6b8] sm:$0xff]
    %v239 = vld [vmem:[%s1 + $0x6c0] sm:$0xff]
    %v240 = vld [vmem:[%s1 + $0x6c8] sm:$0xff]
    %v241 = vld [vmem:[%s1 + $0x6d0] sm:$0xff]
    %v242 = vld [vmem:[%s1 + $0x6d8] sm:$0xff]
    %v243 = vld [vmem:[%s1 + $0x6e0] sm:$0xff]
    %v244 = vld [vmem:[%s1 + $0x6e8] sm:$0xff]
    %v245 = vld [vmem:[%s1 + $0x6f0] sm:$0xff]
    %v246 = vld [vmem:[%s1 + $0x6f8] sm:$0xff]
    %v247 = vld [vmem:[%s1 + $0x700] sm:$0xff]
    %v248 = vld [vmem:[%s1 + $0x708] sm:$0xff]
    %v249 = vld [vmem:[%s1 + $0x710] sm:$0xff]
    %v250 = vld [vmem:[%s1 + $0x718] sm:$0xff]
    %v251 = vld [vmem:[%s1 + $0x720] sm:$0xff]
    %v252 = vld [vmem:[%s1 + $0x728] sm:$0xff]
    %v253 = vld [vmem:[%s1 + $0x730] sm:$0xff]
    %v254 = vld [vmem:[%s1 + $0x738] sm:$0xff]
    %v255 = vld [vmem:[%s1 + $0x740] sm:$0xff]
    %v256 = vld [vmem:[%s1 + $0x748] sm:$0xff]
    %v257 = vld [vmem:[%s1 + $0x750] sm:$0xff]
    %v258 = vld [vmem:[%s1 + $0x758] sm:$0xff]
    %v259 = vld [vmem:[%s1 + $0x760] sm:$0xff]
    %v260 = vld [vmem:[%s1 + $0x768] sm:$0xff]
    %v261 = vld [vmem:[%s1 + $0x770] sm:$0xff]
    %v262 = vld [vmem:[%s1 + $0x778] sm:$0xff]
    %v263 = vld [vmem:[%s1 + $0x780] sm:$0xff]
    %v264 = vld [vmem:[%s1 + $0x788] sm:$0xff]
    %v265 = vld [vmem:[%s1 + $0x790] sm:$0xff]
    %v266 = vld [vmem:[%s1 + $0x798] sm:$0xff]
    %v267 = vld [vmem:[%s1 + $0x7a0] sm:$0xff]
    %v268 = vld [vmem:[%s1 + $0x7a8] sm:$0xff]
    %v269 = vld [vmem:[%s1 + $0x7b0] sm:$0xff]
    %v270 = vld [vmem:[%s1 + $0x7b8] sm:$0xff]
    %v271 = vld [vmem:[%s1 + $0x7c0] sm:$0xff]
    %v272 = vld [vmem:[%s1 + $0x7c8] sm:$0xff]
    %v273 = vld [vmem:[%s1 + $0x7d0] sm:$0xff]
    %v274 = vld [vmem:[%s1 + $0x7d8] sm:$0xff]
    %v275 = vld [vmem:[%s1 + $0x7e0] sm:$0xff]
    %v276 = vld [vmem:[%s1 + $0x7e8] sm:$0xff]
    %v277 = vld [vmem:[%s1 + $0x7f0] sm:$0xff]
    %v278 = vld [vmem:[%s1 + $0x7f8] sm:$0xff]
    %v279 = vld [vmem:[%s2] sm:$0xf]
    %v281 = vlaneseq
    %v282 = vshrl.u32 %v281, 7
    %v283 = vsub.s32 0, %v282
    %v284 = vrot.slane %v279, %v283
    %v285 = vlaneseq
    %v286 = vshrl.u32 %v285, 7
    %v287 = vsub.s32 1, %v286
    %v288 = vrot.slane %v279, %v287
    %v289 = vlaneseq
    %v290 = vshrl.u32 %v289, 7
    %v291 = vsub.s32 2, %v290
    %v292 = vrot.slane %v279, %v291
    %v293 = vlaneseq
    %v294 = vshrl.u32 %v293, 7
    %v295 = vsub.s32 3, %v294
    %v296 = vrot.slane %v279, %v295
    %v302 = vcombine.high %v22, %v22
    %v304 = vunpack.c.l.s4 1966171168
    %v305 = vunpack.c.0.s8 %v304
    %v306 = vlaneseq
    %v307 = vshrl.u32 %v306, 7
    %v308 = vsub.s32 %v305, %v307
    %v309 = vrot.slane %v22, %v308
    %v311 = vunpack.c.l.s4 1966171168
    %v312 = vunpack.c.0.s8 %v311
    %v313 = vlaneseq
    %v314 = vshrl.u32 %v313, 7
    %v315 = vsub.s32 %v312, %v314
    %v316 = vrot.slane %v302, %v315
    %v317 = vcombine.high %v309, %v309
    %v318 = vcombine.high %v316, %v316
    %v320 = vunpack.c.l.s4 1966171168
    %v321 = vunpack.c.0.s8 %v320
    %v322 = vlaneseq
    %v323 = vshrl.u32 %v322, 7
    %v324 = vsub.s32 %v321, %v323
    %v325 = vrot.slane %v309, %v324
    %v327 = vunpack.c.l.s4 1966171168
    %v328 = vunpack.c.0.s8 %v327
    %v329 = vlaneseq
    %v330 = vshrl.u32 %v329, 7
    %v331 = vsub.s32 %v328, %v330
    %v332 = vrot.slane %v316, %v331
    %v334 = vunpack.c.l.s4 1966171168
    %v335 = vunpack.c.0.s8 %v334
    %v336 = vlaneseq
    %v337 = vshrl.u32 %v336, 7
    %v338 = vsub.s32 %v335, %v337
    %v339 = vrot.slane %v317, %v338
    %v341 = vunpack.c.l.s4 1966171168
    %v342 = vunpack.c.0.s8 %v341
    %v343 = vlaneseq
    %v344 = vshrl.u32 %v343, 7
    %v345 = vsub.s32 %v342, %v344
    %v346 = vrot.slane %v318, %v345
    %v347 = vcombine.high %v325, %v325
    %v348 = vcombine.high %v332, %v332
    %v349 = vcombine.high %v339, %v339
    %v350 = vcombine.high %v346, %v346
    %v615 = vunpack.c.l.b16 %v23
    %v616 = vunpack.c.h.b16 %v23
    %v617 = vunpack.c.l.b16 %v24
    %v618 = vunpack.c.h.b16 %v24
    %v619 = vunpack.c.l.b16 %v25
    %v620 = vunpack.c.h.b16 %v25
    %v621 = vunpack.c.l.b16 %v26
    %v622 = vunpack.c.h.b16 %v26
    %v623 = vunpack.c.l.b16 %v27
    %v624 = vunpack.c.h.b16 %v27
    %v625 = vunpack.c.l.b16 %v28
    %v626 = vunpack.c.h.b16 %v28
    %v627 = vunpack.c.l.b16 %v29
    %v628 = vunpack.c.h.b16 %v29
    %v629 = vunpack.c.l.b16 %v30
    %v630 = vunpack.c.h.b16 %v30
    %v631 = vunpack.c.l.b16 %v31
    %v632 = vunpack.c.h.b16 %v31
    %v633 = vunpack.c.l.b16 %v32
    %v634 = vunpack.c.h.b16 %v32
    %v635 = vunpack.c.l.b16 %v33
    %v636 = vunpack.c.h.b16 %v33
    %v637 = vunpack.c.l.b16 %v34
    %v638 = vunpack.c.h.b16 %v34
    %v639 = vunpack.c.l.b16 %v35
    %v640 = vunpack.c.h.b16 %v35
    %v641 = vunpack.c.l.b16 %v36
    %v642 = vunpack.c.h.b16 %v36
    %v643 = vunpack.c.l.b16 %v37
    %v644 = vunpack.c.h.b16 %v37
    %v645 = vunpack.c.l.b16 %v38
    %v646 = vunpack.c.h.b16 %v38
    %v647 = vunpack.c.l.b16 %v39
    %v648 = vunpack.c.h.b16 %v39
    %v649 = vunpack.c.l.b16 %v40
    %v650 = vunpack.c.h.b16 %v40
    %v651 = vunpack.c.l.b16 %v41
    %v652 = vunpack.c.h.b16 %v41
    %v653 = vunpack.c.l.b16 %v42
    %v654 = vunpack.c.h.b16 %v42
    %v655 = vunpack.c.l.b16 %v43
    %v656 = vunpack.c.h.b16 %v43
    %v657 = vunpack.c.l.b16 %v44
    %v658 = vunpack.c.h.b16 %v44
    %v659 = vunpack.c.l.b16 %v45
    %v660 = vunpack.c.h.b16 %v45
    %v661 = vunpack.c.l.b16 %v46
    %v662 = vunpack.c.h.b16 %v46
    %v663 = vunpack.c.l.b16 %v47
    %v664 = vunpack.c.h.b16 %v47
    %v665 = vunpack.c.l.b16 %v48
    %v666 = vunpack.c.h.b16 %v48
    %v667 = vunpack.c.l.b16 %v49
    %v668 = vunpack.c.h.b16 %v49
    %v669 = vunpack.c.l.b16 %v50
    %v670 = vunpack.c.h.b16 %v50
    %v671 = vunpack.c.l.b16 %v51
    %v672 = vunpack.c.h.b16 %v51
    %v673 = vunpack.c.l.b16 %v52
    %v674 = vunpack.c.h.b16 %v52
    %v675 = vunpack.c.l.b16 %v53
    %v676 = vunpack.c.h.b16 %v53
    %v677 = vunpack.c.l.b16 %v54
    %v678 = vunpack.c.h.b16 %v54
    %v679 = vunpack.c.l.b16 %v55
    %v680 = vunpack.c.h.b16 %v55
    %v681 = vunpack.c.l.b16 %v56
    %v682 = vunpack.c.h.b16 %v56
    %v683 = vunpack.c.l.b16 %v57
    %v684 = vunpack.c.h.b16 %v57
    %v685 = vunpack.c.l.b16 %v58
    %v686 = vunpack.c.h.b16 %v58
    %v687 = vunpack.c.l.b16 %v59
    %v688 = vunpack.c.h.b16 %v59
    %v689 = vunpack.c.l.b16 %v60
    %v690 = vunpack.c.h.b16 %v60
    %v691 = vunpack.c.l.b16 %v61
    %v692 = vunpack.c.h.b16 %v61
    %v693 = vunpack.c.l.b16 %v62
    %v694 = vunpack.c.h.b16 %v62
    %v695 = vunpack.c.l.b16 %v63
    %v696 = vunpack.c.h.b16 %v63
    %v697 = vunpack.c.l.b16 %v64
    %v698 = vunpack.c.h.b16 %v64
    %v699 = vunpack.c.l.b16 %v65
    %v700 = vunpack.c.h.b16 %v65
    %v701 = vunpack.c.l.b16 %v66
    %v702 = vunpack.c.h.b16 %v66
    %v703 = vunpack.c.l.b16 %v67
    %v704 = vunpack.c.h.b16 %v67
    %v705 = vunpack.c.l.b16 %v68
    %v706 = vunpack.c.h.b16 %v68
    %v707 = vunpack.c.l.b16 %v69
    %v708 = vunpack.c.h.b16 %v69
    %v709 = vunpack.c.l.b16 %v70
    %v710 = vunpack.c.h.b16 %v70
    %v711 = vunpack.c.l.b16 %v71
    %v712 = vunpack.c.h.b16 %v71
    %v713 = vunpack.c.l.b16 %v72
    %v714 = vunpack.c.h.b16 %v72
    %v715 = vunpack.c.l.b16 %v73
    %v716 = vunpack.c.h.b16 %v73
    %v717 = vunpack.c.l.b16 %v74
    %v718 = vunpack.c.h.b16 %v74
    %v719 = vunpack.c.l.b16 %v75
    %v720 = vunpack.c.h.b16 %v75
    %v721 = vunpack.c.l.b16 %v76
    %v722 = vunpack.c.h.b16 %v76
    %v723 = vunpack.c.l.b16 %v77
    %v724 = vunpack.c.h.b16 %v77
    %v725 = vunpack.c.l.b16 %v78
    %v726 = vunpack.c.h.b16 %v78
    %v727 = vunpack.c.l.b16 %v79
    %v728 = vunpack.c.h.b16 %v79
    %v729 = vunpack.c.l.b16 %v80
    %v730 = vunpack.c.h.b16 %v80
    %v731 = vunpack.c.l.b16 %v81
    %v732 = vunpack.c.h.b16 %v81
    %v733 = vunpack.c.l.b16 %v82
    %v734 = vunpack.c.h.b16 %v82
    %v735 = vunpack.c.l.b16 %v83
    %v736 = vunpack.c.h.b16 %v83
    %v737 = vunpack.c.l.b16 %v84
    %v738 = vunpack.c.h.b16 %v84
    %v739 = vunpack.c.l.b16 %v85
    %v740 = vunpack.c.h.b16 %v85
    %v741 = vunpack.c.l.b16 %v86
    %v742 = vunpack.c.h.b16 %v86
    %v743 = vunpack.c.l.b16 %v87
    %v744 = vunpack.c.h.b16 %v87
    %v745 = vunpack.c.l.b16 %v88
    %v746 = vunpack.c.h.b16 %v88
    %v747 = vunpack.c.l.b16 %v89
    %v748 = vunpack.c.h.b16 %v89
    %v749 = vunpack.c.l.b16 %v90
    %v750 = vunpack.c.h.b16 %v90
    %v751 = vunpack.c.l.b16 %v91
    %v752 = vunpack.c.h.b16 %v91
    %v753 = vunpack.c.l.b16 %v92
    %v754 = vunpack.c.h.b16 %v92
    %v755 = vunpack.c.l.b16 %v93
    %v756 = vunpack.c.h.b16 %v93
    %v757 = vunpack.c.l.b16 %v94
    %v758 = vunpack.c.h.b16 %v94
    %v759 = vunpack.c.l.b16 %v95
    %v760 = vunpack.c.h.b16 %v95
    %v761 = vunpack.c.l.b16 %v96
    %v762 = vunpack.c.h.b16 %v96
    %v763 = vunpack.c.l.b16 %v97
    %v764 = vunpack.c.h.b16 %v97
    %v765 = vunpack.c.l.b16 %v98
    %v766 = vunpack.c.h.b16 %v98
    %v767 = vunpack.c.l.b16 %v99
    %v768 = vunpack.c.h.b16 %v99
    %v769 = vunpack.c.l.b16 %v100
    %v770 = vunpack.c.h.b16 %v100
    %v771 = vunpack.c.l.b16 %v101
    %v772 = vunpack.c.h.b16 %v101
    %v773 = vunpack.c.l.b16 %v102
    %v774 = vunpack.c.h.b16 %v102
    %v775 = vunpack.c.l.b16 %v103
    %v776 = vunpack.c.h.b16 %v103
    %v777 = vunpack.c.l.b16 %v104
    %v778 = vunpack.c.h.b16 %v104
    %v779 = vunpack.c.l.b16 %v105
    %v780 = vunpack.c.h.b16 %v105
    %v781 = vunpack.c.l.b16 %v106
    %v782 = vunpack.c.h.b16 %v106
    %v783 = vunpack.c.l.b16 %v107
    %v784 = vunpack.c.h.b16 %v107
    %v785 = vunpack.c.l.b16 %v108
    %v786 = vunpack.c.h.b16 %v108
    %v787 = vunpack.c.l.b16 %v109
    %v788 = vunpack.c.h.b16 %v109
    %v789 = vunpack.c.l.b16 %v110
    %v790 = vunpack.c.h.b16 %v110
    %v791 = vunpack.c.l.b16 %v111
    %v792 = vunpack.c.h.b16 %v111
    %v793 = vunpack.c.l.b16 %v112
    %v794 = vunpack.c.h.b16 %v112
    %v795 = vunpack.c.l.b16 %v113
    %v796 = vunpack.c.h.b16 %v113
    %v797 = vunpack.c.l.b16 %v114
    %v798 = vunpack.c.h.b16 %v114
    %v799 = vunpack.c.l.b16 %v115
    %v800 = vunpack.c.h.b16 %v115
    %v801 = vunpack.c.l.b16 %v116
    %v802 = vunpack.c.h.b16 %v116
    %v803 = vunpack.c.l.b16 %v117
    %v804 = vunpack.c.h.b16 %v117
    %v805 = vunpack.c.l.b16 %v118
    %v806 = vunpack.c.h.b16 %v118
    %v807 = vunpack.c.l.b16 %v119
    %v808 = vunpack.c.h.b16 %v119
    %v809 = vunpack.c.l.b16 %v120
    %v810 = vunpack.c.h.b16 %v120
    %v811 = vunpack.c.l.b16 %v121
    %v812 = vunpack.c.h.b16 %v121
    %v813 = vunpack.c.l.b16 %v122
    %v814 = vunpack.c.h.b16 %v122
    %v815 = vunpack.c.l.b16 %v123
    %v816 = vunpack.c.h.b16 %v123
    %v817 = vunpack.c.l.b16 %v124
    %v818 = vunpack.c.h.b16 %v124
    %v819 = vunpack.c.l.b16 %v125
    %v820 = vunpack.c.h.b16 %v125
    %v821 = vunpack.c.l.b16 %v126
    %v822 = vunpack.c.h.b16 %v126
    %v823 = vunpack.c.l.b16 %v127
    %v824 = vunpack.c.h.b16 %v127
    %v825 = vunpack.c.l.b16 %v128
    %v826 = vunpack.c.h.b16 %v128
    %v827 = vunpack.c.l.b16 %v129
    %v828 = vunpack.c.h.b16 %v129
    %v829 = vunpack.c.l.b16 %v130
    %v830 = vunpack.c.h.b16 %v130
    %v831 = vunpack.c.l.b16 %v131
    %v832 = vunpack.c.h.b16 %v131
    %v833 = vunpack.c.l.b16 %v132
    %v834 = vunpack.c.h.b16 %v132
    %v835 = vunpack.c.l.b16 %v133
    %v836 = vunpack.c.h.b16 %v133
    %v837 = vunpack.c.l.b16 %v134
    %v838 = vunpack.c.h.b16 %v134
    %v839 = vunpack.c.l.b16 %v135
    %v840 = vunpack.c.h.b16 %v135
    %v841 = vunpack.c.l.b16 %v136
    %v842 = vunpack.c.h.b16 %v136
    %v843 = vunpack.c.l.b16 %v137
    %v844 = vunpack.c.h.b16 %v137
    %v845 = vunpack.c.l.b16 %v138
    %v846 = vunpack.c.h.b16 %v138
    %v847 = vunpack.c.l.b16 %v139
    %v848 = vunpack.c.h.b16 %v139
    %v849 = vunpack.c.l.b16 %v140
    %v850 = vunpack.c.h.b16 %v140
    %v851 = vunpack.c.l.b16 %v141
    %v852 = vunpack.c.h.b16 %v141
    %v853 = vunpack.c.l.b16 %v142
    %v854 = vunpack.c.h.b16 %v142
    %v855 = vunpack.c.l.b16 %v143
    %v856 = vunpack.c.h.b16 %v143
    %v857 = vunpack.c.l.b16 %v144
    %v858 = vunpack.c.h.b16 %v144
    %v859 = vunpack.c.l.b16 %v145
    %v860 = vunpack.c.h.b16 %v145
    %v861 = vunpack.c.l.b16 %v146
    %v862 = vunpack.c.h.b16 %v146
    %v863 = vunpack.c.l.b16 %v147
    %v864 = vunpack.c.h.b16 %v147
    %v865 = vunpack.c.l.b16 %v148
    %v866 = vunpack.c.h.b16 %v148
    %v867 = vunpack.c.l.b16 %v149
    %v868 = vunpack.c.h.b16 %v149
    %v869 = vunpack.c.l.b16 %v150
    %v870 = vunpack.c.h.b16 %v150
    %v871 = vunpack.c.l.b16 %v151
    %v872 = vunpack.c.h.b16 %v151
    %v873 = vunpack.c.l.b16 %v152
    %v874 = vunpack.c.h.b16 %v152
    %v875 = vunpack.c.l.b16 %v153
    %v876 = vunpack.c.h.b16 %v153
    %v877 = vunpack.c.l.b16 %v154
    %v878 = vunpack.c.h.b16 %v154
    %v879 = vunpack.c.l.b16 %v155
    %v880 = vunpack.c.h.b16 %v155
    %v881 = vunpack.c.l.b16 %v156
    %v882 = vunpack.c.h.b16 %v156
    %v883 = vunpack.c.l.b16 %v157
    %v884 = vunpack.c.h.b16 %v157
    %v885 = vunpack.c.l.b16 %v158
    %v886 = vunpack.c.h.b16 %v158
    %v887 = vunpack.c.l.b16 %v159
    %v888 = vunpack.c.h.b16 %v159
    %v889 = vunpack.c.l.b16 %v160
    %v890 = vunpack.c.h.b16 %v160
    %v891 = vunpack.c.l.b16 %v161
    %v892 = vunpack.c.h.b16 %v161
    %v893 = vunpack.c.l.b16 %v162
    %v894 = vunpack.c.h.b16 %v162
    %v895 = vunpack.c.l.b16 %v163
    %v896 = vunpack.c.h.b16 %v163
    %v897 = vunpack.c.l.b16 %v164
    %v898 = vunpack.c.h.b16 %v164
    %v899 = vunpack.c.l.b16 %v165
    %v900 = vunpack.c.h.b16 %v165
    %v901 = vunpack.c.l.b16 %v166
    %v902 = vunpack.c.h.b16 %v166
    %v903 = vunpack.c.l.b16 %v167
    %v904 = vunpack.c.h.b16 %v167
    %v905 = vunpack.c.l.b16 %v168
    %v906 = vunpack.c.h.b16 %v168
    %v907 = vunpack.c.l.b16 %v169
    %v908 = vunpack.c.h.b16 %v169
    %v909 = vunpack.c.l.b16 %v170
    %v910 = vunpack.c.h.b16 %v170
    %v911 = vunpack.c.l.b16 %v171
    %v912 = vunpack.c.h.b16 %v171
    %v913 = vunpack.c.l.b16 %v172
    %v914 = vunpack.c.h.b16 %v172
    %v915 = vunpack.c.l.b16 %v173
    %v916 = vunpack.c.h.b16 %v173
    %v917 = vunpack.c.l.b16 %v174
    %v918 = vunpack.c.h.b16 %v174
    %v919 = vunpack.c.l.b16 %v175
    %v920 = vunpack.c.h.b16 %v175
    %v921 = vunpack.c.l.b16 %v176
    %v922 = vunpack.c.h.b16 %v176
    %v923 = vunpack.c.l.b16 %v177
    %v924 = vunpack.c.h.b16 %v177
    %v925 = vunpack.c.l.b16 %v178
    %v926 = vunpack.c.h.b16 %v178
    %v927 = vunpack.c.l.b16 %v179
    %v928 = vunpack.c.h.b16 %v179
    %v929 = vunpack.c.l.b16 %v180
    %v930 = vunpack.c.h.b16 %v180
    %v931 = vunpack.c.l.b16 %v181
    %v932 = vunpack.c.h.b16 %v181
    %v933 = vunpack.c.l.b16 %v182
    %v934 = vunpack.c.h.b16 %v182
    %v935 = vunpack.c.l.b16 %v183
    %v936 = vunpack.c.h.b16 %v183
    %v937 = vunpack.c.l.b16 %v184
    %v938 = vunpack.c.h.b16 %v184
    %v939 = vunpack.c.l.b16 %v185
    %v940 = vunpack.c.h.b16 %v185
    %v941 = vunpack.c.l.b16 %v186
    %v942 = vunpack.c.h.b16 %v186
    %v943 = vunpack.c.l.b16 %v187
    %v944 = vunpack.c.h.b16 %v187
    %v945 = vunpack.c.l.b16 %v188
    %v946 = vunpack.c.h.b16 %v188
    %v947 = vunpack.c.l.b16 %v189
    %v948 = vunpack.c.h.b16 %v189
    %v949 = vunpack.c.l.b16 %v190
    %v950 = vunpack.c.h.b16 %v190
    %v951 = vunpack.c.l.b16 %v191
    %v952 = vunpack.c.h.b16 %v191
    %v953 = vunpack.c.l.b16 %v192
    %v954 = vunpack.c.h.b16 %v192
    %v955 = vunpack.c.l.b16 %v193
    %v956 = vunpack.c.h.b16 %v193
    %v957 = vunpack.c.l.b16 %v194
    %v958 = vunpack.c.h.b16 %v194
    %v959 = vunpack.c.l.b16 %v195
    %v960 = vunpack.c.h.b16 %v195
    %v961 = vunpack.c.l.b16 %v196
    %v962 = vunpack.c.h.b16 %v196
    %v963 = vunpack.c.l.b16 %v197
    %v964 = vunpack.c.h.b16 %v197
    %v965 = vunpack.c.l.b16 %v198
    %v966 = vunpack.c.h.b16 %v198
    %v967 = vunpack.c.l.b16 %v199
    %v968 = vunpack.c.h.b16 %v199
    %v969 = vunpack.c.l.b16 %v200
    %v970 = vunpack.c.h.b16 %v200
    %v971 = vunpack.c.l.b16 %v201
    %v972 = vunpack.c.h.b16 %v201
    %v973 = vunpack.c.l.b16 %v202
    %v974 = vunpack.c.h.b16 %v202
    %v975 = vunpack.c.l.b16 %v203
    %v976 = vunpack.c.h.b16 %v203
    %v977 = vunpack.c.l.b16 %v204
    %v978 = vunpack.c.h.b16 %v204
    %v979 = vunpack.c.l.b16 %v205
    %v980 = vunpack.c.h.b16 %v205
    %v981 = vunpack.c.l.b16 %v206
    %v982 = vunpack.c.h.b16 %v206
    %v983 = vunpack.c.l.b16 %v207
    %v984 = vunpack.c.h.b16 %v207
    %v985 = vunpack.c.l.b16 %v208
    %v986 = vunpack.c.h.b16 %v208
    %v987 = vunpack.c.l.b16 %v209
    %v988 = vunpack.c.h.b16 %v209
    %v989 = vunpack.c.l.b16 %v210
    %v990 = vunpack.c.h.b16 %v210
    %v991 = vunpack.c.l.b16 %v211
    %v992 = vunpack.c.h.b16 %v211
    %v993 = vunpack.c.l.b16 %v212
    %v994 = vunpack.c.h.b16 %v212
    %v995 = vunpack.c.l.b16 %v213
    %v996 = vunpack.c.h.b16 %v213
    %v997 = vunpack.c.l.b16 %v214
    %v998 = vunpack.c.h.b16 %v214
    %v999 = vunpack.c.l.b16 %v215
    %v1000 = vunpack.c.h.b16 %v215
    %v1001 = vunpack.c.l.b16 %v216
    %v1002 = vunpack.c.h.b16 %v216
    %v1003 = vunpack.c.l.b16 %v217
    %v1004 = vunpack.c.h.b16 %v217
    %v1005 = vunpack.c.l.b16 %v218
    %v1006 = vunpack.c.h.b16 %v218
    %v1007 = vunpack.c.l.b16 %v219
    %v1008 = vunpack.c.h.b16 %v219
    %v1009 = vunpack.c.l.b16 %v220
    %v1010 = vunpack.c.h.b16 %v220
    %v1011 = vunpack.c.l.b16 %v221
    %v1012 = vunpack.c.h.b16 %v221
    %v1013 = vunpack.c.l.b16 %v222
    %v1014 = vunpack.c.h.b16 %v222
    %v1015 = vunpack.c.l.b16 %v223
    %v1016 = vunpack.c.h.b16 %v223
    %v1017 = vunpack.c.l.b16 %v224
    %v1018 = vunpack.c.h.b16 %v224
    %v1019 = vunpack.c.l.b16 %v225
    %v1020 = vunpack.c.h.b16 %v225
    %v1021 = vunpack.c.l.b16 %v226
    %v1022 = vunpack.c.h.b16 %v226
    %v1023 = vunpack.c.l.b16 %v227
    %v1024 = vunpack.c.h.b16 %v227
    %v1025 = vunpack.c.l.b16 %v228
    %v1026 = vunpack.c.h.b16 %v228
    %v1027 = vunpack.c.l.b16 %v229
    %v1028 = vunpack.c.h.b16 %v229
    %v1029 = vunpack.c.l.b16 %v230
    %v1030 = vunpack.c.h.b16 %v230
    %v1031 = vunpack.c.l.b16 %v231
    %v1032 = vunpack.c.h.b16 %v231
    %v1033 = vunpack.c.l.b16 %v232
    %v1034 = vunpack.c.h.b16 %v232
    %v1035 = vunpack.c.l.b16 %v233
    %v1036 = vunpack.c.h.b16 %v233
    %v1037 = vunpack.c.l.b16 %v234
    %v1038 = vunpack.c.h.b16 %v234
    %v1039 = vunpack.c.l.b16 %v235
    %v1040 = vunpack.c.h.b16 %v235
    %v1041 = vunpack.c.l.b16 %v236
    %v1042 = vunpack.c.h.b16 %v236
    %v1043 = vunpack.c.l.b16 %v237
    %v1044 = vunpack.c.h.b16 %v237
    %v1045 = vunpack.c.l.b16 %v238
    %v1046 = vunpack.c.h.b16 %v238
    %v1047 = vunpack.c.l.b16 %v239
    %v1048 = vunpack.c.h.b16 %v239
    %v1049 = vunpack.c.l.b16 %v240
    %v1050 = vunpack.c.h.b16 %v240
    %v1051 = vunpack.c.l.b16 %v241
    %v1052 = vunpack.c.h.b16 %v241
    %v1053 = vunpack.c.l.b16 %v242
    %v1054 = vunpack.c.h.b16 %v242
    %v1055 = vunpack.c.l.b16 %v243
    %v1056 = vunpack.c.h.b16 %v243
    %v1057 = vunpack.c.l.b16 %v244
    %v1058 = vunpack.c.h.b16 %v244
    %v1059 = vunpack.c.l.b16 %v245
    %v1060 = vunpack.c.h.b16 %v245
    %v1061 = vunpack.c.l.b16 %v246
    %v1062 = vunpack.c.h.b16 %v246
    %v1063 = vunpack.c.l.b16 %v247
    %v1064 = vunpack.c.h.b16 %v247
    %v1065 = vunpack.c.l.b16 %v248
    %v1066 = vunpack.c.h.b16 %v248
    %v1067 = vunpack.c.l.b16 %v249
    %v1068 = vunpack.c.h.b16 %v249
    %v1069 = vunpack.c.l.b16 %v250
    %v1070 = vunpack.c.h.b16 %v250
    %v1071 = vunpack.c.l.b16 %v251
    %v1072 = vunpack.c.h.b16 %v251
    %v1073 = vunpack.c.l.b16 %v252
    %v1074 = vunpack.c.h.b16 %v252
    %v1075 = vunpack.c.l.b16 %v253
    %v1076 = vunpack.c.h.b16 %v253
    %v1077 = vunpack.c.l.b16 %v254
    %v1078 = vunpack.c.h.b16 %v254
    %v1079 = vunpack.c.l.b16 %v255
    %v1080 = vunpack.c.h.b16 %v255
    %v1081 = vunpack.c.l.b16 %v256
    %v1082 = vunpack.c.h.b16 %v256
    %v1083 = vunpack.c.l.b16 %v257
    %v1084 = vunpack.c.h.b16 %v257
    %v1085 = vunpack.c.l.b16 %v258
    %v1086 = vunpack.c.h.b16 %v258
    %v1087 = vunpack.c.l.b16 %v259
    %v1088 = vunpack.c.h.b16 %v259
    %v1089 = vunpack.c.l.b16 %v260
    %v1090 = vunpack.c.h.b16 %v260
    %v1091 = vunpack.c.l.b16 %v261
    %v1092 = vunpack.c.h.b16 %v261
    %v1093 = vunpack.c.l.b16 %v262
    %v1094 = vunpack.c.h.b16 %v262
    %v1095 = vunpack.c.l.b16 %v263
    %v1096 = vunpack.c.h.b16 %v263
    %v1097 = vunpack.c.l.b16 %v264
    %v1098 = vunpack.c.h.b16 %v264
    %v1099 = vunpack.c.l.b16 %v265
    %v1100 = vunpack.c.h.b16 %v265
    %v1101 = vunpack.c.l.b16 %v266
    %v1102 = vunpack.c.h.b16 %v266
    %v1103 = vunpack.c.l.b16 %v267
    %v1104 = vunpack.c.h.b16 %v267
    %v1105 = vunpack.c.l.b16 %v268
    %v1106 = vunpack.c.h.b16 %v268
    %v1107 = vunpack.c.l.b16 %v269
    %v1108 = vunpack.c.h.b16 %v269
    %v1109 = vunpack.c.l.b16 %v270
    %v1110 = vunpack.c.h.b16 %v270
    %v1111 = vunpack.c.l.b16 %v271
    %v1112 = vunpack.c.h.b16 %v271
    %v1113 = vunpack.c.l.b16 %v272
    %v1114 = vunpack.c.h.b16 %v272
    %v1115 = vunpack.c.l.b16 %v273
    %v1116 = vunpack.c.h.b16 %v273
    %v1117 = vunpack.c.l.b16 %v274
    %v1118 = vunpack.c.h.b16 %v274
    %v1119 = vunpack.c.l.b16 %v275
    %v1120 = vunpack.c.h.b16 %v275
    %v1121 = vunpack.c.l.b16 %v276
    %v1122 = vunpack.c.h.b16 %v276
    %v1123 = vunpack.c.l.b16 %v277
    %v1124 = vunpack.c.h.b16 %v277
    %v1125 = vunpack.c.l.b16 %v278
    %v1126 = vunpack.c.h.b16 %v278
    %v1127 = vpack.c.b16 %v619, %v615
    %v1128 = vpack.c.b16 %v620, %v616
    %v1129 = vpack.c.b16 %v621, %v617
    %v1130 = vpack.c.b16 %v622, %v618
    %v1131 = vpack.c.b16 %v627, %v623
    %v1132 = vpack.c.b16 %v628, %v624
    %v1133 = vpack.c.b16 %v629, %v625
    %v1134 = vpack.c.b16 %v630, %v626
    %v1135 = vpack.c.b16 %v635, %v631
    %v1136 = vpack.c.b16 %v636, %v632
    %v1137 = vpack.c.b16 %v637, %v633
    %v1138 = vpack.c.b16 %v638, %v634
    %v1139 = vpack.c.b16 %v643, %v639
    %v1140 = vpack.c.b16 %v644, %v640
    %v1141 = vpack.c.b16 %v645, %v641
    %v1142 = vpack.c.b16 %v646, %v642
    %v1143 = vpack.c.b16 %v651, %v647
    %v1144 = vpack.c.b16 %v652, %v648
    %v1145 = vpack.c.b16 %v653, %v649
    %v1146 = vpack.c.b16 %v654, %v650
    %v1147 = vpack.c.b16 %v659, %v655
    %v1148 = vpack.c.b16 %v660, %v656
    %v1149 = vpack.c.b16 %v661, %v657
    %v1150 = vpack.c.b16 %v662, %v658
    %v1151 = vpack.c.b16 %v667, %v663
    %v1152 = vpack.c.b16 %v668, %v664
    %v1153 = vpack.c.b16 %v669, %v665
    %v1154 = vpack.c.b16 %v670, %v666
    %v1155 = vpack.c.b16 %v675, %v671
    %v1156 = vpack.c.b16 %v676, %v672
    %v1157 = vpack.c.b16 %v677, %v673
    %v1158 = vpack.c.b16 %v678, %v674
    %v1159 = vpack.c.b16 %v683, %v679
    %v1160 = vpack.c.b16 %v684, %v680
    %v1161 = vpack.c.b16 %v685, %v681
    %v1162 = vpack.c.b16 %v686, %v682
    %v1163 = vpack.c.b16 %v691, %v687
    %v1164 = vpack.c.b16 %v692, %v688
    %v1165 = vpack.c.b16 %v693, %v689
    %v1166 = vpack.c.b16 %v694, %v690
    %v1167 = vpack.c.b16 %v699, %v695
    %v1168 = vpack.c.b16 %v700, %v696
    %v1169 = vpack.c.b16 %v701, %v697
    %v1170 = vpack.c.b16 %v702, %v698
    %v1171 = vpack.c.b16 %v707, %v703
    %v1172 = vpack.c.b16 %v708, %v704
    %v1173 = vpack.c.b16 %v709, %v705
    %v1174 = vpack.c.b16 %v710, %v706
    %v1175 = vpack.c.b16 %v715, %v711
    %v1176 = vpack.c.b16 %v716, %v712
    %v1177 = vpack.c.b16 %v717, %v713
    %v1178 = vpack.c.b16 %v718, %v714
    %v1179 = vpack.c.b16 %v723, %v719
    %v1180 = vpack.c.b16 %v724, %v720
    %v1181 = vpack.c.b16 %v725, %v721
    %v1182 = vpack.c.b16 %v726, %v722
    %v1183 = vpack.c.b16 %v731, %v727
    %v1184 = vpack.c.b16 %v732, %v728
    %v1185 = vpack.c.b16 %v733, %v729
    %v1186 = vpack.c.b16 %v734, %v730
    %v1187 = vpack.c.b16 %v739, %v735
    %v1188 = vpack.c.b16 %v740, %v736
    %v1189 = vpack.c.b16 %v741, %v737
    %v1190 = vpack.c.b16 %v742, %v738
    %v1191 = vpack.c.b16 %v747, %v743
    %v1192 = vpack.c.b16 %v748, %v744
    %v1193 = vpack.c.b16 %v749, %v745
    %v1194 = vpack.c.b16 %v750, %v746
    %v1195 = vpack.c.b16 %v755, %v751
    %v1196 = vpack.c.b16 %v756, %v752
    %v1197 = vpack.c.b16 %v757, %v753
    %v1198 = vpack.c.b16 %v758, %v754
    %v1199 = vpack.c.b16 %v763, %v759
    %v1200 = vpack.c.b16 %v764, %v760
    %v1201 = vpack.c.b16 %v765, %v761
    %v1202 = vpack.c.b16 %v766, %v762
    %v1203 = vpack.c.b16 %v771, %v767
    %v1204 = vpack.c.b16 %v772, %v768
    %v1205 = vpack.c.b16 %v773, %v769
    %v1206 = vpack.c.b16 %v774, %v770
    %v1207 = vpack.c.b16 %v779, %v775
    %v1208 = vpack.c.b16 %v780, %v776
    %v1209 = vpack.c.b16 %v781, %v777
    %v1210 = vpack.c.b16 %v782, %v778
    %v1211 = vpack.c.b16 %v787, %v783
    %v1212 = vpack.c.b16 %v788, %v784
    %v1213 = vpack.c.b16 %v789, %v785
    %v1214 = vpack.c.b16 %v790, %v786
    %v1215 = vpack.c.b16 %v795, %v791
    %v1216 = vpack.c.b16 %v796, %v792
    %v1217 = vpack.c.b16 %v797, %v793
    %v1218 = vpack.c.b16 %v798, %v794
    %v1219 = vpack.c.b16 %v803, %v799
    %v1220 = vpack.c.b16 %v804, %v800
    %v1221 = vpack.c.b16 %v805, %v801
    %v1222 = vpack.c.b16 %v806, %v802
    %v1223 = vpack.c.b16 %v811, %v807
    %v1224 = vpack.c.b16 %v812, %v808
    %v1225 = vpack.c.b16 %v813, %v809
    %v1226 = vpack.c.b16 %v814, %v810
    %v1227 = vpack.c.b16 %v819, %v815
    %v1228 = vpack.c.b16 %v820, %v816
    %v1229 = vpack.c.b16 %v821, %v817
    %v1230 = vpack.c.b16 %v822, %v818
    %v1231 = vpack.c.b16 %v827, %v823
    %v1232 = vpack.c.b16 %v828, %v824
    %v1233 = vpack.c.b16 %v829, %v825
    %v1234 = vpack.c.b16 %v830, %v826
    %v1235 = vpack.c.b16 %v835, %v831
    %v1236 = vpack.c.b16 %v836, %v832
    %v1237 = vpack.c.b16 %v837, %v833
    %v1238 = vpack.c.b16 %v838, %v834
    %v1239 = vpack.c.b16 %v843, %v839
    %v1240 = vpack.c.b16 %v844, %v840
    %v1241 = vpack.c.b16 %v845, %v841
    %v1242 = vpack.c.b16 %v846, %v842
    %v1243 = vpack.c.b16 %v851, %v847
    %v1244 = vpack.c.b16 %v852, %v848
    %v1245 = vpack.c.b16 %v853, %v849
    %v1246 = vpack.c.b16 %v854, %v850
    %v1247 = vpack.c.b16 %v859, %v855
    %v1248 = vpack.c.b16 %v860, %v856
    %v1249 = vpack.c.b16 %v861, %v857
    %v1250 = vpack.c.b16 %v862, %v858
    %v1251 = vpack.c.b16 %v867, %v863
    %v1252 = vpack.c.b16 %v868, %v864
    %v1253 = vpack.c.b16 %v869, %v865
    %v1254 = vpack.c.b16 %v870, %v866
    %v1255 = vpack.c.b16 %v875, %v871
    %v1256 = vpack.c.b16 %v876, %v872
    %v1257 = vpack.c.b16 %v877, %v873
    %v1258 = vpack.c.b16 %v878, %v874
    %v1259 = vpack.c.b16 %v883, %v879
    %v1260 = vpack.c.b16 %v884, %v880
    %v1261 = vpack.c.b16 %v885, %v881
    %v1262 = vpack.c.b16 %v886, %v882
    %v1263 = vpack.c.b16 %v891, %v887
    %v1264 = vpack.c.b16 %v892, %v888
    %v1265 = vpack.c.b16 %v893, %v889
    %v1266 = vpack.c.b16 %v894, %v890
    %v1267 = vpack.c.b16 %v899, %v895
    %v1268 = vpack.c.b16 %v900, %v896
    %v1269 = vpack.c.b16 %v901, %v897
    %v1270 = vpack.c.b16 %v902, %v898
    %v1271 = vpack.c.b16 %v907, %v903
    %v1272 = vpack.c.b16 %v908, %v904
    %v1273 = vpack.c.b16 %v909, %v905
    %v1274 = vpack.c.b16 %v910, %v906
    %v1275 = vpack.c.b16 %v915, %v911
    %v1276 = vpack.c.b16 %v916, %v912
    %v1277 = vpack.c.b16 %v917, %v913
    %v1278 = vpack.c.b16 %v918, %v914
    %v1279 = vpack.c.b16 %v923, %v919
    %v1280 = vpack.c.b16 %v924, %v920
    %v1281 = vpack.c.b16 %v925, %v921
    %v1282 = vpack.c.b16 %v926, %v922
    %v1283 = vpack.c.b16 %v931, %v927
    %v1284 = vpack.c.b16 %v932, %v928
    %v1285 = vpack.c.b16 %v933, %v929
    %v1286 = vpack.c.b16 %v934, %v930
    %v1287 = vpack.c.b16 %v939, %v935
    %v1288 = vpack.c.b16 %v940, %v936
    %v1289 = vpack.c.b16 %v941, %v937
    %v1290 = vpack.c.b16 %v942, %v938
    %v1291 = vpack.c.b16 %v947, %v943
    %v1292 = vpack.c.b16 %v948, %v944
    %v1293 = vpack.c.b16 %v949, %v945
    %v1294 = vpack.c.b16 %v950, %v946
    %v1295 = vpack.c.b16 %v955, %v951
    %v1296 = vpack.c.b16 %v956, %v952
    %v1297 = vpack.c.b16 %v957, %v953
    %v1298 = vpack.c.b16 %v958, %v954
    %v1299 = vpack.c.b16 %v963, %v959
    %v1300 = vpack.c.b16 %v964, %v960
    %v1301 = vpack.c.b16 %v965, %v961
    %v1302 = vpack.c.b16 %v966, %v962
    %v1303 = vpack.c.b16 %v971, %v967
    %v1304 = vpack.c.b16 %v972, %v968
    %v1305 = vpack.c.b16 %v973, %v969
    %v1306 = vpack.c.b16 %v974, %v970
    %v1307 = vpack.c.b16 %v979, %v975
    %v1308 = vpack.c.b16 %v980, %v976
    %v1309 = vpack.c.b16 %v981, %v977
    %v1310 = vpack.c.b16 %v982, %v978
    %v1311 = vpack.c.b16 %v987, %v983
    %v1312 = vpack.c.b16 %v988, %v984
    %v1313 = vpack.c.b16 %v989, %v985
    %v1314 = vpack.c.b16 %v990, %v986
    %v1315 = vpack.c.b16 %v995, %v991
    %v1316 = vpack.c.b16 %v996, %v992
    %v1317 = vpack.c.b16 %v997, %v993
    %v1318 = vpack.c.b16 %v998, %v994
    %v1319 = vpack.c.b16 %v1003, %v999
    %v1320 = vpack.c.b16 %v1004, %v1000
    %v1321 = vpack.c.b16 %v1005, %v1001
    %v1322 = vpack.c.b16 %v1006, %v1002
    %v1323 = vpack.c.b16 %v1011, %v1007
    %v1324 = vpack.c.b16 %v1012, %v1008
    %v1325 = vpack.c.b16 %v1013, %v1009
    %v1326 = vpack.c.b16 %v1014, %v1010
    %v1327 = vpack.c.b16 %v1019, %v1015
    %v1328 = vpack.c.b16 %v1020, %v1016
    %v1329 = vpack.c.b16 %v1021, %v1017
    %v1330 = vpack.c.b16 %v1022, %v1018
    %v1331 = vpack.c.b16 %v1027, %v1023
    %v1332 = vpack.c.b16 %v1028, %v1024
    %v1333 = vpack.c.b16 %v1029, %v1025
    %v1334 = vpack.c.b16 %v1030, %v1026
    %v1335 = vpack.c.b16 %v1035, %v1031
    %v1336 = vpack.c.b16 %v1036, %v1032
    %v1337 = vpack.c.b16 %v1037, %v1033
    %v1338 = vpack.c.b16 %v1038, %v1034
    %v1339 = vpack.c.b16 %v1043, %v1039
    %v1340 = vpack.c.b16 %v1044, %v1040
    %v1341 = vpack.c.b16 %v1045, %v1041
    %v1342 = vpack.c.b16 %v1046, %v1042
    %v1343 = vpack.c.b16 %v1051, %v1047
    %v1344 = vpack.c.b16 %v1052, %v1048
    %v1345 = vpack.c.b16 %v1053, %v1049
    %v1346 = vpack.c.b16 %v1054, %v1050
    %v1347 = vpack.c.b16 %v1059, %v1055
    %v1348 = vpack.c.b16 %v1060, %v1056
    %v1349 = vpack.c.b16 %v1061, %v1057
    %v1350 = vpack.c.b16 %v1062, %v1058
    %v1351 = vpack.c.b16 %v1067, %v1063
    %v1352 = vpack.c.b16 %v1068, %v1064
    %v1353 = vpack.c.b16 %v1069, %v1065
    %v1354 = vpack.c.b16 %v1070, %v1066
    %v1355 = vpack.c.b16 %v1075, %v1071
    %v1356 = vpack.c.b16 %v1076, %v1072
    %v1357 = vpack.c.b16 %v1077, %v1073
    %v1358 = vpack.c.b16 %v1078, %v1074
    %v1359 = vpack.c.b16 %v1083, %v1079
    %v1360 = vpack.c.b16 %v1084, %v1080
    %v1361 = vpack.c.b16 %v1085, %v1081
    %v1362 = vpack.c.b16 %v1086, %v1082
    %v1363 = vpack.c.b16 %v1091, %v1087
    %v1364 = vpack.c.b16 %v1092, %v1088
    %v1365 = vpack.c.b16 %v1093, %v1089
    %v1366 = vpack.c.b16 %v1094, %v1090
    %v1367 = vpack.c.b16 %v1099, %v1095
    %v1368 = vpack.c.b16 %v1100, %v1096
    %v1369 = vpack.c.b16 %v1101, %v1097
    %v1370 = vpack.c.b16 %v1102, %v1098
    %v1371 = vpack.c.b16 %v1107, %v1103
    %v1372 = vpack.c.b16 %v1108, %v1104
    %v1373 = vpack.c.b16 %v1109, %v1105
    %v1374 = vpack.c.b16 %v1110, %v1106
    %v1375 = vpack.c.b16 %v1115, %v1111
    %v1376 = vpack.c.b16 %v1116, %v1112
    %v1377 = vpack.c.b16 %v1117, %v1113
    %v1378 = vpack.c.b16 %v1118, %v1114
    %v1379 = vpack.c.b16 %v1123, %v1119
    %v1380 = vpack.c.b16 %v1124, %v1120
    %v1381 = vpack.c.b16 %v1125, %v1121
    %v1382 = vpack.c.b16 %v1126, %v1122
    %1639 = vmatprep.subr.bf16.mxu0 %v1156
    %1640 = vmatpush1.bf16.msra.mxu0 %v1155
    %1641 = vmatprep.subr.bf16.mxu0 %v1152
    %1642 = vmatpush1.bf16.msra.mxu0 %v1151
    %1643 = vmatprep.subr.bf16.mxu0 %v1148
    %1644 = vmatpush1.bf16.msra.mxu0 %v1147
    %1645 = vmatprep.subr.bf16.mxu0 %v1144
    %1646 = vmatpush1.bf16.msra.mxu0 %v1143
    %1647 = vmatprep.subr.bf16.mxu0 %v1140
    %1648 = vmatpush1.bf16.msra.mxu0 %v1139
    %1649 = vmatprep.subr.bf16.mxu0 %v1136
    %1650 = vmatpush1.bf16.msra.mxu0 %v1135
    %1651 = vmatprep.subr.bf16.mxu0 %v1132
    %1652 = vmatpush1.bf16.msra.mxu0 %v1131
    %1653 = vmatprep.subr.bf16.mxu0 %v1128
    %1654 = vmatpush1.bf16.msra.mxu0 %v1127
    %1655 = vmatprep.subr.bf16.mxu0 %v1188
    %1656 = vmatpush2.bf16.msra.mxu0 %v1187
    %1657 = vmatprep.subr.bf16.mxu0 %v1184
    %1658 = vmatpush2.bf16.msra.mxu0 %v1183
    %1659 = vmatprep.subr.bf16.mxu0 %v1180
    %1660 = vmatpush2.bf16.msra.mxu0 %v1179
    %1661 = vmatprep.subr.bf16.mxu0 %v1176
    %1662 = vmatpush2.bf16.msra.mxu0 %v1175
    %1663 = vmatprep.subr.bf16.mxu0 %v1172
    %1664 = vmatpush2.bf16.msra.mxu0 %v1171
    %1665 = vmatprep.subr.bf16.mxu0 %v1168
    %1666 = vmatpush2.bf16.msra.mxu0 %v1167
    %1667 = vmatprep.subr.bf16.mxu0 %v1164
    %1668 = vmatpush2.bf16.msra.mxu0 %v1163
    %1669 = vmatprep.subr.bf16.mxu0 %v1160
    %1670 = vmatpush2.bf16.msra.mxu0 %v1159
    %1671 = vmatprep.mubr.bf16.mxu0 %v339
    %1672 = vmatmul.mubr.bf16.gmra.mxu0 %v325
    %v1673 = vpop.f32.mrf.mxu0
    %v1674 = vadd.f32 %v284, %v1673
    %v1675 = vpop.f32.mrf.mxu0
    %v1676 = vadd.f32 %v288, %v1675
    %v1677 = vpop.f32.mrf.mxu0
    %v1678 = vpop.f32.mrf.mxu0
    %1679 = vdwg.mxu0
    %1680 = vmatprep.subr.bf16.mxu0 %v1220
    %1681 = vmatpush1.bf16.msra.mxu0 %v1219
    %1682 = vmatprep.subr.bf16.mxu0 %v1216
    %1683 = vmatpush1.bf16.msra.mxu0 %v1215
    %1684 = vmatprep.subr.bf16.mxu0 %v1212
    %1685 = vmatpush1.bf16.msra.mxu0 %v1211
    %1686 = vmatprep.subr.bf16.mxu0 %v1208
    %1687 = vmatpush1.bf16.msra.mxu0 %v1207
    %1688 = vmatprep.subr.bf16.mxu0 %v1204
    %1689 = vmatpush1.bf16.msra.mxu0 %v1203
    %1690 = vmatprep.subr.bf16.mxu0 %v1200
    %1691 = vmatpush1.bf16.msra.mxu0 %v1199
    %1692 = vmatprep.subr.bf16.mxu0 %v1196
    %1693 = vmatpush1.bf16.msra.mxu0 %v1195
    %1694 = vmatprep.subr.bf16.mxu0 %v1192
    %1695 = vmatpush1.bf16.msra.mxu0 %v1191
    %1696 = vmatprep.subr.bf16.mxu0 %v1252
    %1697 = vmatpush2.bf16.msra.mxu0 %v1251
    %1698 = vmatprep.subr.bf16.mxu0 %v1248
    %1699 = vmatpush2.bf16.msra.mxu0 %v1247
    %1700 = vmatprep.subr.bf16.mxu0 %v1244
    %1701 = vmatpush2.bf16.msra.mxu0 %v1243
    %1702 = vmatprep.subr.bf16.mxu0 %v1240
    %1703 = vmatpush2.bf16.msra.mxu0 %v1239
    %1704 = vmatprep.subr.bf16.mxu0 %v1236
    %1705 = vmatpush2.bf16.msra.mxu0 %v1235
    %1706 = vmatprep.subr.bf16.mxu0 %v1232
    %1707 = vmatpush2.bf16.msra.mxu0 %v1231
    %1708 = vmatprep.subr.bf16.mxu0 %v1228
    %1709 = vmatpush2.bf16.msra.mxu0 %v1227
    %1710 = vmatprep.subr.bf16.mxu0 %v1224
    %1711 = vmatpush2.bf16.msra.mxu0 %v1223
    %1712 = vmatprep.mubr.bf16.mxu0 %v349
    %1713 = vmatmul.mubr.bf16.gmra.mxu0 %v347
    %v1714 = vpop.f32.mrf.mxu0
    %v1715 = vadd.f32 %v1674, %v1714
    %v1716 = vpop.f32.mrf.mxu0
    %v1717 = vadd.f32 %v1676, %v1716
    %v1718 = vpop.f32.mrf.mxu0
    %v1719 = vpop.f32.mrf.mxu0
    %1720 = vdwg.mxu0
    %1721 = vmatprep.subr.bf16.mxu0 %v1284
    %1722 = vmatpush1.bf16.msra.mxu0 %v1283
    %1723 = vmatprep.subr.bf16.mxu0 %v1280
    %1724 = vmatpush1.bf16.msra.mxu0 %v1279
    %1725 = vmatprep.subr.bf16.mxu0 %v1276
    %1726 = vmatpush1.bf16.msra.mxu0 %v1275
    %1727 = vmatprep.subr.bf16.mxu0 %v1272
    %1728 = vmatpush1.bf16.msra.mxu0 %v1271
    %1729 = vmatprep.subr.bf16.mxu0 %v1268
    %1730 = vmatpush1.bf16.msra.mxu0 %v1267
    %1731 = vmatprep.subr.bf16.mxu0 %v1264
    %1732 = vmatpush1.bf16.msra.mxu0 %v1263
    %1733 = vmatprep.subr.bf16.mxu0 %v1260
    %1734 = vmatpush1.bf16.msra.mxu0 %v1259
    %1735 = vmatprep.subr.bf16.mxu0 %v1256
    %1736 = vmatpush1.bf16.msra.mxu0 %v1255
    %1737 = vmatprep.subr.bf16.mxu0 %v1316
    %1738 = vmatpush2.bf16.msra.mxu0 %v1315
    %1739 = vmatprep.subr.bf16.mxu0 %v1312
    %1740 = vmatpush2.bf16.msra.mxu0 %v1311
    %1741 = vmatprep.subr.bf16.mxu0 %v1308
    %1742 = vmatpush2.bf16.msra.mxu0 %v1307
    %1743 = vmatprep.subr.bf16.mxu0 %v1304
    %1744 = vmatpush2.bf16.msra.mxu0 %v1303
    %1745 = vmatprep.subr.bf16.mxu0 %v1300
    %1746 = vmatpush2.bf16.msra.mxu0 %v1299
    %1747 = vmatprep.subr.bf16.mxu0 %v1296
    %1748 = vmatpush2.bf16.msra.mxu0 %v1295
    %1749 = vmatprep.subr.bf16.mxu0 %v1292
    %1750 = vmatpush2.bf16.msra.mxu0 %v1291
    %1751 = vmatprep.subr.bf16.mxu0 %v1288
    %1752 = vmatpush2.bf16.msra.mxu0 %v1287
    %1753 = vmatprep.mubr.bf16.mxu0 %v346
    %1754 = vmatmul.mubr.bf16.gmra.mxu0 %v332
    %v1755 = vpop.f32.mrf.mxu0
    %v1756 = vadd.f32 %v1715, %v1755
    %v1757 = vpop.f32.mrf.mxu0
    %v1758 = vadd.f32 %v1717, %v1757
    %v1759 = vpop.f32.mrf.mxu0
    %v1760 = vpop.f32.mrf.mxu0
    %1761 = vdwg.mxu0
    %1762 = vmatprep.subr.bf16.mxu0 %v1348
    %1763 = vmatpush1.bf16.msra.mxu0 %v1347
    %1764 = vmatprep.subr.bf16.mxu0 %v1344
    %1765 = vmatpush1.bf16.msra.mxu0 %v1343
    %1766 = vmatprep.subr.bf16.mxu0 %v1340
    %1767 = vmatpush1.bf16.msra.mxu0 %v1339
    %1768 = vmatprep.subr.bf16.mxu0 %v1336
    %1769 = vmatpush1.bf16.msra.mxu0 %v1335
    %1770 = vmatprep.subr.bf16.mxu0 %v1332
    %1771 = vmatpush1.bf16.msra.mxu0 %v1331
    %1772 = vmatprep.subr.bf16.mxu0 %v1328
    %1773 = vmatpush1.bf16.msra.mxu0 %v1327
    %1774 = vmatprep.subr.bf16.mxu0 %v1324
    %1775 = vmatpush1.bf16.msra.mxu0 %v1323
    %1776 = vmatprep.subr.bf16.mxu0 %v1320
    %1777 = vmatpush1.bf16.msra.mxu0 %v1319
    %1778 = vmatprep.subr.bf16.mxu0 %v1380
    %1779 = vmatpush2.bf16.msra.mxu0 %v1379
    %1780 = vmatprep.subr.bf16.mxu0 %v1376
    %1781 = vmatpush2.bf16.msra.mxu0 %v1375
    %1782 = vmatprep.subr.bf16.mxu0 %v1372
    %1783 = vmatpush2.bf16.msra.mxu0 %v1371
    %1784 = vmatprep.subr.bf16.mxu0 %v1368
    %1785 = vmatpush2.bf16.msra.mxu0 %v1367
    %1786 = vmatprep.subr.bf16.mxu0 %v1364
    %1787 = vmatpush2.bf16.msra.mxu0 %v1363
    %1788 = vmatprep.subr.bf16.mxu0 %v1360
    %1789 = vmatpush2.bf16.msra.mxu0 %v1359
    %1790 = vmatprep.subr.bf16.mxu0 %v1356
    %1791 = vmatpush2.bf16.msra.mxu0 %v1355
    %1792 = vmatprep.subr.bf16.mxu0 %v1352
    %1793 = vmatpush2.bf16.msra.mxu0 %v1351
    %1794 = vmatprep.mubr.bf16.mxu0 %v350
    %1795 = vmatmul.mubr.bf16.gmra.mxu0 %v348
    %v1796 = vpop.f32.mrf.mxu0
    %v1797 = vadd.f32 %v1756, %v1796
    %v1798 = vpop.f32.mrf.mxu0
    %v1799 = vadd.f32 %v1758, %v1798
    %v1800 = vpop.f32.mrf.mxu0
    %v1801 = vpop.f32.mrf.mxu0
    %1802 = vdwg.mxu0
    %1803 = vmatprep.subr.bf16.mxu0 %v1158
    %1804 = vmatpush1.bf16.msra.mxu0 %v1157
    %1805 = vmatprep.subr.bf16.mxu0 %v1154
    %1806 = vmatpush1.bf16.msra.mxu0 %v1153
    %1807 = vmatprep.subr.bf16.mxu0 %v1150
    %1808 = vmatpush1.bf16.msra.mxu0 %v1149
    %1809 = vmatprep.subr.bf16.mxu0 %v1146
    %1810 = vmatpush1.bf16.msra.mxu0 %v1145
    %1811 = vmatprep.subr.bf16.mxu0 %v1142
    %1812 = vmatpush1.bf16.msra.mxu0 %v1141
    %1813 = vmatprep.subr.bf16.mxu0 %v1138
    %1814 = vmatpush1.bf16.msra.mxu0 %v1137
    %1815 = vmatprep.subr.bf16.mxu0 %v1134
    %1816 = vmatpush1.bf16.msra.mxu0 %v1133
    %1817 = vmatprep.subr.bf16.mxu0 %v1130
    %1818 = vmatpush1.bf16.msra.mxu0 %v1129
    %1819 = vmatprep.subr.bf16.mxu0 %v1190
    %1820 = vmatpush2.bf16.msra.mxu0 %v1189
    %1821 = vmatprep.subr.bf16.mxu0 %v1186
    %1822 = vmatpush2.bf16.msra.mxu0 %v1185
    %1823 = vmatprep.subr.bf16.mxu0 %v1182
    %1824 = vmatpush2.bf16.msra.mxu0 %v1181
    %1825 = vmatprep.subr.bf16.mxu0 %v1178
    %1826 = vmatpush2.bf16.msra.mxu0 %v1177
    %1827 = vmatprep.subr.bf16.mxu0 %v1174
    %1828 = vmatpush2.bf16.msra.mxu0 %v1173
    %1829 = vmatprep.subr.bf16.mxu0 %v1170
    %1830 = vmatpush2.bf16.msra.mxu0 %v1169
    %1831 = vmatprep.subr.bf16.mxu0 %v1166
    %1832 = vmatpush2.bf16.msra.mxu0 %v1165
    %1833 = vmatprep.subr.bf16.mxu0 %v1162
    %1834 = vmatpush2.bf16.msra.mxu0 %v1161
    %1835 = vmatprep.mubr.bf16.mxu0 %v339
    %1836 = vmatmul.mubr.bf16.gmra.mxu0 %v325
    %v1837 = vpop.f32.mrf.mxu0
    %v1838 = vadd.f32 %v292, %v1837
    %v1839 = vpop.f32.mrf.mxu0
    %v1840 = vadd.f32 %v296, %v1839
    %v1841 = vpop.f32.mrf.mxu0
    %v1842 = vpop.f32.mrf.mxu0
    %1843 = vdwg.mxu0
    %1844 = vmatprep.subr.bf16.mxu0 %v1222
    %1845 = vmatpush1.bf16.msra.mxu0 %v1221
    %1846 = vmatprep.subr.bf16.mxu0 %v1218
    %1847 = vmatpush1.bf16.msra.mxu0 %v1217
    %1848 = vmatprep.subr.bf16.mxu0 %v1214
    %1849 = vmatpush1.bf16.msra.mxu0 %v1213
    %1850 = vmatprep.subr.bf16.mxu0 %v1210
    %1851 = vmatpush1.bf16.msra.mxu0 %v1209
    %1852 = vmatprep.subr.bf16.mxu0 %v1206
    %1853 = vmatpush1.bf16.msra.mxu0 %v1205
    %1854 = vmatprep.subr.bf16.mxu0 %v1202
    %1855 = vmatpush1.bf16.msra.mxu0 %v1201
    %1856 = vmatprep.subr.bf16.mxu0 %v1198
    %1857 = vmatpush1.bf16.msra.mxu0 %v1197
    %1858 = vmatprep.subr.bf16.mxu0 %v1194
    %1859 = vmatpush1.bf16.msra.mxu0 %v1193
    %1860 = vmatprep.subr.bf16.mxu0 %v1254
    %1861 = vmatpush2.bf16.msra.mxu0 %v1253
    %1862 = vmatprep.subr.bf16.mxu0 %v1250
    %1863 = vmatpush2.bf16.msra.mxu0 %v1249
    %1864 = vmatprep.subr.bf16.mxu0 %v1246
    %1865 = vmatpush2.bf16.msra.mxu0 %v1245
    %1866 = vmatprep.subr.bf16.mxu0 %v1242
    %1867 = vmatpush2.bf16.msra.mxu0 %v1241
    %1868 = vmatprep.subr.bf16.mxu0 %v1238
    %1869 = vmatpush2.bf16.msra.mxu0 %v1237
    %1870 = vmatprep.subr.bf16.mxu0 %v1234
    %1871 = vmatpush2.bf16.msra.mxu0 %v1233
    %1872 = vmatprep.subr.bf16.mxu0 %v1230
    %1873 = vmatpush2.bf16.msra.mxu0 %v1229
    %1874 = vmatprep.subr.bf16.mxu0 %v1226
    %1875 = vmatpush2.bf16.msra.mxu0 %v1225
    %1876 = vmatprep.mubr.bf16.mxu0 %v349
    %1877 = vmatmul.mubr.bf16.gmra.mxu0 %v347
    %v1878 = vpop.f32.mrf.mxu0
    %v1879 = vadd.f32 %v1838, %v1878
    %v1880 = vpop.f32.mrf.mxu0
    %v1881 = vadd.f32 %v1840, %v1880
    %v1882 = vpop.f32.mrf.mxu0
    %v1883 = vpop.f32.mrf.mxu0
    %1884 = vdwg.mxu0
    %1885 = vmatprep.subr.bf16.mxu0 %v1286
    %1886 = vmatpush1.bf16.msra.mxu0 %v1285
    %1887 = vmatprep.subr.bf16.mxu0 %v1282
    %1888 = vmatpush1.bf16.msra.mxu0 %v1281
    %1889 = vmatprep.subr.bf16.mxu0 %v1278
    %1890 = vmatpush1.bf16.msra.mxu0 %v1277
    %1891 = vmatprep.subr.bf16.mxu0 %v1274
    %1892 = vmatpush1.bf16.msra.mxu0 %v1273
    %1893 = vmatprep.subr.bf16.mxu0 %v1270
    %1894 = vmatpush1.bf16.msra.mxu0 %v1269
    %1895 = vmatprep.subr.bf16.mxu0 %v1266
    %1896 = vmatpush1.bf16.msra.mxu0 %v1265
    %1897 = vmatprep.subr.bf16.mxu0 %v1262
    %1898 = vmatpush1.bf16.msra.mxu0 %v1261
    %1899 = vmatprep.subr.bf16.mxu0 %v1258
    %1900 = vmatpush1.bf16.msra.mxu0 %v1257
    %1901 = vmatprep.subr.bf16.mxu0 %v1318
    %1902 = vmatpush2.bf16.msra.mxu0 %v1317
    %1903 = vmatprep.subr.bf16.mxu0 %v1314
    %1904 = vmatpush2.bf16.msra.mxu0 %v1313
    %1905 = vmatprep.subr.bf16.mxu0 %v1310
    %1906 = vmatpush2.bf16.msra.mxu0 %v1309
    %1907 = vmatprep.subr.bf16.mxu0 %v1306
    %1908 = vmatpush2.bf16.msra.mxu0 %v1305
    %1909 = vmatprep.subr.bf16.mxu0 %v1302
    %1910 = vmatpush2.bf16.msra.mxu0 %v1301
    %1911 = vmatprep.subr.bf16.mxu0 %v1298
    %1912 = vmatpush2.bf16.msra.mxu0 %v1297
    %1913 = vmatprep.subr.bf16.mxu0 %v1294
    %1914 = vmatpush2.bf16.msra.mxu0 %v1293
    %1915 = vmatprep.subr.bf16.mxu0 %v1290
    %1916 = vmatpush2.bf16.msra.mxu0 %v1289
    %1917 = vmatprep.mubr.bf16.mxu0 %v346
    %1918 = vmatmul.mubr.bf16.gmra.mxu0 %v332
    %v1919 = vpop.f32.mrf.mxu0
    %v1920 = vadd.f32 %v1879, %v1919
    %v1921 = vpop.f32.mrf.mxu0
    %v1922 = vadd.f32 %v1881, %v1921
    %v1923 = vpop.f32.mrf.mxu0
    %v1924 = vpop.f32.mrf.mxu0
    %1925 = vdwg.mxu0
    %1926 = vmatprep.subr.bf16.mxu0 %v1350
    %1927 = vmatpush1.bf16.msra.mxu0 %v1349
    %1928 = vmatprep.subr.bf16.mxu0 %v1346
    %1929 = vmatpush1.bf16.msra.mxu0 %v1345
    %1930 = vmatprep.subr.bf16.mxu0 %v1342
    %1931 = vmatpush1.bf16.msra.mxu0 %v1341
    %1932 = vmatprep.subr.bf16.mxu0 %v1338
    %1933 = vmatpush1.bf16.msra.mxu0 %v1337
    %1934 = vmatprep.subr.bf16.mxu0 %v1334
    %1935 = vmatpush1.bf16.msra.mxu0 %v1333
    %1936 = vmatprep.subr.bf16.mxu0 %v1330
    %1937 = vmatpush1.bf16.msra.mxu0 %v1329
    %1938 = vmatprep.subr.bf16.mxu0 %v1326
    %1939 = vmatpush1.bf16.msra.mxu0 %v1325
    %1940 = vmatprep.subr.bf16.mxu0 %v1322
    %1941 = vmatpush1.bf16.msra.mxu0 %v1321
    %1942 = vmatprep.subr.bf16.mxu0 %v1382
    %1943 = vmatpush2.bf16.msra.mxu0 %v1381
    %1944 = vmatprep.subr.bf16.mxu0 %v1378
    %1945 = vmatpush2.bf16.msra.mxu0 %v1377
    %1946 = vmatprep.subr.bf16.mxu0 %v1374
    %1947 = vmatpush2.bf16.msra.mxu0 %v1373
    %1948 = vmatprep.subr.bf16.mxu0 %v1370
    %1949 = vmatpush2.bf16.msra.mxu0 %v1369
    %1950 = vmatprep.subr.bf16.mxu0 %v1366
    %1951 = vmatpush2.bf16.msra.mxu0 %v1365
    %1952 = vmatprep.subr.bf16.mxu0 %v1362
    %1953 = vmatpush2.bf16.msra.mxu0 %v1361
    %1954 = vmatprep.subr.bf16.mxu0 %v1358
    %1955 = vmatpush2.bf16.msra.mxu0 %v1357
    %1956 = vmatprep.subr.bf16.mxu0 %v1354
    %1957 = vmatpush2.bf16.msra.mxu0 %v1353
    %1958 = vmatprep.mubr.bf16.mxu0 %v350
    %1959 = vmatmul.mubr.bf16.gmra.mxu0 %v348
    %v1960 = vpop.f32.mrf.mxu0
    %v1961 = vadd.f32 %v1920, %v1960
    %v1962 = vpop.f32.mrf.mxu0
    %v1963 = vadd.f32 %v1922, %v1962
    %v1964 = vpop.f32.mrf.mxu0
    %v1965 = vpop.f32.mrf.mxu0
    %1966 = vdwg.mxu0
    %v1967 = vmax.f32 %v1797, 0.0
    %v1968 = vmax.f32 %v1799, 0.0
    %v1969 = vmax.f32 %v1961, 0.0
    %v1970 = vmax.f32 %v1963, 0.0
    %v1971 = vpack.c.bf16 %v1967, %v1967
    %v1972 = vpack.c.bf16 %v1968, %v1968
    %v1973 = vpack.c.bf16 %v1969, %v1969
    %v1974 = vpack.c.bf16 %v1970, %v1970
    %v1975 = vld [vmem:[%s3] sm:$0xf]
    %v1976 = vld [vmem:[%s3 + $0x4] sm:$0xf]
    %v1977 = vld [vmem:[%s3 + $0x8] sm:$0xf]
    %v1978 = vld [vmem:[%s3 + $0xc] sm:$0xf]
    %v1979 = vld [vmem:[%s3 + $0x10] sm:$0xf]
    %v1980 = vld [vmem:[%s3 + $0x14] sm:$0xf]
    %v1981 = vld [vmem:[%s3 + $0x18] sm:$0xf]
    %v1982 = vld [vmem:[%s3 + $0x1c] sm:$0xf]
    %v1983 = vld [vmem:[%s3 + $0x20] sm:$0xf]
    %v1984 = vld [vmem:[%s3 + $0x24] sm:$0xf]
    %v1985 = vld [vmem:[%s3 + $0x28] sm:$0xf]
    %v1986 = vld [vmem:[%s3 + $0x2c] sm:$0xf]
    %v1987 = vld [vmem:[%s3 + $0x30] sm:$0xf]
    %v1988 = vld [vmem:[%s3 + $0x34] sm:$0xf]
    %v1989 = vld [vmem:[%s3 + $0x38] sm:$0xf]
    %v1990 = vld [vmem:[%s3 + $0x3c] sm:$0xf]
    %v1991 = vld [vmem:[%s3 + $0x40] sm:$0xf]
    %v1992 = vld [vmem:[%s3 + $0x44] sm:$0xf]
    %v1993 = vld [vmem:[%s3 + $0x48] sm:$0xf]
    %v1994 = vld [vmem:[%s3 + $0x4c] sm:$0xf]
    %v1995 = vld [vmem:[%s3 + $0x50] sm:$0xf]
    %v1996 = vld [vmem:[%s3 + $0x54] sm:$0xf]
    %v1997 = vld [vmem:[%s3 + $0x58] sm:$0xf]
    %v1998 = vld [vmem:[%s3 + $0x5c] sm:$0xf]
    %v1999 = vld [vmem:[%s3 + $0x60] sm:$0xf]
    %v2000 = vld [vmem:[%s3 + $0x64] sm:$0xf]
    %v2001 = vld [vmem:[%s3 + $0x68] sm:$0xf]
    %v2002 = vld [vmem:[%s3 + $0x6c] sm:$0xf]
    %v2003 = vld [vmem:[%s3 + $0x70] sm:$0xf]
    %v2004 = vld [vmem:[%s3 + $0x74] sm:$0xf]
    %v2005 = vld [vmem:[%s3 + $0x78] sm:$0xf]
    %v2006 = vld [vmem:[%s3 + $0x7c] sm:$0xf]
    %v2007 = vld [vmem:[%s3 + $0x80] sm:$0xf]
    %v2008 = vld [vmem:[%s3 + $0x84] sm:$0xf]
    %v2009 = vld [vmem:[%s3 + $0x88] sm:$0xf]
    %v2010 = vld [vmem:[%s3 + $0x8c] sm:$0xf]
    %v2011 = vld [vmem:[%s3 + $0x90] sm:$0xf]
    %v2012 = vld [vmem:[%s3 + $0x94] sm:$0xf]
    %v2013 = vld [vmem:[%s3 + $0x98] sm:$0xf]
    %v2014 = vld [vmem:[%s3 + $0x9c] sm:$0xf]
    %v2015 = vld [vmem:[%s3 + $0xa0] sm:$0xf]
    %v2016 = vld [vmem:[%s3 + $0xa4] sm:$0xf]
    %v2017 = vld [vmem:[%s3 + $0xa8] sm:$0xf]
    %v2018 = vld [vmem:[%s3 + $0xac] sm:$0xf]
    %v2019 = vld [vmem:[%s3 + $0xb0] sm:$0xf]
    %v2020 = vld [vmem:[%s3 + $0xb4] sm:$0xf]
    %v2021 = vld [vmem:[%s3 + $0xb8] sm:$0xf]
    %v2022 = vld [vmem:[%s3 + $0xbc] sm:$0xf]
    %v2023 = vld [vmem:[%s3 + $0xc0] sm:$0xf]
    %v2024 = vld [vmem:[%s3 + $0xc4] sm:$0xf]
    %v2025 = vld [vmem:[%s3 + $0xc8] sm:$0xf]
    %v2026 = vld [vmem:[%s3 + $0xcc] sm:$0xf]
    %v2027 = vld [vmem:[%s3 + $0xd0] sm:$0xf]
    %v2028 = vld [vmem:[%s3 + $0xd4] sm:$0xf]
    %v2029 = vld [vmem:[%s3 + $0xd8] sm:$0xf]
    %v2030 = vld [vmem:[%s3 + $0xdc] sm:$0xf]
    %v2031 = vld [vmem:[%s3 + $0xe0] sm:$0xf]
    %v2032 = vld [vmem:[%s3 + $0xe4] sm:$0xf]
    %v2033 = vld [vmem:[%s3 + $0xe8] sm:$0xf]
    %v2034 = vld [vmem:[%s3 + $0xec] sm:$0xf]
    %v2035 = vld [vmem:[%s3 + $0xf0] sm:$0xf]
    %v2036 = vld [vmem:[%s3 + $0xf4] sm:$0xf]
    %v2037 = vld [vmem:[%s3 + $0xf8] sm:$0xf]
    %v2038 = vld [vmem:[%s3 + $0xfc] sm:$0xf]
    %v2039 = vld [vmem:[%s4] sm:$0x1]
    %v2041 = vlaneseq
    %v2042 = vshrl.u32 %v2041, 7
    %v2043 = vsub.s32 0, %v2042
    %v2044 = vrot.slane %v2039, %v2043
    %v2110 = vunpack.c.l.b16 %v1975
    %v2111 = vunpack.c.l.b16 %v1976
    %v2112 = vunpack.c.l.b16 %v1977
    %v2113 = vunpack.c.l.b16 %v1978
    %v2114 = vunpack.c.l.b16 %v1979
    %v2115 = vunpack.c.l.b16 %v1980
    %v2116 = vunpack.c.l.b16 %v1981
    %v2117 = vunpack.c.l.b16 %v1982
    %v2118 = vunpack.c.l.b16 %v1983
    %v2119 = vunpack.c.l.b16 %v1984
    %v2120 = vunpack.c.l.b16 %v1985
    %v2121 = vunpack.c.l.b16 %v1986
    %v2122 = vunpack.c.l.b16 %v1987
    %v2123 = vunpack.c.l.b16 %v1988
    %v2124 = vunpack.c.l.b16 %v1989
    %v2125 = vunpack.c.l.b16 %v1990
    %v2126 = vunpack.c.l.b16 %v1991
    %v2127 = vunpack.c.l.b16 %v1992
    %v2128 = vunpack.c.l.b16 %v1993
    %v2129 = vunpack.c.l.b16 %v1994
    %v2130 = vunpack.c.l.b16 %v1995
    %v2131 = vunpack.c.l.b16 %v1996
    %v2132 = vunpack.c.l.b16 %v1997
    %v2133 = vunpack.c.l.b16 %v1998
    %v2134 = vunpack.c.l.b16 %v1999
    %v2135 = vunpack.c.l.b16 %v2000
    %v2136 = vunpack.c.l.b16 %v2001
    %v2137 = vunpack.c.l.b16 %v2002
    %v2138 = vunpack.c.l.b16 %v2003
    %v2139 = vunpack.c.l.b16 %v2004
    %v2140 = vunpack.c.l.b16 %v2005
    %v2141 = vunpack.c.l.b16 %v2006
    %v2142 = vunpack.c.l.b16 %v2007
    %v2143 = vunpack.c.l.b16 %v2008
    %v2144 = vunpack.c.l.b16 %v2009
    %v2145 = vunpack.c.l.b16 %v2010
    %v2146 = vunpack.c.l.b16 %v2011
    %v2147 = vunpack.c.l.b16 %v2012
    %v2148 = vunpack.c.l.b16 %v2013
    %v2149 = vunpack.c.l.b16 %v2014
    %v2150 = vunpack.c.l.b16 %v2015
    %v2151 = vunpack.c.l.b16 %v2016
    %v2152 = vunpack.c.l.b16 %v2017
    %v2153 = vunpack.c.l.b16 %v2018
    %v2154 = vunpack.c.l.b16 %v2019
    %v2155 = vunpack.c.l.b16 %v2020
    %v2156 = vunpack.c.l.b16 %v2021
    %v2157 = vunpack.c.l.b16 %v2022
    %v2158 = vunpack.c.l.b16 %v2023
    %v2159 = vunpack.c.l.b16 %v2024
    %v2160 = vunpack.c.l.b16 %v2025
    %v2161 = vunpack.c.l.b16 %v2026
    %v2162 = vunpack.c.l.b16 %v2027
    %v2163 = vunpack.c.l.b16 %v2028
    %v2164 = vunpack.c.l.b16 %v2029
    %v2165 = vunpack.c.l.b16 %v2030
    %v2166 = vunpack.c.l.b16 %v2031
    %v2167 = vunpack.c.l.b16 %v2032
    %v2168 = vunpack.c.l.b16 %v2033
    %v2169 = vunpack.c.l.b16 %v2034
    %v2170 = vunpack.c.l.b16 %v2035
    %v2171 = vunpack.c.l.b16 %v2036
    %v2172 = vunpack.c.l.b16 %v2037
    %v2173 = vunpack.c.l.b16 %v2038
    %v2174 = vpack.c.b16 %v2111, %v2110
    %v2175 = vpack.c.b16 %v2113, %v2112
    %v2176 = vpack.c.b16 %v2115, %v2114
    %v2177 = vpack.c.b16 %v2117, %v2116
    %v2178 = vpack.c.b16 %v2119, %v2118
    %v2179 = vpack.c.b16 %v2121, %v2120
    %v2180 = vpack.c.b16 %v2123, %v2122
    %v2181 = vpack.c.b16 %v2125, %v2124
    %v2182 = vpack.c.b16 %v2127, %v2126
    %v2183 = vpack.c.b16 %v2129, %v2128
    %v2184 = vpack.c.b16 %v2131, %v2130
    %v2185 = vpack.c.b16 %v2133, %v2132
    %v2186 = vpack.c.b16 %v2135, %v2134
    %v2187 = vpack.c.b16 %v2137, %v2136
    %v2188 = vpack.c.b16 %v2139, %v2138
    %v2189 = vpack.c.b16 %v2141, %v2140
    %v2190 = vpack.c.b16 %v2143, %v2142
    %v2191 = vpack.c.b16 %v2145, %v2144
    %v2192 = vpack.c.b16 %v2147, %v2146
    %v2193 = vpack.c.b16 %v2149, %v2148
    %v2194 = vpack.c.b16 %v2151, %v2150
    %v2195 = vpack.c.b16 %v2153, %v2152
    %v2196 = vpack.c.b16 %v2155, %v2154
    %v2197 = vpack.c.b16 %v2157, %v2156
    %v2198 = vpack.c.b16 %v2159, %v2158
    %v2199 = vpack.c.b16 %v2161, %v2160
    %v2200 = vpack.c.b16 %v2163, %v2162
    %v2201 = vpack.c.b16 %v2165, %v2164
    %v2202 = vpack.c.b16 %v2167, %v2166
    %v2203 = vpack.c.b16 %v2169, %v2168
    %v2204 = vpack.c.b16 %v2171, %v2170
    %v2205 = vpack.c.b16 %v2173, %v2172
    %2238 = vmatprep.subr.bf16.mxu0 0
    %2239 = vmatpush1.bf16.msra.mxu0 %v2181
    %2240 = vmatprep.subr.bf16.mxu0 0
    %2241 = vmatpush1.bf16.msra.mxu0 %v2180
    %2242 = vmatprep.subr.bf16.mxu0 0
    %2243 = vmatpush1.bf16.msra.mxu0 %v2179
    %2244 = vmatprep.subr.bf16.mxu0 0
    %2245 = vmatpush1.bf16.msra.mxu0 %v2178
    %2246 = vmatprep.subr.bf16.mxu0 0
    %2247 = vmatpush1.bf16.msra.mxu0 %v2177
    %2248 = vmatprep.subr.bf16.mxu0 0
    %2249 = vmatpush1.bf16.msra.mxu0 %v2176
    %2250 = vmatprep.subr.bf16.mxu0 0
    %2251 = vmatpush1.bf16.msra.mxu0 %v2175
    %2252 = vmatprep.subr.bf16.mxu0 0
    %2253 = vmatpush1.bf16.msra.mxu0 %v2174
    %2254 = vmatprep.subr.bf16.mxu0 0
    %2255 = vmatpush2.bf16.msra.mxu0 %v2189
    %2256 = vmatprep.subr.bf16.mxu0 0
    %2257 = vmatpush2.bf16.msra.mxu0 %v2188
    %2258 = vmatprep.subr.bf16.mxu0 0
    %2259 = vmatpush2.bf16.msra.mxu0 %v2187
    %2260 = vmatprep.subr.bf16.mxu0 0
    %2261 = vmatpush2.bf16.msra.mxu0 %v2186
    %2262 = vmatprep.subr.bf16.mxu0 0
    %2263 = vmatpush2.bf16.msra.mxu0 %v2185
    %2264 = vmatprep.subr.bf16.mxu0 0
    %2265 = vmatpush2.bf16.msra.mxu0 %v2184
    %2266 = vmatprep.subr.bf16.mxu0 0
    %2267 = vmatpush2.bf16.msra.mxu0 %v2183
    %2268 = vmatprep.subr.bf16.mxu0 0
    %2269 = vmatpush2.bf16.msra.mxu0 %v2182
    %2270 = vmatprep.mubr.bf16.mxu0 %v1972
    %2271 = vmatmul.mubr.bf16.gmra.mxu0 %v1971
    %v2272 = vpop.f32.mrf.mxu0
    %v2273 = vadd.f32 %v2044, %v2272
    %v2274 = vpop.f32.mrf.mxu0
    %v2275 = vpop.f32.mrf.mxu0
    %v2276 = vpop.f32.mrf.mxu0
    %2277 = vdwg.mxu0
    %2278 = vmatprep.subr.bf16.mxu0 0
    %2279 = vmatpush1.bf16.msra.mxu0 %v2197
    %2280 = vmatprep.subr.bf16.mxu0 0
    %2281 = vmatpush1.bf16.msra.mxu0 %v2196
    %2282 = vmatprep.subr.bf16.mxu0 0
    %2283 = vmatpush1.bf16.msra.mxu0 %v2195
    %2284 = vmatprep.subr.bf16.mxu0 0
    %2285 = vmatpush1.bf16.msra.mxu0 %v2194
    %2286 = vmatprep.subr.bf16.mxu0 0
    %2287 = vmatpush1.bf16.msra.mxu0 %v2193
    %2288 = vmatprep.subr.bf16.mxu0 0
    %2289 = vmatpush1.bf16.msra.mxu0 %v2192
    %2290 = vmatprep.subr.bf16.mxu0 0
    %2291 = vmatpush1.bf16.msra.mxu0 %v2191
    %2292 = vmatprep.subr.bf16.mxu0 0
    %2293 = vmatpush1.bf16.msra.mxu0 %v2190
    %2294 = vmatprep.subr.bf16.mxu0 0
    %2295 = vmatpush2.bf16.msra.mxu0 %v2205
    %2296 = vmatprep.subr.bf16.mxu0 0
    %2297 = vmatpush2.bf16.msra.mxu0 %v2204
    %2298 = vmatprep.subr.bf16.mxu0 0
    %2299 = vmatpush2.bf16.msra.mxu0 %v2203
    %2300 = vmatprep.subr.bf16.mxu0 0
    %2301 = vmatpush2.bf16.msra.mxu0 %v2202
    %2302 = vmatprep.subr.bf16.mxu0 0
    %2303 = vmatpush2.bf16.msra.mxu0 %v2201
    %2304 = vmatprep.subr.bf16.mxu0 0
    %2305 = vmatpush2.bf16.msra.mxu0 %v2200
    %2306 = vmatprep.subr.bf16.mxu0 0
    %2307 = vmatpush2.bf16.msra.mxu0 %v2199
    %2308 = vmatprep.subr.bf16.mxu0 0
    %2309 = vmatpush2.bf16.msra.mxu0 %v2198
    %2310 = vmatprep.mubr.bf16.mxu0 %v1974
    %2311 = vmatmul.mubr.bf16.gmra.mxu0 %v1973
    %v2312 = vpop.f32.mrf.mxu0
    %v2313 = vadd.f32 %v2273, %v2312
    %v2314 = vpop.f32.mrf.mxu0
    %v2315 = vpop.f32.mrf.mxu0
    %v2316 = vpop.f32.mrf.mxu0
    %2317 = vdwg.mxu0
    %2318 = vst [vmem:[#allocation2] sm:$0x3] %v2313
    // Predicated region
    $region22: #{mobilenet_with_texture_hist.5} parent=1 // pred_check
      _
    $region23: #{mobilenet_with_texture_hist.5} parent=1 // pred_check_branch
      %2320 = sbr.rel (0) target = $region25
    $region24: #{mobilenet_with_texture_hist.5} parent=1 // pred_region
      %s2322 = ssub.s32 32, 32
      %2323 = vsyncadd [#allocation3], %s2322
      %s2325 = sshll.u32 [#allocation2], 4
      %s2326 = int_to_ptr.vmem [resolvable:$true] %s2325
      %2328 = dma.vmem_to_hbm [thread:$0]  %s2326, 32, %s5, [#allocation3]
    $region25: #{mobilenet_with_texture_hist.5} parent=1 // pred_fallthru
      _
    // Predicated region
    $region26: #{mobilenet_with_texture_hist.5} parent=1 // pred_check
      _
    $region27: #{mobilenet_with_texture_hist.5} parent=1 // pred_check_branch
      %2330 = sbr.rel (0) target = $region29
    $region28: #{mobilenet_with_texture_hist.5} parent=1 // pred_region
      %2331 = dma.done [#allocation3], 32
    $region29: #{mobilenet_with_texture_hist.5} parent=1 // pred_fallthru
      _
    %2332 = vsyncpa [#allocation3], 1

// kernel: mobilenet_with_texture_hist.4
$region0: #{mobilenet_with_texture_hist.4}
  #allocation0 [shape = 'u32[]', space=smem, size = 0x4, offset = 0x4, fixed_abs, tag = 'smem constant byte address 0x4 - core index']
  #allocation1 [shape = 'u32[144,128]{1,0:T(1,128)}', space=vmem, size = 0x12000, scoped, tag = 'internal scratch']
  #allocation2 [shape = 'f32[2,512]{1,0:T(2,128)}', space=vmem, size = 0x1000, scoped, tag = 'scratch operand']
  %s0 = inlined_call_operand.vmem [shape: bf16[2,3072], index: 0, kind: input, shape index: {}]
  %s1 = inlined_call_operand.hbm [shape: bf16[3072,1024], index: 1, kind: input, shape index: {}]
  %s2 = inlined_call_operand.hbm [shape: f32[1,1024], index: 2, kind: input, shape index: {}]
  %s3 = inlined_call_operand.vmem [shape: bf16[2,1024], index: 3, kind: output, shape index: {}]
  %s4 = sld [smem:[#allocation0]]
  $region61: #{mobilenet_with_texture_hist.4} parent=0
    _
  %s6 = ssub.s32 1, %s4
  %s7 = scalar_select 0, %s6, %s4
  $region1: #{mobilenet_with_texture_hist.4} parent=0
    #allocation3 [shape = 'u8[2097152]{0}', space=vmem, size = 0x200000, scoped, tag = 'input window, operand 1']
    #allocation4 [shape = 's32[2]{0}', space=sflag, size = 0x8, scoped, tag = 'scoped memory for mobilenet_with_texture_hist.4']
    #allocation5 [shape = 'u8[4096]{0}', space=vmem, size = 0x1000, scoped, tag = 'input window, operand 2']
    #allocation6 [shape = 's32[2]{0}', space=sflag, size = 0x8, scoped, tag = 'scoped memory for mobilenet_with_texture_hist.4']
    %8 = vsyncpa [#allocation4], 0
    %s9 = scalar_lea.sflag [#allocation4], 1
    %10 = vsyncpa %s9, 0
    %11 = vsyncpa [#allocation6], 0
    %s12 = scalar_lea.sflag [#allocation6], 1
    %13 = vsyncpa %s12, 0
    loop: start=0, step=1, limit=8
    $region2: #{mobilenet_with_texture_hist.4} parent=1 // loop_pre_header
      _
    $region3: #{mobilenet_with_texture_hist.4} parent=1 // loop_header
      %s15 = sphi 0, %s19
      %p16 = scmp.ge.s32.totalorder %s15, 8
      %s22 = sphi 0, %s34
      %s23 = sphi 0, %s30
      %s24 = sphi 0, %s22
      %s25 = sphi 0, %s23
      %s26 = sphi 0, %s24
      %s27 = sphi 0, %s25
      %s37 = sphi 0, %s39
      %s40 = sphi 0, %s37
      %s41 = sphi 0, %s40
      %s57 = sphi 0, %s41
      %s65 = sphi 0, %s67
      %s68 = sphi 0, %s65
      %s69 = sphi 0, %s68
      %s85 = sphi 0, %s69
      %s91 = sphi 0, %s93
      %s94 = sphi 0, %s91
      %s95 = sphi 0, %s94
      %s111 = sphi 0, %s95
      %s117 = sphi 0, %s119
      %s120 = sphi 0, %s117
      %s121 = sphi 0, %s120
      %s137 = sphi 0, %s121
    $region4: #{mobilenet_with_texture_hist.4} parent=1 // loop_header_branch
      %18 = sbr.rel (%p16) target = $region8
    $region5: #{mobilenet_with_texture_hist.4} parent=1 // loop_body
      %s20 = ssub.s32 %s15, 1
      %s21 = ssub.s32 %s15, 2
      %s28 = sadd.s32 1, %s23
      %p29 = scmp.ge.s32.totalorder %s28, 3
      %s30 = scalar_select %p29, 0, %s28
      %s31 = sadd.s32 1, %s22
      %s32 = scalar_select %p29, %s31, %s22
      %p33 = scmp.ge.s32.totalorder %s32, 2
      %s34 = scalar_select %p33, 0, %s32
      %s35 = ssub.s32 %s23, %s30
      %p36 = scmp.eq.s32.totalorder %s35, 0
      %s38 = sadd.s32 %s37, 1
      %s39 = scalar_select %p36, %s37, %s38
      %p42 = pneg %p36
      %p43 = scmp.eq.s32.totalorder %s15, 5
      %p44 = por %p42, %p43
      %p45 = scmp.ne.s32.totalorder %s37, %s40
      %p46 = scmp.eq.s32.totalorder %s15, 0
      %p47 = por %p45, %p46
      %p48 = scmp.ne.s32.totalorder %s37, %s40
      %p49 = scmp.eq.s32.totalorder %s20, 5
      %p50 = por %p48, %p49
      %p51 = scmp.ne.s32.totalorder %s40, %s41
      %p52 = scmp.eq.s32.totalorder %s20, 0
      %p53 = por %p51, %p52
      %p54 = scmp.ne.s32.totalorder %s40, %s41
      %p55 = scmp.eq.s32.totalorder %s21, 5
      %p56 = por %p54, %p55
      %p58 = scmp.ne.s32.totalorder %s41, %s57
      %p59 = scmp.eq.s32.totalorder %s21, 0
      %p60 = por %p58, %p59
      %s61 = ssub.s32 %s23, %s30
      %s62 = ssub.s32 %s22, %s34
      %s63 = sor.u32 %s61, %s62
      %p64 = scmp.eq.s32.totalorder %s63, 0
      %s66 = sadd.s32 %s65, 1
      %s67 = scalar_select %p64, %s65, %s66
      %p70 = pneg %p64
      %p71 = scmp.eq.s32.totalorder %s15, 5
      %p72 = por %p70, %p71
      %p73 = scmp.ne.s32.totalorder %s65, %s68
      %p74 = scmp.eq.s32.totalorder %s15, 0
      %p75 = por %p73, %p74
      %p76 = scmp.ne.s32.totalorder %s65, %s68
      %p77 = scmp.eq.s32.totalorder %s20, 5
      %p78 = por %p76, %p77
      %p79 = scmp.ne.s32.totalorder %s68, %s69
      %p80 = scmp.eq.s32.totalorder %s20, 0
      %p81 = por %p79, %p80
      %p82 = scmp.ne.s32.totalorder %s68, %s69
      %p83 = scmp.eq.s32.totalorder %s21, 5
      %p84 = por %p82, %p83
      %p86 = scmp.ne.s32.totalorder %s69, %s85
      %p87 = scmp.eq.s32.totalorder %s21, 0
      %p88 = por %p86, %p87
      %s89 = ssub.s32 %s22, %s34
      %p90 = scmp.eq.s32.totalorder %s89, 0
      %s92 = sadd.s32 %s91, 1
      %s93 = scalar_select %p90, %s91, %s92
      %p96 = pneg %p90
      %p97 = scmp.eq.s32.totalorder %s15, 5
      %p98 = por %p96, %p97
      %p99 = scmp.ne.s32.totalorder %s91, %s94
      %p100 = scmp.eq.s32.totalorder %s15, 0
      %p101 = por %p99, %p100
      %p102 = scmp.ne.s32.totalorder %s91, %s94
      %p103 = scmp.eq.s32.totalorder %s20, 5
      %p104 = por %p102, %p103
      %p105 = scmp.ne.s32.totalorder %s94, %s95
      %p106 = scmp.eq.s32.totalorder %s20, 0
      %p107 = por %p105, %p106
      %p108 = scmp.ne.s32.totalorder %s94, %s95
      %p109 = scmp.eq.s32.totalorder %s21, 5
      %p110 = por %p108, %p109
      %p112 = scmp.ne.s32.totalorder %s95, %s111
      %p113 = scmp.eq.s32.totalorder %s21, 0
      %p114 = por %p112, %p113
      %s115 = ssub.s32 %s22, %s34
      %p116 = scmp.eq.s32.totalorder %s115, 0
      %s118 = sadd.s32 %s117, 1
      %s119 = scalar_select %p116, %s117, %s118
      %p122 = pneg %p116
      %p123 = scmp.eq.s32.totalorder %s15, 5
      %p124 = por %p122, %p123
      %p125 = scmp.ne.s32.totalorder %s117, %s120
      %p126 = scmp.eq.s32.totalorder %s15, 0
      %p127 = por %p125, %p126
      %p128 = scmp.ne.s32.totalorder %s117, %s120
      %p129 = scmp.eq.s32.totalorder %s20, 5
      %p130 = por %p128, %p129
      %p131 = scmp.ne.s32.totalorder %s120, %s121
      %p132 = scmp.eq.s32.totalorder %s20, 0
      %p133 = por %p131, %p132
      %p134 = scmp.ne.s32.totalorder %s120, %s121
      %p135 = scmp.eq.s32.totalorder %s21, 5
      %p136 = por %p134, %p135
      %p138 = scmp.ne.s32.totalorder %s121, %s137
      %p139 = scmp.eq.s32.totalorder %s21, 0
      %p140 = por %p138, %p139
      %p141 = scmp.le.s32.totalorder 1, %s15
      %p142 = scmp.lt.s32.totalorder %s15, 7
      %p143 = pnand %p141, %p142
      %p144 = pneg %p143
      // Predicated region
      $region9: #{mobilenet_with_texture_hist.4} parent=5 // pred_check
        _
      $region10: #{mobilenet_with_texture_hist.4} parent=5 // pred_check_branch
        %146 = sbr.rel (%p143) target = $region12
      $region11: #{mobilenet_with_texture_hist.4} parent=5 // pred_region
        %s147 = ssub.s32 %s15, 1
      $region12: #{mobilenet_with_texture_hist.4} parent=5 // pred_fallthru
        _
      %p148 = scmp.lt.s32.totalorder %s15, 6
      // Predicated region
      $region13: #{mobilenet_with_texture_hist.4} parent=5 // pred_check
        %p149 = pneg %p148
      $region14: #{mobilenet_with_texture_hist.4} parent=5 // pred_check_branch
        %151 = sbr.rel (%p149) target = $region16
      $region15: #{mobilenet_with_texture_hist.4} parent=5 // pred_region
        // Predicated region
        $region17: #{mobilenet_with_texture_hist.4} parent=15 // pred_check
          %p152 = pneg %p47
        $region18: #{mobilenet_with_texture_hist.4} parent=15 // pred_check_branch
          %154 = sbr.rel (%p152) target = $region20
        $region19: #{mobilenet_with_texture_hist.4} parent=15 // pred_region
          %s155 = smul.u32 8, %s23
          %p156 = scmp.lt.s32.totalorder %s155, 23
          %s157 = scalar_select %p156, %s155, 23
          %s158 = scalar_lea.vmem %s0, %s157
          %s159 = smul.u32 8, %s23
        $region20: #{mobilenet_with_texture_hist.4} parent=15 // pred_fallthru
          _
        // Predicated region
        $region21: #{mobilenet_with_texture_hist.4} parent=15 // pred_check
          %p160 = pneg %p75
        $region22: #{mobilenet_with_texture_hist.4} parent=15 // pred_check_branch
          %162 = sbr.rel (%p160) target = $region24
        $region23: #{mobilenet_with_texture_hist.4} parent=15 // pred_region
          %s163 = sand.u32 %s65, 1
          %s164 = scalar_lea.sflag [#allocation4], %s163
          %s165 = sand.u32 %s65, 1
          %s166 = smul.addr %s165, 2048
          %s167 = scalar_lea.vmem [#allocation3], %s166
          %s168 = smul.u32 128, %s23
          %s169 = smul.u32 4, %s22
          %s171 = ssub.s32 32768, 32768
          %172 = vsyncadd %s164, %s171
          %s173 = smul.addr %s168, 8
          %s174 = sadd.s32 %s169, %s173
          %s175 = smul.addr %s174, 64
          %s176 = scalar_lea.hbm %s1, %s175
          %s177 = sshll.u32 %s167, 4
          %s178 = int_to_ptr.vmem [resolvable:$true] %s177
          %183 = dma.hbm_to_vmem [thread:$0]  %s176, 32768, %s178, %s164, 512, 256, 16
        $region24: #{mobilenet_with_texture_hist.4} parent=15 // pred_fallthru
          _
        // Predicated region
        $region25: #{mobilenet_with_texture_hist.4} parent=15 // pred_check
          %p184 = pneg %p101
        $region26: #{mobilenet_with_texture_hist.4} parent=15 // pred_check_branch
          %186 = sbr.rel (%p184) target = $region28
        $region27: #{mobilenet_with_texture_hist.4} parent=15 // pred_region
          %s187 = sand.u32 %s91, 1
          %s188 = scalar_lea.sflag [#allocation6], %s187
          %s189 = sand.u32 %s91, 1
          %s190 = smul.addr %s189, 4
          %s191 = scalar_lea.vmem [#allocation5], %s190
          %s192 = smul.u32 4, %s22
          %s194 = ssub.s32 64, 64
          %195 = vsyncadd %s188, %s194
          %s196 = smul.addr %s192, 16
          %s197 = scalar_lea.hbm %s2, %s196
          %s199 = sshll.u32 %s191, 4
          %s200 = int_to_ptr.vmem [resolvable:$true] %s199
          %202 = dma.hbm_to_vmem [thread:$0]  %s197, 64, %s200, %s188
        $region28: #{mobilenet_with_texture_hist.4} parent=15 // pred_fallthru
          _
      $region16: #{mobilenet_with_texture_hist.4} parent=5 // pred_fallthru
        _
      %p203 = scmp.le.s32.totalorder 1, %s15
      %p204 = scmp.lt.s32.totalorder %s15, 7
      %p205 = pnand %p203, %p204
      %p206 = pneg %p205
      // Predicated region
      $region29: #{mobilenet_with_texture_hist.4} parent=5 // pred_check
        _
      $region30: #{mobilenet_with_texture_hist.4} parent=5 // pred_check_branch
        %208 = sbr.rel (%p205) target = $region32
      $region31: #{mobilenet_with_texture_hist.4} parent=5 // pred_region
        %s209 = ssub.s32 %s15, 1
        %s210 = sand.u32 %s68, 1
        %s211 = scalar_lea.sflag [#allocation4], %s210
        %s212 = sand.u32 %s68, 1
        %s213 = smul.addr %s212, 2048
        %s214 = scalar_lea.vmem [#allocation3], %s213
        // Predicated region
        $region33: #{mobilenet_with_texture_hist.4} parent=31 // pred_check
          %p215 = pneg %p81
        $region34: #{mobilenet_with_texture_hist.4} parent=31 // pred_check_branch
          %217 = sbr.rel (%p215) target = $region36
        $region35: #{mobilenet_with_texture_hist.4} parent=31 // pred_region
          %218 = dma.done %s211, 32768
        $region36: #{mobilenet_with_texture_hist.4} parent=31 // pred_fallthru
          _
        %s219 = sand.u32 %s94, 1
        %s220 = scalar_lea.sflag [#allocation6], %s219
        %s221 = sand.u32 %s94, 1
        %s222 = smul.addr %s221, 4
        %s223 = scalar_lea.vmem [#allocation5], %s222
        // Predicated region
        $region37: #{mobilenet_with_texture_hist.4} parent=31 // pred_check
          %p224 = pneg %p107
        $region38: #{mobilenet_with_texture_hist.4} parent=31 // pred_check_branch
          %226 = sbr.rel (%p224) target = $region40
        $region39: #{mobilenet_with_texture_hist.4} parent=31 // pred_region
          %227 = dma.done %s220, 64
        $region40: #{mobilenet_with_texture_hist.4} parent=31 // pred_fallthru
          _
        %s228 = smul.u32 8, %s25
        %p229 = scmp.lt.s32.totalorder %s228, 23
        %s230 = scalar_select %p229, %s228, 23
        %s231 = scalar_lea.vmem %s0, %s230
        %p232 = pneg %p53
        %p233 = pneg %p50
        %s234 = sand.u32 %s68, 1
        %s235 = scalar_lea.sflag [#allocation4], %s234
        %s236 = sand.u32 %s68, 1
        %s237 = smul.addr %s236, 2048
        %s238 = scalar_lea.vmem [#allocation3], %s237
        %p239 = pneg %p81
        %p240 = pneg %p78
        %s241 = sand.u32 %s94, 1
        %s242 = scalar_lea.sflag [#allocation6], %s241
        %s243 = sand.u32 %s94, 1
        %s244 = smul.addr %s243, 4
        %s245 = scalar_lea.vmem [#allocation5], %s244
        %p246 = pneg %p107
        %p247 = pneg %p104
        %p248 = pneg %p133
        %p249 = pneg %p130
        %s250 = smul.u32 4, %s24
        %p251 = scmp.lt.s32.totalorder %s250, 7
        %s252 = scalar_select %p251, %s250, 7
        %s253 = scalar_lea.vmem %s3, %s252
        %s254 = smul.u32 8, %s25
        %p255 = scmp.lt.s32.totalorder %s254, 23
        %s256 = scalar_select %p255, %s254, 23
        %s257 = scalar_lea.vmem %s0, %s256
        %s258 = smul.u32 8, %s25
        %s259 = smul.u32 128, %s25
        %s260 = smul.u32 4, %s24
        %s261 = smul.u32 4, %s24
        %s262 = smul.u32 4, %s24
        %p263 = scmp.lt.s32.totalorder %s262, 7
        %s264 = scalar_select %p263, %s262, 7
        %s265 = scalar_lea.vmem %s3, %s264
        %s266 = smul.u32 4, %s24
        %p267 = scmp.eq.s32.totalorder %s25, 0
        // Predicated region
        $region41: #{mobilenet_with_texture_hist.4} parent=31 // pred_check
          %p268 = pneg %p267
        $region42: #{mobilenet_with_texture_hist.4} parent=31 // pred_check_branch
          %270 = sbr.rel (%p268) target = $region44
        $region43: #{mobilenet_with_texture_hist.4} parent=31 // pred_region
          %271 = vst [vmem:[#allocation2] sm:$0xff] 0.0
        $region44: #{mobilenet_with_texture_hist.4} parent=31 // pred_fallthru
          _
        %v272 = vld [vmem:[#allocation2] sm:$0xff]
        %v273 = vld [vmem:[%s257] sm:$0xff]
        %v274 = vld [vmem:[%s214] sm:$0xff]
        %v275 = vld [vmem:[%s214 + $0x8] sm:$0xff]
        %v276 = vld [vmem:[%s214 + $0x10] sm:$0xff]
        %v277 = vld [vmem:[%s214 + $0x18] sm:$0xff]
        %v278 = vld [vmem:[%s214 + $0x20] sm:$0xff]
        %v279 = vld [vmem:[%s214 + $0x28] sm:$0xff]
        %v280 = vld [vmem:[%s214 + $0x30] sm:$0xff]
        %v281 = vld [vmem:[%s214 + $0x38] sm:$0xff]
        %v282 = vld [vmem:[%s214 + $0x40] sm:$0xff]
        %v283 = vld [vmem:[%s214 + $0x48] sm:$0xff]
        %v284 = vld [vmem:[%s214 + $0x50] sm:$0xff]
        %v285 = vld [vmem:[%s214 + $0x58] sm:$0xff]
        %v286 = vld [vmem:[%s214 + $0x60] sm:$0xff]
        %v287 = vld [vmem:[%s214 + $0x68] sm:$0xff]
        %v288 = vld [vmem:[%s214 + $0x70] sm:$0xff]
        %v289 = vld [vmem:[%s214 + $0x78] sm:$0xff]
        %v290 = vld [vmem:[%s214 + $0x80] sm:$0xff]
        %v291 = vld [vmem:[%s214 + $0x88] sm:$0xff]
        %v292 = vld [vmem:[%s214 + $0x90] sm:$0xff]
        %v293 = vld [vmem:[%s214 + $0x98] sm:$0xff]
        %v294 = vld [vmem:[%s214 + $0xa0] sm:$0xff]
        %v295 = vld [vmem:[%s214 + $0xa8] sm:$0xff]
        %v296 = vld [vmem:[%s214 + $0xb0] sm:$0xff]
        %v297 = vld [vmem:[%s214 + $0xb8] sm:$0xff]
        %v298 = vld [vmem:[%s214 + $0xc0] sm:$0xff]
        %v299 = vld [vmem:[%s214 + $0xc8] sm:$0xff]
        %v300 = vld [vmem:[%s214 + $0xd0] sm:$0xff]
        %v301 = vld [vmem:[%s214 + $0xd8] sm:$0xff]
        %v302 = vld [vmem:[%s214 + $0xe0] sm:$0xff]
        %v303 = vld [vmem:[%s214 + $0xe8] sm:$0xff]
        %v304 = vld [vmem:[%s214 + $0xf0] sm:$0xff]
        %v305 = vld [vmem:[%s214 + $0xf8] sm:$0xff]
        %v306 = vld [vmem:[%s214 + $0x100] sm:$0xff]
        %v307 = vld [vmem:[%s214 + $0x108] sm:$0xff]
        %v308 = vld [vmem:[%s214 + $0x110] sm:$0xff]
        %v309 = vld [vmem:[%s214 + $0x118] sm:$0xff]
        %v310 = vld [vmem:[%s214 + $0x120] sm:$0xff]
        %v311 = vld [vmem:[%s214 + $0x128] sm:$0xff]
        %v312 = vld [vmem:[%s214 + $0x130] sm:$0xff]
        %v313 = vld [vmem:[%s214 + $0x138] sm:$0xff]
        %v314 = vld [vmem:[%s214 + $0x140] sm:$0xff]
        %v315 = vld [vmem:[%s214 + $0x148] sm:$0xff]
        %v316 = vld [vmem:[%s214 + $0x150] sm:$0xff]
        %v317 = vld [vmem:[%s214 + $0x158] sm:$0xff]
        %v318 = vld [vmem:[%s214 + $0x160] sm:$0xff]
        %v319 = vld [vmem:[%s214 + $0x168] sm:$0xff]
        %v320 = vld [vmem:[%s214 + $0x170] sm:$0xff]
        %v321 = vld [vmem:[%s214 + $0x178] sm:$0xff]
        %v322 = vld [vmem:[%s214 + $0x180] sm:$0xff]
        %v323 = vld [vmem:[%s214 + $0x188] sm:$0xff]
        %v324 = vld [vmem:[%s214 + $0x190] sm:$0xff]
        %v325 = vld [vmem:[%s214 + $0x198] sm:$0xff]
        %v326 = vld [vmem:[%s214 + $0x1a0] sm:$0xff]
        %v327 = vld [vmem:[%s214 + $0x1a8] sm:$0xff]
        %v328 = vld [vmem:[%s214 + $0x1b0] sm:$0xff]
        %v329 = vld [vmem:[%s214 + $0x1b8] sm:$0xff]
        %v330 = vld [vmem:[%s214 + $0x1c0] sm:$0xff]
        %v331 = vld [vmem:[%s214 + $0x1c8] sm:$0xff]
        %v332 = vld [vmem:[%s214 + $0x1d0] sm:$0xff]
        %v333 = vld [vmem:[%s214 + $0x1d8] sm:$0xff]
        %v334 = vld [vmem:[%s214 + $0x1e0] sm:$0xff]
        %v335 = vld [vmem:[%s214 + $0x1e8] sm:$0xff]
        %v336 = vld [vmem:[%s214 + $0x1f0] sm:$0xff]
        %v337 = vld [vmem:[%s214 + $0x1f8] sm:$0xff]
        %v338 = vld [vmem:[%s214 + $0x200] sm:$0xff]
        %v339 = vld [vmem:[%s214 + $0x208] sm:$0xff]
        %v340 = vld [vmem:[%s214 + $0x210] sm:$0xff]
        %v341 = vld [vmem:[%s214 + $0x218] sm:$0xff]
        %v342 = vld [vmem:[%s214 + $0x220] sm:$0xff]
        %v343 = vld [vmem:[%s214 + $0x228] sm:$0xff]
        %v344 = vld [vmem:[%s214 + $0x230] sm:$0xff]
        %v345 = vld [vmem:[%s214 + $0x238] sm:$0xff]
        %v346 = vld [vmem:[%s214 + $0x240] sm:$0xff]
        %v347 = vld [vmem:[%s214 + $0x248] sm:$0xff]
        %v348 = vld [vmem:[%s214 + $0x250] sm:$0xff]
        %v349 = vld [vmem:[%s214 + $0x258] sm:$0xff]
        %v350 = vld [vmem:[%s214 + $0x260] sm:$0xff]
        %v351 = vld [vmem:[%s214 + $0x268] sm:$0xff]
        %v352 = vld [vmem:[%s214 + $0x270] sm:$0xff]
        %v353 = vld [vmem:[%s214 + $0x278] sm:$0xff]
        %v354 = vld [vmem:[%s214 + $0x280] sm:$0xff]
        %v355 = vld [vmem:[%s214 + $0x288] sm:$0xff]
        %v356 = vld [vmem:[%s214 + $0x290] sm:$0xff]
        %v357 = vld [vmem:[%s214 + $0x298] sm:$0xff]
        %v358 = vld [vmem:[%s214 + $0x2a0] sm:$0xff]
        %v359 = vld [vmem:[%s214 + $0x2a8] sm:$0xff]
        %v360 = vld [vmem:[%s214 + $0x2b0] sm:$0xff]
        %v361 = vld [vmem:[%s214 + $0x2b8] sm:$0xff]
        %v362 = vld [vmem:[%s214 + $0x2c0] sm:$0xff]
        %v363 = vld [vmem:[%s214 + $0x2c8] sm:$0xff]
        %v364 = vld [vmem:[%s214 + $0x2d0] sm:$0xff]
        %v365 = vld [vmem:[%s214 + $0x2d8] sm:$0xff]
        %v366 = vld [vmem:[%s214 + $0x2e0] sm:$0xff]
        %v367 = vld [vmem:[%s214 + $0x2e8] sm:$0xff]
        %v368 = vld [vmem:[%s214 + $0x2f0] sm:$0xff]
        %v369 = vld [vmem:[%s214 + $0x2f8] sm:$0xff]
        %v370 = vld [vmem:[%s214 + $0x300] sm:$0xff]
        %v371 = vld [vmem:[%s214 + $0x308] sm:$0xff]
        %v372 = vld [vmem:[%s214 + $0x310] sm:$0xff]
        %v373 = vld [vmem:[%s214 + $0x318] sm:$0xff]
        %v374 = vld [vmem:[%s214 + $0x320] sm:$0xff]
        %v375 = vld [vmem:[%s214 + $0x328] sm:$0xff]
        %v376 = vld [vmem:[%s214 + $0x330] sm:$0xff]
        %v377 = vld [vmem:[%s214 + $0x338] sm:$0xff]
        %v378 = vld [vmem:[%s214 + $0x340] sm:$0xff]
        %v379 = vld [vmem:[%s214 + $0x348] sm:$0xff]
        %v380 = vld [vmem:[%s214 + $0x350] sm:$0xff]
        %v381 = vld [vmem:[%s214 + $0x358] sm:$0xff]
        %v382 = vld [vmem:[%s214 + $0x360] sm:$0xff]
        %v383 = vld [vmem:[%s214 + $0x368] sm:$0xff]
        %v384 = vld [vmem:[%s214 + $0x370] sm:$0xff]
        %v385 = vld [vmem:[%s214 + $0x378] sm:$0xff]
        %v386 = vld [vmem:[%s214 + $0x380] sm:$0xff]
        %v387 = vld [vmem:[%s214 + $0x388] sm:$0xff]
        %v388 = vld [vmem:[%s214 + $0x390] sm:$0xff]
        %v389 = vld [vmem:[%s214 + $0x398] sm:$0xff]
        %v390 = vld [vmem:[%s214 + $0x3a0] sm:$0xff]
        %v391 = vld [vmem:[%s214 + $0x3a8] sm:$0xff]
        %v392 = vld [vmem:[%s214 + $0x3b0] sm:$0xff]
        %v393 = vld [vmem:[%s214 + $0x3b8] sm:$0xff]
        %v394 = vld [vmem:[%s214 + $0x3c0] sm:$0xff]
        %v395 = vld [vmem:[%s214 + $0x3c8] sm:$0xff]
        %v396 = vld [vmem:[%s214 + $0x3d0] sm:$0xff]
        %v397 = vld [vmem:[%s214 + $0x3d8] sm:$0xff]
        %v398 = vld [vmem:[%s214 + $0x3e0] sm:$0xff]
        %v399 = vld [vmem:[%s214 + $0x3e8] sm:$0xff]
        %v400 = vld [vmem:[%s214 + $0x3f0] sm:$0xff]
        %v401 = vld [vmem:[%s214 + $0x3f8] sm:$0xff]
        %v402 = vld [vmem:[%s214 + $0x400] sm:$0xff]
        %v403 = vld [vmem:[%s214 + $0x408] sm:$0xff]
        %v404 = vld [vmem:[%s214 + $0x410] sm:$0xff]
        %v405 = vld [vmem:[%s214 + $0x418] sm:$0xff]
        %v406 = vld [vmem:[%s214 + $0x420] sm:$0xff]
        %v407 = vld [vmem:[%s214 + $0x428] sm:$0xff]
        %v408 = vld [vmem:[%s214 + $0x430] sm:$0xff]
        %v409 = vld [vmem:[%s214 + $0x438] sm:$0xff]
        %v410 = vld [vmem:[%s214 + $0x440] sm:$0xff]
        %v411 = vld [vmem:[%s214 + $0x448] sm:$0xff]
        %v412 = vld [vmem:[%s214 + $0x450] sm:$0xff]
        %v413 = vld [vmem:[%s214 + $0x458] sm:$0xff]
        %v414 = vld [vmem:[%s214 + $0x460] sm:$0xff]
        %v415 = vld [vmem:[%s214 + $0x468] sm:$0xff]
        %v416 = vld [vmem:[%s214 + $0x470] sm:$0xff]
        %v417 = vld [vmem:[%s214 + $0x478] sm:$0xff]
        %v418 = vld [vmem:[%s214 + $0x480] sm:$0xff]
        %v419 = vld [vmem:[%s214 + $0x488] sm:$0xff]
        %v420 = vld [vmem:[%s214 + $0x490] sm:$0xff]
        %v421 = vld [vmem:[%s214 + $0x498] sm:$0xff]
        %v422 = vld [vmem:[%s214 + $0x4a0] sm:$0xff]
        %v423 = vld [vmem:[%s214 + $0x4a8] sm:$0xff]
        %v424 = vld [vmem:[%s214 + $0x4b0] sm:$0xff]
        %v425 = vld [vmem:[%s214 + $0x4b8] sm:$0xff]
        %v426 = vld [vmem:[%s214 + $0x4c0] sm:$0xff]
        %v427 = vld [vmem:[%s214 + $0x4c8] sm:$0xff]
        %v428 = vld [vmem:[%s214 + $0x4d0] sm:$0xff]
        %v429 = vld [vmem:[%s214 + $0x4d8] sm:$0xff]
        %v430 = vld [vmem:[%s214 + $0x4e0] sm:$0xff]
        %v431 = vld [vmem:[%s214 + $0x4e8] sm:$0xff]
        %v432 = vld [vmem:[%s214 + $0x4f0] sm:$0xff]
        %v433 = vld [vmem:[%s214 + $0x4f8] sm:$0xff]
        %v434 = vld [vmem:[%s214 + $0x500] sm:$0xff]
        %v435 = vld [vmem:[%s214 + $0x508] sm:$0xff]
        %v436 = vld [vmem:[%s214 + $0x510] sm:$0xff]
        %v437 = vld [vmem:[%s214 + $0x518] sm:$0xff]
        %v438 = vld [vmem:[%s214 + $0x520] sm:$0xff]
        %v439 = vld [vmem:[%s214 + $0x528] sm:$0xff]
        %v440 = vld [vmem:[%s214 + $0x530] sm:$0xff]
        %v441 = vld [vmem:[%s214 + $0x538] sm:$0xff]
        %v442 = vld [vmem:[%s214 + $0x540] sm:$0xff]
        %v443 = vld [vmem:[%s214 + $0x548] sm:$0xff]
        %v444 = vld [vmem:[%s214 + $0x550] sm:$0xff]
        %v445 = vld [vmem:[%s214 + $0x558] sm:$0xff]
        %v446 = vld [vmem:[%s214 + $0x560] sm:$0xff]
        %v447 = vld [vmem:[%s214 + $0x568] sm:$0xff]
        %v448 = vld [vmem:[%s214 + $0x570] sm:$0xff]
        %v449 = vld [vmem:[%s214 + $0x578] sm:$0xff]
        %v450 = vld [vmem:[%s214 + $0x580] sm:$0xff]
        %v451 = vld [vmem:[%s214 + $0x588] sm:$0xff]
        %v452 = vld [vmem:[%s214 + $0x590] sm:$0xff]
        %v453 = vld [vmem:[%s214 + $0x598] sm:$0xff]
        %v454 = vld [vmem:[%s214 + $0x5a0] sm:$0xff]
        %v455 = vld [vmem:[%s214 + $0x5a8] sm:$0xff]
        %v456 = vld [vmem:[%s214 + $0x5b0] sm:$0xff]
        %v457 = vld [vmem:[%s214 + $0x5b8] sm:$0xff]
        %v458 = vld [vmem:[%s214 + $0x5c0] sm:$0xff]
        %v459 = vld [vmem:[%s214 + $0x5c8] sm:$0xff]
        %v460 = vld [vmem:[%s214 + $0x5d0] sm:$0xff]
        %v461 = vld [vmem:[%s214 + $0x5d8] sm:$0xff]
        %v462 = vld [vmem:[%s214 + $0x5e0] sm:$0xff]
        %v463 = vld [vmem:[%s214 + $0x5e8] sm:$0xff]
        %v464 = vld [vmem:[%s214 + $0x5f0] sm:$0xff]
        %v465 = vld [vmem:[%s214 + $0x5f8] sm:$0xff]
        %v466 = vld [vmem:[%s214 + $0x600] sm:$0xff]
        %v467 = vld [vmem:[%s214 + $0x608] sm:$0xff]
        %v468 = vld [vmem:[%s214 + $0x610] sm:$0xff]
        %v469 = vld [vmem:[%s214 + $0x618] sm:$0xff]
        %v470 = vld [vmem:[%s214 + $0x620] sm:$0xff]
        %v471 = vld [vmem:[%s214 + $0x628] sm:$0xff]
        %v472 = vld [vmem:[%s214 + $0x630] sm:$0xff]
        %v473 = vld [vmem:[%s214 + $0x638] sm:$0xff]
        %v474 = vld [vmem:[%s214 + $0x640] sm:$0xff]
        %v475 = vld [vmem:[%s214 + $0x648] sm:$0xff]
        %v476 = vld [vmem:[%s214 + $0x650] sm:$0xff]
        %v477 = vld [vmem:[%s214 + $0x658] sm:$0xff]
        %v478 = vld [vmem:[%s214 + $0x660] sm:$0xff]
        %v479 = vld [vmem:[%s214 + $0x668] sm:$0xff]
        %v480 = vld [vmem:[%s214 + $0x670] sm:$0xff]
        %v481 = vld [vmem:[%s214 + $0x678] sm:$0xff]
        %v482 = vld [vmem:[%s214 + $0x680] sm:$0xff]
        %v483 = vld [vmem:[%s214 + $0x688] sm:$0xff]
        %v484 = vld [vmem:[%s214 + $0x690] sm:$0xff]
        %v485 = vld [vmem:[%s214 + $0x698] sm:$0xff]
        %v486 = vld [vmem:[%s214 + $0x6a0] sm:$0xff]
        %v487 = vld [vmem:[%s214 + $0x6a8] sm:$0xff]
        %v488 = vld [vmem:[%s214 + $0x6b0] sm:$0xff]
        %v489 = vld [vmem:[%s214 + $0x6b8] sm:$0xff]
        %v490 = vld [vmem:[%s214 + $0x6c0] sm:$0xff]
        %v491 = vld [vmem:[%s214 + $0x6c8] sm:$0xff]
        %v492 = vld [vmem:[%s214 + $0x6d0] sm:$0xff]
        %v493 = vld [vmem:[%s214 + $0x6d8] sm:$0xff]
        %v494 = vld [vmem:[%s214 + $0x6e0] sm:$0xff]
        %v495 = vld [vmem:[%s214 + $0x6e8] sm:$0xff]
        %v496 = vld [vmem:[%s214 + $0x6f0] sm:$0xff]
        %v497 = vld [vmem:[%s214 + $0x6f8] sm:$0xff]
        %v498 = vld [vmem:[%s214 + $0x700] sm:$0xff]
        %v499 = vld [vmem:[%s214 + $0x708] sm:$0xff]
        %v500 = vld [vmem:[%s214 + $0x710] sm:$0xff]
        %v501 = vld [vmem:[%s214 + $0x718] sm:$0xff]
        %v502 = vld [vmem:[%s214 + $0x720] sm:$0xff]
        %v503 = vld [vmem:[%s214 + $0x728] sm:$0xff]
        %v504 = vld [vmem:[%s214 + $0x730] sm:$0xff]
        %v505 = vld [vmem:[%s214 + $0x738] sm:$0xff]
        %v506 = vld [vmem:[%s214 + $0x740] sm:$0xff]
        %v507 = vld [vmem:[%s214 + $0x748] sm:$0xff]
        %v508 = vld [vmem:[%s214 + $0x750] sm:$0xff]
        %v509 = vld [vmem:[%s214 + $0x758] sm:$0xff]
        %v510 = vld [vmem:[%s214 + $0x760] sm:$0xff]
        %v511 = vld [vmem:[%s214 + $0x768] sm:$0xff]
        %v512 = vld [vmem:[%s214 + $0x770] sm:$0xff]
        %v513 = vld [vmem:[%s214 + $0x778] sm:$0xff]
        %v514 = vld [vmem:[%s214 + $0x780] sm:$0xff]
        %v515 = vld [vmem:[%s214 + $0x788] sm:$0xff]
        %v516 = vld [vmem:[%s214 + $0x790] sm:$0xff]
        %v517 = vld [vmem:[%s214 + $0x798] sm:$0xff]
        %v518 = vld [vmem:[%s214 + $0x7a0] sm:$0xff]
        %v519 = vld [vmem:[%s214 + $0x7a8] sm:$0xff]
        %v520 = vld [vmem:[%s214 + $0x7b0] sm:$0xff]
        %v521 = vld [vmem:[%s214 + $0x7b8] sm:$0xff]
        %v522 = vld [vmem:[%s214 + $0x7c0] sm:$0xff]
        %v523 = vld [vmem:[%s214 + $0x7c8] sm:$0xff]
        %v524 = vld [vmem:[%s214 + $0x7d0] sm:$0xff]
        %v525 = vld [vmem:[%s214 + $0x7d8] sm:$0xff]
        %v526 = vld [vmem:[%s214 + $0x7e0] sm:$0xff]
        %v527 = vld [vmem:[%s214 + $0x7e8] sm:$0xff]
        %v528 = vld [vmem:[%s214 + $0x7f0] sm:$0xff]
        %v529 = vld [vmem:[%s214 + $0x7f8] sm:$0xff]
        %v531 = vcombine.high %v273, %v273
        %v533 = vunpack.c.l.s4 1966171168
        %v534 = vunpack.c.0.s8 %v533
        %v535 = vlaneseq
        %v536 = vshrl.u32 %v535, 7
        %v537 = vsub.s32 %v534, %v536
        %v538 = vrot.slane %v273, %v537
        %v540 = vunpack.c.l.s4 1966171168
        %v541 = vunpack.c.0.s8 %v540
        %v542 = vlaneseq
        %v543 = vshrl.u32 %v542, 7
        %v544 = vsub.s32 %v541, %v543
        %v545 = vrot.slane %v531, %v544
        %v546 = vcombine.high %v538, %v538
        %v547 = vcombine.high %v545, %v545
        %v549 = vunpack.c.l.s4 1966171168
        %v550 = vunpack.c.0.s8 %v549
        %v551 = vlaneseq
        %v552 = vshrl.u32 %v551, 7
        %v553 = vsub.s32 %v550, %v552
        %v554 = vrot.slane %v538, %v553
        %v556 = vunpack.c.l.s4 1966171168
        %v557 = vunpack.c.0.s8 %v556
        %v558 = vlaneseq
        %v559 = vshrl.u32 %v558, 7
        %v560 = vsub.s32 %v557, %v559
        %v561 = vrot.slane %v545, %v560
        %v563 = vunpack.c.l.s4 1966171168
        %v564 = vunpack.c.0.s8 %v563
        %v565 = vlaneseq
        %v566 = vshrl.u32 %v565, 7
        %v567 = vsub.s32 %v564, %v566
        %v568 = vrot.slane %v546, %v567
        %v570 = vunpack.c.l.s4 1966171168
        %v571 = vunpack.c.0.s8 %v570
        %v572 = vlaneseq
        %v573 = vshrl.u32 %v572, 7
        %v574 = vsub.s32 %v571, %v573
        %v575 = vrot.slane %v547, %v574
        %v576 = vcombine.high %v554, %v554
        %v577 = vcombine.high %v561, %v561
        %v578 = vcombine.high %v568, %v568
        %v579 = vcombine.high %v575, %v575
        %v844 = vunpack.c.l.b16 %v274
        %v845 = vunpack.c.h.b16 %v274
        %v846 = vunpack.c.l.b16 %v275
        %v847 = vunpack.c.h.b16 %v275
        %v848 = vunpack.c.l.b16 %v276
        %v849 = vunpack.c.h.b16 %v276
        %v850 = vunpack.c.l.b16 %v277
        %v851 = vunpack.c.h.b16 %v277
        %v852 = vunpack.c.l.b16 %v278
        %v853 = vunpack.c.h.b16 %v278
        %v854 = vunpack.c.l.b16 %v279
        %v855 = vunpack.c.h.b16 %v279
        %v856 = vunpack.c.l.b16 %v280
        %v857 = vunpack.c.h.b16 %v280
        %v858 = vunpack.c.l.b16 %v281
        %v859 = vunpack.c.h.b16 %v281
        %v860 = vunpack.c.l.b16 %v282
        %v861 = vunpack.c.h.b16 %v282
        %v862 = vunpack.c.l.b16 %v283
        %v863 = vunpack.c.h.b16 %v283
        %v864 = vunpack.c.l.b16 %v284
        %v865 = vunpack.c.h.b16 %v284
        %v866 = vunpack.c.l.b16 %v285
        %v867 = vunpack.c.h.b16 %v285
        %v868 = vunpack.c.l.b16 %v286
        %v869 = vunpack.c.h.b16 %v286
        %v870 = vunpack.c.l.b16 %v287
        %v871 = vunpack.c.h.b16 %v287
        %v872 = vunpack.c.l.b16 %v288
        %v873 = vunpack.c.h.b16 %v288
        %v874 = vunpack.c.l.b16 %v289
        %v875 = vunpack.c.h.b16 %v289
        %v876 = vunpack.c.l.b16 %v290
        %v877 = vunpack.c.h.b16 %v290
        %v878 = vunpack.c.l.b16 %v291
        %v879 = vunpack.c.h.b16 %v291
        %v880 = vunpack.c.l.b16 %v292
        %v881 = vunpack.c.h.b16 %v292
        %v882 = vunpack.c.l.b16 %v293
        %v883 = vunpack.c.h.b16 %v293
        %v884 = vunpack.c.l.b16 %v294
        %v885 = vunpack.c.h.b16 %v294
        %v886 = vunpack.c.l.b16 %v295
        %v887 = vunpack.c.h.b16 %v295
        %v888 = vunpack.c.l.b16 %v296
        %v889 = vunpack.c.h.b16 %v296
        %v890 = vunpack.c.l.b16 %v297
        %v891 = vunpack.c.h.b16 %v297
        %v892 = vunpack.c.l.b16 %v298
        %v893 = vunpack.c.h.b16 %v298
        %v894 = vunpack.c.l.b16 %v299
        %v895 = vunpack.c.h.b16 %v299
        %v896 = vunpack.c.l.b16 %v300
        %v897 = vunpack.c.h.b16 %v300
        %v898 = vunpack.c.l.b16 %v301
        %v899 = vunpack.c.h.b16 %v301
        %v900 = vunpack.c.l.b16 %v302
        %v901 = vunpack.c.h.b16 %v302
        %v902 = vunpack.c.l.b16 %v303
        %v903 = vunpack.c.h.b16 %v303
        %v904 = vunpack.c.l.b16 %v304
        %v905 = vunpack.c.h.b16 %v304
        %v906 = vunpack.c.l.b16 %v305
        %v907 = vunpack.c.h.b16 %v305
        %v908 = vunpack.c.l.b16 %v306
        %v909 = vunpack.c.h.b16 %v306
        %v910 = vunpack.c.l.b16 %v307
        %v911 = vunpack.c.h.b16 %v307
        %v912 = vunpack.c.l.b16 %v308
        %v913 = vunpack.c.h.b16 %v308
        %v914 = vunpack.c.l.b16 %v309
        %v915 = vunpack.c.h.b16 %v309
        %v916 = vunpack.c.l.b16 %v310
        %v917 = vunpack.c.h.b16 %v310
        %v918 = vunpack.c.l.b16 %v311
        %v919 = vunpack.c.h.b16 %v311
        %v920 = vunpack.c.l.b16 %v312
        %v921 = vunpack.c.h.b16 %v312
        %v922 = vunpack.c.l.b16 %v313
        %v923 = vunpack.c.h.b16 %v313
        %v924 = vunpack.c.l.b16 %v314
        %v925 = vunpack.c.h.b16 %v314
        %v926 = vunpack.c.l.b16 %v315
        %v927 = vunpack.c.h.b16 %v315
        %v928 = vunpack.c.l.b16 %v316
        %v929 = vunpack.c.h.b16 %v316
        %v930 = vunpack.c.l.b16 %v317
        %v931 = vunpack.c.h.b16 %v317
        %v932 = vunpack.c.l.b16 %v318
        %v933 = vunpack.c.h.b16 %v318
        %v934 = vunpack.c.l.b16 %v319
        %v935 = vunpack.c.h.b16 %v319
        %v936 = vunpack.c.l.b16 %v320
        %v937 = vunpack.c.h.b16 %v320
        %v938 = vunpack.c.l.b16 %v321
        %v939 = vunpack.c.h.b16 %v321
        %v940 = vunpack.c.l.b16 %v322
        %v941 = vunpack.c.h.b16 %v322
        %v942 = vunpack.c.l.b16 %v323
        %v943 = vunpack.c.h.b16 %v323
        %v944 = vunpack.c.l.b16 %v324
        %v945 = vunpack.c.h.b16 %v324
        %v946 = vunpack.c.l.b16 %v325
        %v947 = vunpack.c.h.b16 %v325
        %v948 = vunpack.c.l.b16 %v326
        %v949 = vunpack.c.h.b16 %v326
        %v950 = vunpack.c.l.b16 %v327
        %v951 = vunpack.c.h.b16 %v327
        %v952 = vunpack.c.l.b16 %v328
        %v953 = vunpack.c.h.b16 %v328
        %v954 = vunpack.c.l.b16 %v329
        %v955 = vunpack.c.h.b16 %v329
        %v956 = vunpack.c.l.b16 %v330
        %v957 = vunpack.c.h.b16 %v330
        %v958 = vunpack.c.l.b16 %v331
        %v959 = vunpack.c.h.b16 %v331
        %v960 = vunpack.c.l.b16 %v332
        %v961 = vunpack.c.h.b16 %v332
        %v962 = vunpack.c.l.b16 %v333
        %v963 = vunpack.c.h.b16 %v333
        %v964 = vunpack.c.l.b16 %v334
        %v965 = vunpack.c.h.b16 %v334
        %v966 = vunpack.c.l.b16 %v335
        %v967 = vunpack.c.h.b16 %v335
        %v968 = vunpack.c.l.b16 %v336
        %v969 = vunpack.c.h.b16 %v336
        %v970 = vunpack.c.l.b16 %v337
        %v971 = vunpack.c.h.b16 %v337
        %v972 = vunpack.c.l.b16 %v338
        %v973 = vunpack.c.h.b16 %v338
        %v974 = vunpack.c.l.b16 %v339
        %v975 = vunpack.c.h.b16 %v339
        %v976 = vunpack.c.l.b16 %v340
        %v977 = vunpack.c.h.b16 %v340
        %v978 = vunpack.c.l.b16 %v341
        %v979 = vunpack.c.h.b16 %v341
        %v980 = vunpack.c.l.b16 %v342
        %v981 = vunpack.c.h.b16 %v342
        %v982 = vunpack.c.l.b16 %v343
        %v983 = vunpack.c.h.b16 %v343
        %v984 = vunpack.c.l.b16 %v344
        %v985 = vunpack.c.h.b16 %v344
        %v986 = vunpack.c.l.b16 %v345
        %v987 = vunpack.c.h.b16 %v345
        %v988 = vunpack.c.l.b16 %v346
        %v989 = vunpack.c.h.b16 %v346
        %v990 = vunpack.c.l.b16 %v347
        %v991 = vunpack.c.h.b16 %v347
        %v992 = vunpack.c.l.b16 %v348
        %v993 = vunpack.c.h.b16 %v348
        %v994 = vunpack.c.l.b16 %v349
        %v995 = vunpack.c.h.b16 %v349
        %v996 = vunpack.c.l.b16 %v350
        %v997 = vunpack.c.h.b16 %v350
        %v998 = vunpack.c.l.b16 %v351
        %v999 = vunpack.c.h.b16 %v351
        %v1000 = vunpack.c.l.b16 %v352
        %v1001 = vunpack.c.h.b16 %v352
        %v1002 = vunpack.c.l.b16 %v353
        %v1003 = vunpack.c.h.b16 %v353
        %v1004 = vunpack.c.l.b16 %v354
        %v1005 = vunpack.c.h.b16 %v354
        %v1006 = vunpack.c.l.b16 %v355
        %v1007 = vunpack.c.h.b16 %v355
        %v1008 = vunpack.c.l.b16 %v356
        %v1009 = vunpack.c.h.b16 %v356
        %v1010 = vunpack.c.l.b16 %v357
        %v1011 = vunpack.c.h.b16 %v357
        %v1012 = vunpack.c.l.b16 %v358
        %v1013 = vunpack.c.h.b16 %v358
        %v1014 = vunpack.c.l.b16 %v359
        %v1015 = vunpack.c.h.b16 %v359
        %v1016 = vunpack.c.l.b16 %v360
        %v1017 = vunpack.c.h.b16 %v360
        %v1018 = vunpack.c.l.b16 %v361
        %v1019 = vunpack.c.h.b16 %v361
        %v1020 = vunpack.c.l.b16 %v362
        %v1021 = vunpack.c.h.b16 %v362
        %v1022 = vunpack.c.l.b16 %v363
        %v1023 = vunpack.c.h.b16 %v363
        %v1024 = vunpack.c.l.b16 %v364
        %v1025 = vunpack.c.h.b16 %v364
        %v1026 = vunpack.c.l.b16 %v365
        %v1027 = vunpack.c.h.b16 %v365
        %v1028 = vunpack.c.l.b16 %v366
        %v1029 = vunpack.c.h.b16 %v366
        %v1030 = vunpack.c.l.b16 %v367
        %v1031 = vunpack.c.h.b16 %v367
        %v1032 = vunpack.c.l.b16 %v368
        %v1033 = vunpack.c.h.b16 %v368
        %v1034 = vunpack.c.l.b16 %v369
        %v1035 = vunpack.c.h.b16 %v369
        %v1036 = vunpack.c.l.b16 %v370
        %v1037 = vunpack.c.h.b16 %v370
        %v1038 = vunpack.c.l.b16 %v371
        %v1039 = vunpack.c.h.b16 %v371
        %v1040 = vunpack.c.l.b16 %v372
        %v1041 = vunpack.c.h.b16 %v372
        %v1042 = vunpack.c.l.b16 %v373
        %v1043 = vunpack.c.h.b16 %v373
        %v1044 = vunpack.c.l.b16 %v374
        %v1045 = vunpack.c.h.b16 %v374
        %v1046 = vunpack.c.l.b16 %v375
        %v1047 = vunpack.c.h.b16 %v375
        %v1048 = vunpack.c.l.b16 %v376
        %v1049 = vunpack.c.h.b16 %v376
        %v1050 = vunpack.c.l.b16 %v377
        %v1051 = vunpack.c.h.b16 %v377
        %v1052 = vunpack.c.l.b16 %v378
        %v1053 = vunpack.c.h.b16 %v378
        %v1054 = vunpack.c.l.b16 %v379
        %v1055 = vunpack.c.h.b16 %v379
        %v1056 = vunpack.c.l.b16 %v380
        %v1057 = vunpack.c.h.b16 %v380
        %v1058 = vunpack.c.l.b16 %v381
        %v1059 = vunpack.c.h.b16 %v381
        %v1060 = vunpack.c.l.b16 %v382
        %v1061 = vunpack.c.h.b16 %v382
        %v1062 = vunpack.c.l.b16 %v383
        %v1063 = vunpack.c.h.b16 %v383
        %v1064 = vunpack.c.l.b16 %v384
        %v1065 = vunpack.c.h.b16 %v384
        %v1066 = vunpack.c.l.b16 %v385
        %v1067 = vunpack.c.h.b16 %v385
        %v1068 = vunpack.c.l.b16 %v386
        %v1069 = vunpack.c.h.b16 %v386
        %v1070 = vunpack.c.l.b16 %v387
        %v1071 = vunpack.c.h.b16 %v387
        %v1072 = vunpack.c.l.b16 %v388
        %v1073 = vunpack.c.h.b16 %v388
        %v1074 = vunpack.c.l.b16 %v389
        %v1075 = vunpack.c.h.b16 %v389
        %v1076 = vunpack.c.l.b16 %v390
        %v1077 = vunpack.c.h.b16 %v390
        %v1078 = vunpack.c.l.b16 %v391
        %v1079 = vunpack.c.h.b16 %v391
        %v1080 = vunpack.c.l.b16 %v392
        %v1081 = vunpack.c.h.b16 %v392
        %v1082 = vunpack.c.l.b16 %v393
        %v1083 = vunpack.c.h.b16 %v393
        %v1084 = vunpack.c.l.b16 %v394
        %v1085 = vunpack.c.h.b16 %v394
        %v1086 = vunpack.c.l.b16 %v395
        %v1087 = vunpack.c.h.b16 %v395
        %v1088 = vunpack.c.l.b16 %v396
        %v1089 = vunpack.c.h.b16 %v396
        %v1090 = vunpack.c.l.b16 %v397
        %v1091 = vunpack.c.h.b16 %v397
        %v1092 = vunpack.c.l.b16 %v398
        %v1093 = vunpack.c.h.b16 %v398
        %v1094 = vunpack.c.l.b16 %v399
        %v1095 = vunpack.c.h.b16 %v399
        %v1096 = vunpack.c.l.b16 %v400
        %v1097 = vunpack.c.h.b16 %v400
        %v1098 = vunpack.c.l.b16 %v401
        %v1099 = vunpack.c.h.b16 %v401
        %v1100 = vunpack.c.l.b16 %v402
        %v1101 = vunpack.c.h.b16 %v402
        %v1102 = vunpack.c.l.b16 %v403
        %v1103 = vunpack.c.h.b16 %v403
        %v1104 = vunpack.c.l.b16 %v404
        %v1105 = vunpack.c.h.b16 %v404
        %v1106 = vunpack.c.l.b16 %v405
        %v1107 = vunpack.c.h.b16 %v405
        %v1108 = vunpack.c.l.b16 %v406
        %v1109 = vunpack.c.h.b16 %v406
        %v1110 = vunpack.c.l.b16 %v407
        %v1111 = vunpack.c.h.b16 %v407
        %v1112 = vunpack.c.l.b16 %v408
        %v1113 = vunpack.c.h.b16 %v408
        %v1114 = vunpack.c.l.b16 %v409
        %v1115 = vunpack.c.h.b16 %v409
        %v1116 = vunpack.c.l.b16 %v410
        %v1117 = vunpack.c.h.b16 %v410
        %v1118 = vunpack.c.l.b16 %v411
        %v1119 = vunpack.c.h.b16 %v411
        %v1120 = vunpack.c.l.b16 %v412
        %v1121 = vunpack.c.h.b16 %v412
        %v1122 = vunpack.c.l.b16 %v413
        %v1123 = vunpack.c.h.b16 %v413
        %v1124 = vunpack.c.l.b16 %v414
        %v1125 = vunpack.c.h.b16 %v414
        %v1126 = vunpack.c.l.b16 %v415
        %v1127 = vunpack.c.h.b16 %v415
        %v1128 = vunpack.c.l.b16 %v416
        %v1129 = vunpack.c.h.b16 %v416
        %v1130 = vunpack.c.l.b16 %v417
        %v1131 = vunpack.c.h.b16 %v417
        %v1132 = vunpack.c.l.b16 %v418
        %v1133 = vunpack.c.h.b16 %v418
        %v1134 = vunpack.c.l.b16 %v419
        %v1135 = vunpack.c.h.b16 %v419
        %v1136 = vunpack.c.l.b16 %v420
        %v1137 = vunpack.c.h.b16 %v420
        %v1138 = vunpack.c.l.b16 %v421
        %v1139 = vunpack.c.h.b16 %v421
        %v1140 = vunpack.c.l.b16 %v422
        %v1141 = vunpack.c.h.b16 %v422
        %v1142 = vunpack.c.l.b16 %v423
        %v1143 = vunpack.c.h.b16 %v423
        %v1144 = vunpack.c.l.b16 %v424
        %v1145 = vunpack.c.h.b16 %v424
        %v1146 = vunpack.c.l.b16 %v425
        %v1147 = vunpack.c.h.b16 %v425
        %v1148 = vunpack.c.l.b16 %v426
        %v1149 = vunpack.c.h.b16 %v426
        %v1150 = vunpack.c.l.b16 %v427
        %v1151 = vunpack.c.h.b16 %v427
        %v1152 = vunpack.c.l.b16 %v428
        %v1153 = vunpack.c.h.b16 %v428
        %v1154 = vunpack.c.l.b16 %v429
        %v1155 = vunpack.c.h.b16 %v429
        %v1156 = vunpack.c.l.b16 %v430
        %v1157 = vunpack.c.h.b16 %v430
        %v1158 = vunpack.c.l.b16 %v431
        %v1159 = vunpack.c.h.b16 %v431
        %v1160 = vunpack.c.l.b16 %v432
        %v1161 = vunpack.c.h.b16 %v432
        %v1162 = vunpack.c.l.b16 %v433
        %v1163 = vunpack.c.h.b16 %v433
        %v1164 = vunpack.c.l.b16 %v434
        %v1165 = vunpack.c.h.b16 %v434
        %v1166 = vunpack.c.l.b16 %v435
        %v1167 = vunpack.c.h.b16 %v435
        %v1168 = vunpack.c.l.b16 %v436
        %v1169 = vunpack.c.h.b16 %v436
        %v1170 = vunpack.c.l.b16 %v437
        %v1171 = vunpack.c.h.b16 %v437
        %v1172 = vunpack.c.l.b16 %v438
        %v1173 = vunpack.c.h.b16 %v438
        %v1174 = vunpack.c.l.b16 %v439
        %v1175 = vunpack.c.h.b16 %v439
        %v1176 = vunpack.c.l.b16 %v440
        %v1177 = vunpack.c.h.b16 %v440
        %v1178 = vunpack.c.l.b16 %v441
        %v1179 = vunpack.c.h.b16 %v441
        %v1180 = vunpack.c.l.b16 %v442
        %v1181 = vunpack.c.h.b16 %v442
        %v1182 = vunpack.c.l.b16 %v443
        %v1183 = vunpack.c.h.b16 %v443
        %v1184 = vunpack.c.l.b16 %v444
        %v1185 = vunpack.c.h.b16 %v444
        %v1186 = vunpack.c.l.b16 %v445
        %v1187 = vunpack.c.h.b16 %v445
        %v1188 = vunpack.c.l.b16 %v446
        %v1189 = vunpack.c.h.b16 %v446
        %v1190 = vunpack.c.l.b16 %v447
        %v1191 = vunpack.c.h.b16 %v447
        %v1192 = vunpack.c.l.b16 %v448
        %v1193 = vunpack.c.h.b16 %v448
        %v1194 = vunpack.c.l.b16 %v449
        %v1195 = vunpack.c.h.b16 %v449
        %v1196 = vunpack.c.l.b16 %v450
        %v1197 = vunpack.c.h.b16 %v450
        %v1198 = vunpack.c.l.b16 %v451
        %v1199 = vunpack.c.h.b16 %v451
        %v1200 = vunpack.c.l.b16 %v452
        %v1201 = vunpack.c.h.b16 %v452
        %v1202 = vunpack.c.l.b16 %v453
        %v1203 = vunpack.c.h.b16 %v453
        %v1204 = vunpack.c.l.b16 %v454
        %v1205 = vunpack.c.h.b16 %v454
        %v1206 = vunpack.c.l.b16 %v455
        %v1207 = vunpack.c.h.b16 %v455
        %v1208 = vunpack.c.l.b16 %v456
        %v1209 = vunpack.c.h.b16 %v456
        %v1210 = vunpack.c.l.b16 %v457
        %v1211 = vunpack.c.h.b16 %v457
        %v1212 = vunpack.c.l.b16 %v458
        %v1213 = vunpack.c.h.b16 %v458
        %v1214 = vunpack.c.l.b16 %v459
        %v1215 = vunpack.c.h.b16 %v459
        %v1216 = vunpack.c.l.b16 %v460
        %v1217 = vunpack.c.h.b16 %v460
        %v1218 = vunpack.c.l.b16 %v461
        %v1219 = vunpack.c.h.b16 %v461
        %v1220 = vunpack.c.l.b16 %v462
        %v1221 = vunpack.c.h.b16 %v462
        %v1222 = vunpack.c.l.b16 %v463
        %v1223 = vunpack.c.h.b16 %v463
        %v1224 = vunpack.c.l.b16 %v464
        %v1225 = vunpack.c.h.b16 %v464
        %v1226 = vunpack.c.l.b16 %v465
        %v1227 = vunpack.c.h.b16 %v465
        %v1228 = vunpack.c.l.b16 %v466
        %v1229 = vunpack.c.h.b16 %v466
        %v1230 = vunpack.c.l.b16 %v467
        %v1231 = vunpack.c.h.b16 %v467
        %v1232 = vunpack.c.l.b16 %v468
        %v1233 = vunpack.c.h.b16 %v468
        %v1234 = vunpack.c.l.b16 %v469
        %v1235 = vunpack.c.h.b16 %v469
        %v1236 = vunpack.c.l.b16 %v470
        %v1237 = vunpack.c.h.b16 %v470
        %v1238 = vunpack.c.l.b16 %v471
        %v1239 = vunpack.c.h.b16 %v471
        %v1240 = vunpack.c.l.b16 %v472
        %v1241 = vunpack.c.h.b16 %v472
        %v1242 = vunpack.c.l.b16 %v473
        %v1243 = vunpack.c.h.b16 %v473
        %v1244 = vunpack.c.l.b16 %v474
        %v1245 = vunpack.c.h.b16 %v474
        %v1246 = vunpack.c.l.b16 %v475
        %v1247 = vunpack.c.h.b16 %v475
        %v1248 = vunpack.c.l.b16 %v476
        %v1249 = vunpack.c.h.b16 %v476
        %v1250 = vunpack.c.l.b16 %v477
        %v1251 = vunpack.c.h.b16 %v477
        %v1252 = vunpack.c.l.b16 %v478
        %v1253 = vunpack.c.h.b16 %v478
        %v1254 = vunpack.c.l.b16 %v479
        %v1255 = vunpack.c.h.b16 %v479
        %v1256 = vunpack.c.l.b16 %v480
        %v1257 = vunpack.c.h.b16 %v480
        %v1258 = vunpack.c.l.b16 %v481
        %v1259 = vunpack.c.h.b16 %v481
        %v1260 = vunpack.c.l.b16 %v482
        %v1261 = vunpack.c.h.b16 %v482
        %v1262 = vunpack.c.l.b16 %v483
        %v1263 = vunpack.c.h.b16 %v483
        %v1264 = vunpack.c.l.b16 %v484
        %v1265 = vunpack.c.h.b16 %v484
        %v1266 = vunpack.c.l.b16 %v485
        %v1267 = vunpack.c.h.b16 %v485
        %v1268 = vunpack.c.l.b16 %v486
        %v1269 = vunpack.c.h.b16 %v486
        %v1270 = vunpack.c.l.b16 %v487
        %v1271 = vunpack.c.h.b16 %v487
        %v1272 = vunpack.c.l.b16 %v488
        %v1273 = vunpack.c.h.b16 %v488
        %v1274 = vunpack.c.l.b16 %v489
        %v1275 = vunpack.c.h.b16 %v489
        %v1276 = vunpack.c.l.b16 %v490
        %v1277 = vunpack.c.h.b16 %v490
        %v1278 = vunpack.c.l.b16 %v491
        %v1279 = vunpack.c.h.b16 %v491
        %v1280 = vunpack.c.l.b16 %v492
        %v1281 = vunpack.c.h.b16 %v492
        %v1282 = vunpack.c.l.b16 %v493
        %v1283 = vunpack.c.h.b16 %v493
        %v1284 = vunpack.c.l.b16 %v494
        %v1285 = vunpack.c.h.b16 %v494
        %v1286 = vunpack.c.l.b16 %v495
        %v1287 = vunpack.c.h.b16 %v495
        %v1288 = vunpack.c.l.b16 %v496
        %v1289 = vunpack.c.h.b16 %v496
        %v1290 = vunpack.c.l.b16 %v497
        %v1291 = vunpack.c.h.b16 %v497
        %v1292 = vunpack.c.l.b16 %v498
        %v1293 = vunpack.c.h.b16 %v498
        %v1294 = vunpack.c.l.b16 %v499
        %v1295 = vunpack.c.h.b16 %v499
        %v1296 = vunpack.c.l.b16 %v500
        %v1297 = vunpack.c.h.b16 %v500
        %v1298 = vunpack.c.l.b16 %v501
        %v1299 = vunpack.c.h.b16 %v501
        %v1300 = vunpack.c.l.b16 %v502
        %v1301 = vunpack.c.h.b16 %v502
        %v1302 = vunpack.c.l.b16 %v503
        %v1303 = vunpack.c.h.b16 %v503
        %v1304 = vunpack.c.l.b16 %v504
        %v1305 = vunpack.c.h.b16 %v504
        %v1306 = vunpack.c.l.b16 %v505
        %v1307 = vunpack.c.h.b16 %v505
        %v1308 = vunpack.c.l.b16 %v506
        %v1309 = vunpack.c.h.b16 %v506
        %v1310 = vunpack.c.l.b16 %v507
        %v1311 = vunpack.c.h.b16 %v507
        %v1312 = vunpack.c.l.b16 %v508
        %v1313 = vunpack.c.h.b16 %v508
        %v1314 = vunpack.c.l.b16 %v509
        %v1315 = vunpack.c.h.b16 %v509
        %v1316 = vunpack.c.l.b16 %v510
        %v1317 = vunpack.c.h.b16 %v510
        %v1318 = vunpack.c.l.b16 %v511
        %v1319 = vunpack.c.h.b16 %v511
        %v1320 = vunpack.c.l.b16 %v512
        %v1321 = vunpack.c.h.b16 %v512
        %v1322 = vunpack.c.l.b16 %v513
        %v1323 = vunpack.c.h.b16 %v513
        %v1324 = vunpack.c.l.b16 %v514
        %v1325 = vunpack.c.h.b16 %v514
        %v1326 = vunpack.c.l.b16 %v515
        %v1327 = vunpack.c.h.b16 %v515
        %v1328 = vunpack.c.l.b16 %v516
        %v1329 = vunpack.c.h.b16 %v516
        %v1330 = vunpack.c.l.b16 %v517
        %v1331 = vunpack.c.h.b16 %v517
        %v1332 = vunpack.c.l.b16 %v518
        %v1333 = vunpack.c.h.b16 %v518
        %v1334 = vunpack.c.l.b16 %v519
        %v1335 = vunpack.c.h.b16 %v519
        %v1336 = vunpack.c.l.b16 %v520
        %v1337 = vunpack.c.h.b16 %v520
        %v1338 = vunpack.c.l.b16 %v521
        %v1339 = vunpack.c.h.b16 %v521
        %v1340 = vunpack.c.l.b16 %v522
        %v1341 = vunpack.c.h.b16 %v522
        %v1342 = vunpack.c.l.b16 %v523
        %v1343 = vunpack.c.h.b16 %v523
        %v1344 = vunpack.c.l.b16 %v524
        %v1345 = vunpack.c.h.b16 %v524
        %v1346 = vunpack.c.l.b16 %v525
        %v1347 = vunpack.c.h.b16 %v525
        %v1348 = vunpack.c.l.b16 %v526
        %v1349 = vunpack.c.h.b16 %v526
        %v1350 = vunpack.c.l.b16 %v527
        %v1351 = vunpack.c.h.b16 %v527
        %v1352 = vunpack.c.l.b16 %v528
        %v1353 = vunpack.c.h.b16 %v528
        %v1354 = vunpack.c.l.b16 %v529
        %v1355 = vunpack.c.h.b16 %v529
        %v1356 = vpack.c.b16 %v848, %v844
        %v1357 = vpack.c.b16 %v849, %v845
        %v1358 = vpack.c.b16 %v850, %v846
        %v1359 = vpack.c.b16 %v851, %v847
        %v1360 = vpack.c.b16 %v856, %v852
        %v1361 = vpack.c.b16 %v857, %v853
        %v1362 = vpack.c.b16 %v858, %v854
        %v1363 = vpack.c.b16 %v859, %v855
        %v1364 = vpack.c.b16 %v864, %v860
        %v1365 = vpack.c.b16 %v865, %v861
        %v1366 = vpack.c.b16 %v866, %v862
        %v1367 = vpack.c.b16 %v867, %v863
        %v1368 = vpack.c.b16 %v872, %v868
        %v1369 = vpack.c.b16 %v873, %v869
        %v1370 = vpack.c.b16 %v874, %v870
        %v1371 = vpack.c.b16 %v875, %v871
        %v1372 = vpack.c.b16 %v880, %v876
        %v1373 = vpack.c.b16 %v881, %v877
        %v1374 = vpack.c.b16 %v882, %v878
        %v1375 = vpack.c.b16 %v883, %v879
        %v1376 = vpack.c.b16 %v888, %v884
        %v1377 = vpack.c.b16 %v889, %v885
        %v1378 = vpack.c.b16 %v890, %v886
        %v1379 = vpack.c.b16 %v891, %v887
        %v1380 = vpack.c.b16 %v896, %v892
        %v1381 = vpack.c.b16 %v897, %v893
        %v1382 = vpack.c.b16 %v898, %v894
        %v1383 = vpack.c.b16 %v899, %v895
        %v1384 = vpack.c.b16 %v904, %v900
        %v1385 = vpack.c.b16 %v905, %v901
        %v1386 = vpack.c.b16 %v906, %v902
        %v1387 = vpack.c.b16 %v907, %v903
        %v1388 = vpack.c.b16 %v912, %v908
        %v1389 = vpack.c.b16 %v913, %v909
        %v1390 = vpack.c.b16 %v914, %v910
        %v1391 = vpack.c.b16 %v915, %v911
        %v1392 = vpack.c.b16 %v920, %v916
        %v1393 = vpack.c.b16 %v921, %v917
        %v1394 = vpack.c.b16 %v922, %v918
        %v1395 = vpack.c.b16 %v923, %v919
        %v1396 = vpack.c.b16 %v928, %v924
        %v1397 = vpack.c.b16 %v929, %v925
        %v1398 = vpack.c.b16 %v930, %v926
        %v1399 = vpack.c.b16 %v931, %v927
        %v1400 = vpack.c.b16 %v936, %v932
        %v1401 = vpack.c.b16 %v937, %v933
        %v1402 = vpack.c.b16 %v938, %v934
        %v1403 = vpack.c.b16 %v939, %v935
        %v1404 = vpack.c.b16 %v944, %v940
        %v1405 = vpack.c.b16 %v945, %v941
        %v1406 = vpack.c.b16 %v946, %v942
        %v1407 = vpack.c.b16 %v947, %v943
        %v1408 = vpack.c.b16 %v952, %v948
        %v1409 = vpack.c.b16 %v953, %v949
        %v1410 = vpack.c.b16 %v954, %v950
        %v1411 = vpack.c.b16 %v955, %v951
        %v1412 = vpack.c.b16 %v960, %v956
        %v1413 = vpack.c.b16 %v961, %v957
        %v1414 = vpack.c.b16 %v962, %v958
        %v1415 = vpack.c.b16 %v963, %v959
        %v1416 = vpack.c.b16 %v968, %v964
        %v1417 = vpack.c.b16 %v969, %v965
        %v1418 = vpack.c.b16 %v970, %v966
        %v1419 = vpack.c.b16 %v971, %v967
        %v1420 = vpack.c.b16 %v976, %v972
        %v1421 = vpack.c.b16 %v977, %v973
        %v1422 = vpack.c.b16 %v978, %v974
        %v1423 = vpack.c.b16 %v979, %v975
        %v1424 = vpack.c.b16 %v984, %v980
        %v1425 = vpack.c.b16 %v985, %v981
        %v1426 = vpack.c.b16 %v986, %v982
        %v1427 = vpack.c.b16 %v987, %v983
        %v1428 = vpack.c.b16 %v992, %v988
        %v1429 = vpack.c.b16 %v993, %v989
        %v1430 = vpack.c.b16 %v994, %v990
        %v1431 = vpack.c.b16 %v995, %v991
        %v1432 = vpack.c.b16 %v1000, %v996
        %v1433 = vpack.c.b16 %v1001, %v997
        %v1434 = vpack.c.b16 %v1002, %v998
        %v1435 = vpack.c.b16 %v1003, %v999
        %v1436 = vpack.c.b16 %v1008, %v1004
        %v1437 = vpack.c.b16 %v1009, %v1005
        %v1438 = vpack.c.b16 %v1010, %v1006
        %v1439 = vpack.c.b16 %v1011, %v1007
        %v1440 = vpack.c.b16 %v1016, %v1012
        %v1441 = vpack.c.b16 %v1017, %v1013
        %v1442 = vpack.c.b16 %v1018, %v1014
        %v1443 = vpack.c.b16 %v1019, %v1015
        %v1444 = vpack.c.b16 %v1024, %v1020
        %v1445 = vpack.c.b16 %v1025, %v1021
        %v1446 = vpack.c.b16 %v1026, %v1022
        %v1447 = vpack.c.b16 %v1027, %v1023
        %v1448 = vpack.c.b16 %v1032, %v1028
        %v1449 = vpack.c.b16 %v1033, %v1029
        %v1450 = vpack.c.b16 %v1034, %v1030
        %v1451 = vpack.c.b16 %v1035, %v1031
        %v1452 = vpack.c.b16 %v1040, %v1036
        %v1453 = vpack.c.b16 %v1041, %v1037
        %v1454 = vpack.c.b16 %v1042, %v1038
        %v1455 = vpack.c.b16 %v1043, %v1039
        %v1456 = vpack.c.b16 %v1048, %v1044
        %v1457 = vpack.c.b16 %v1049, %v1045
        %v1458 = vpack.c.b16 %v1050, %v1046
        %v1459 = vpack.c.b16 %v1051, %v1047
        %v1460 = vpack.c.b16 %v1056, %v1052
        %v1461 = vpack.c.b16 %v1057, %v1053
        %v1462 = vpack.c.b16 %v1058, %v1054
        %v1463 = vpack.c.b16 %v1059, %v1055
        %v1464 = vpack.c.b16 %v1064, %v1060
        %v1465 = vpack.c.b16 %v1065, %v1061
        %v1466 = vpack.c.b16 %v1066, %v1062
        %v1467 = vpack.c.b16 %v1067, %v1063
        %v1468 = vpack.c.b16 %v1072, %v1068
        %v1469 = vpack.c.b16 %v1073, %v1069
        %v1470 = vpack.c.b16 %v1074, %v1070
        %v1471 = vpack.c.b16 %v1075, %v1071
        %v1472 = vpack.c.b16 %v1080, %v1076
        %v1473 = vpack.c.b16 %v1081, %v1077
        %v1474 = vpack.c.b16 %v1082, %v1078
        %v1475 = vpack.c.b16 %v1083, %v1079
        %v1476 = vpack.c.b16 %v1088, %v1084
        %v1477 = vpack.c.b16 %v1089, %v1085
        %v1478 = vpack.c.b16 %v1090, %v1086
        %v1479 = vpack.c.b16 %v1091, %v1087
        %v1480 = vpack.c.b16 %v1096, %v1092
        %v1481 = vpack.c.b16 %v1097, %v1093
        %v1482 = vpack.c.b16 %v1098, %v1094
        %v1483 = vpack.c.b16 %v1099, %v1095
        %v1484 = vpack.c.b16 %v1104, %v1100
        %v1485 = vpack.c.b16 %v1105, %v1101
        %v1486 = vpack.c.b16 %v1106, %v1102
        %v1487 = vpack.c.b16 %v1107, %v1103
        %v1488 = vpack.c.b16 %v1112, %v1108
        %v1489 = vpack.c.b16 %v1113, %v1109
        %v1490 = vpack.c.b16 %v1114, %v1110
        %v1491 = vpack.c.b16 %v1115, %v1111
        %v1492 = vpack.c.b16 %v1120, %v1116
        %v1493 = vpack.c.b16 %v1121, %v1117
        %v1494 = vpack.c.b16 %v1122, %v1118
        %v1495 = vpack.c.b16 %v1123, %v1119
        %v1496 = vpack.c.b16 %v1128, %v1124
        %v1497 = vpack.c.b16 %v1129, %v1125
        %v1498 = vpack.c.b16 %v1130, %v1126
        %v1499 = vpack.c.b16 %v1131, %v1127
        %v1500 = vpack.c.b16 %v1136, %v1132
        %v1501 = vpack.c.b16 %v1137, %v1133
        %v1502 = vpack.c.b16 %v1138, %v1134
        %v1503 = vpack.c.b16 %v1139, %v1135
        %v1504 = vpack.c.b16 %v1144, %v1140
        %v1505 = vpack.c.b16 %v1145, %v1141
        %v1506 = vpack.c.b16 %v1146, %v1142
        %v1507 = vpack.c.b16 %v1147, %v1143
        %v1508 = vpack.c.b16 %v1152, %v1148
        %v1509 = vpack.c.b16 %v1153, %v1149
        %v1510 = vpack.c.b16 %v1154, %v1150
        %v1511 = vpack.c.b16 %v1155, %v1151
        %v1512 = vpack.c.b16 %v1160, %v1156
        %v1513 = vpack.c.b16 %v1161, %v1157
        %v1514 = vpack.c.b16 %v1162, %v1158
        %v1515 = vpack.c.b16 %v1163, %v1159
        %v1516 = vpack.c.b16 %v1168, %v1164
        %v1517 = vpack.c.b16 %v1169, %v1165
        %v1518 = vpack.c.b16 %v1170, %v1166
        %v1519 = vpack.c.b16 %v1171, %v1167
        %v1520 = vpack.c.b16 %v1176, %v1172
        %v1521 = vpack.c.b16 %v1177, %v1173
        %v1522 = vpack.c.b16 %v1178, %v1174
        %v1523 = vpack.c.b16 %v1179, %v1175
        %v1524 = vpack.c.b16 %v1184, %v1180
        %v1525 = vpack.c.b16 %v1185, %v1181
        %v1526 = vpack.c.b16 %v1186, %v1182
        %v1527 = vpack.c.b16 %v1187, %v1183
        %v1528 = vpack.c.b16 %v1192, %v1188
        %v1529 = vpack.c.b16 %v1193, %v1189
        %v1530 = vpack.c.b16 %v1194, %v1190
        %v1531 = vpack.c.b16 %v1195, %v1191
        %v1532 = vpack.c.b16 %v1200, %v1196
        %v1533 = vpack.c.b16 %v1201, %v1197
        %v1534 = vpack.c.b16 %v1202, %v1198
        %v1535 = vpack.c.b16 %v1203, %v1199
        %v1536 = vpack.c.b16 %v1208, %v1204
        %v1537 = vpack.c.b16 %v1209, %v1205
        %v1538 = vpack.c.b16 %v1210, %v1206
        %v1539 = vpack.c.b16 %v1211, %v1207
        %v1540 = vpack.c.b16 %v1216, %v1212
        %v1541 = vpack.c.b16 %v1217, %v1213
        %v1542 = vpack.c.b16 %v1218, %v1214
        %v1543 = vpack.c.b16 %v1219, %v1215
        %v1544 = vpack.c.b16 %v1224, %v1220
        %v1545 = vpack.c.b16 %v1225, %v1221
        %v1546 = vpack.c.b16 %v1226, %v1222
        %v1547 = vpack.c.b16 %v1227, %v1223
        %v1548 = vpack.c.b16 %v1232, %v1228
        %v1549 = vpack.c.b16 %v1233, %v1229
        %v1550 = vpack.c.b16 %v1234, %v1230
        %v1551 = vpack.c.b16 %v1235, %v1231
        %v1552 = vpack.c.b16 %v1240, %v1236
        %v1553 = vpack.c.b16 %v1241, %v1237
        %v1554 = vpack.c.b16 %v1242, %v1238
        %v1555 = vpack.c.b16 %v1243, %v1239
        %v1556 = vpack.c.b16 %v1248, %v1244
        %v1557 = vpack.c.b16 %v1249, %v1245
        %v1558 = vpack.c.b16 %v1250, %v1246
        %v1559 = vpack.c.b16 %v1251, %v1247
        %v1560 = vpack.c.b16 %v1256, %v1252
        %v1561 = vpack.c.b16 %v1257, %v1253
        %v1562 = vpack.c.b16 %v1258, %v1254
        %v1563 = vpack.c.b16 %v1259, %v1255
        %v1564 = vpack.c.b16 %v1264, %v1260
        %v1565 = vpack.c.b16 %v1265, %v1261
        %v1566 = vpack.c.b16 %v1266, %v1262
        %v1567 = vpack.c.b16 %v1267, %v1263
        %v1568 = vpack.c.b16 %v1272, %v1268
        %v1569 = vpack.c.b16 %v1273, %v1269
        %v1570 = vpack.c.b16 %v1274, %v1270
        %v1571 = vpack.c.b16 %v1275, %v1271
        %v1572 = vpack.c.b16 %v1280, %v1276
        %v1573 = vpack.c.b16 %v1281, %v1277
        %v1574 = vpack.c.b16 %v1282, %v1278
        %v1575 = vpack.c.b16 %v1283, %v1279
        %v1576 = vpack.c.b16 %v1288, %v1284
        %v1577 = vpack.c.b16 %v1289, %v1285
        %v1578 = vpack.c.b16 %v1290, %v1286
        %v1579 = vpack.c.b16 %v1291, %v1287
        %v1580 = vpack.c.b16 %v1296, %v1292
        %v1581 = vpack.c.b16 %v1297, %v1293
        %v1582 = vpack.c.b16 %v1298, %v1294
        %v1583 = vpack.c.b16 %v1299, %v1295
        %v1584 = vpack.c.b16 %v1304, %v1300
        %v1585 = vpack.c.b16 %v1305, %v1301
        %v1586 = vpack.c.b16 %v1306, %v1302
        %v1587 = vpack.c.b16 %v1307, %v1303
        %v1588 = vpack.c.b16 %v1312, %v1308
        %v1589 = vpack.c.b16 %v1313, %v1309
        %v1590 = vpack.c.b16 %v1314, %v1310
        %v1591 = vpack.c.b16 %v1315, %v1311
        %v1592 = vpack.c.b16 %v1320, %v1316
        %v1593 = vpack.c.b16 %v1321, %v1317
        %v1594 = vpack.c.b16 %v1322, %v1318
        %v1595 = vpack.c.b16 %v1323, %v1319
        %v1596 = vpack.c.b16 %v1328, %v1324
        %v1597 = vpack.c.b16 %v1329, %v1325
        %v1598 = vpack.c.b16 %v1330, %v1326
        %v1599 = vpack.c.b16 %v1331, %v1327
        %v1600 = vpack.c.b16 %v1336, %v1332
        %v1601 = vpack.c.b16 %v1337, %v1333
        %v1602 = vpack.c.b16 %v1338, %v1334
        %v1603 = vpack.c.b16 %v1339, %v1335
        %v1604 = vpack.c.b16 %v1344, %v1340
        %v1605 = vpack.c.b16 %v1345, %v1341
        %v1606 = vpack.c.b16 %v1346, %v1342
        %v1607 = vpack.c.b16 %v1347, %v1343
        %v1608 = vpack.c.b16 %v1352, %v1348
        %v1609 = vpack.c.b16 %v1353, %v1349
        %v1610 = vpack.c.b16 %v1354, %v1350
        %v1611 = vpack.c.b16 %v1355, %v1351
        %1868 = vmatprep.subr.bf16.mxu0 %v1385
        %1869 = vmatpush1.bf16.msra.mxu0 %v1384
        %1870 = vmatprep.subr.bf16.mxu0 %v1381
        %1871 = vmatpush1.bf16.msra.mxu0 %v1380
        %1872 = vmatprep.subr.bf16.mxu0 %v1377
        %1873 = vmatpush1.bf16.msra.mxu0 %v1376
        %1874 = vmatprep.subr.bf16.mxu0 %v1373
        %1875 = vmatpush1.bf16.msra.mxu0 %v1372
        %1876 = vmatprep.subr.bf16.mxu0 %v1369
        %1877 = vmatpush1.bf16.msra.mxu0 %v1368
        %1878 = vmatprep.subr.bf16.mxu0 %v1365
        %1879 = vmatpush1.bf16.msra.mxu0 %v1364
        %1880 = vmatprep.subr.bf16.mxu0 %v1361
        %1881 = vmatpush1.bf16.msra.mxu0 %v1360
        %1882 = vmatprep.subr.bf16.mxu0 %v1357
        %1883 = vmatpush1.bf16.msra.mxu0 %v1356
        %1884 = vmatprep.subr.bf16.mxu0 %v1417
        %1885 = vmatpush2.bf16.msra.mxu0 %v1416
        %1886 = vmatprep.subr.bf16.mxu0 %v1413
        %1887 = vmatpush2.bf16.msra.mxu0 %v1412
        %1888 = vmatprep.subr.bf16.mxu0 %v1409
        %1889 = vmatpush2.bf16.msra.mxu0 %v1408
        %1890 = vmatprep.subr.bf16.mxu0 %v1405
        %1891 = vmatpush2.bf16.msra.mxu0 %v1404
        %1892 = vmatprep.subr.bf16.mxu0 %v1401
        %1893 = vmatpush2.bf16.msra.mxu0 %v1400
        %1894 = vmatprep.subr.bf16.mxu0 %v1397
        %1895 = vmatpush2.bf16.msra.mxu0 %v1396
        %1896 = vmatprep.subr.bf16.mxu0 %v1393
        %1897 = vmatpush2.bf16.msra.mxu0 %v1392
        %1898 = vmatprep.subr.bf16.mxu0 %v1389
        %1899 = vmatpush2.bf16.msra.mxu0 %v1388
        %1900 = vmatprep.mubr.bf16.mxu0 %v568
        %1901 = vmatmul.mubr.bf16.gmra.mxu0 %v554
        %v1902 = vpop.f32.mrf.mxu0
        %v1903 = vadd.f32 0.0, %v1902
        %v1904 = vpop.f32.mrf.mxu0
        %v1905 = vadd.f32 0.0, %v1904
        %v1906 = vpop.f32.mrf.mxu0
        %v1907 = vpop.f32.mrf.mxu0
        %1908 = vdwg.mxu0
        %1909 = vmatprep.subr.bf16.mxu0 %v1449
        %1910 = vmatpush1.bf16.msra.mxu0 %v1448
        %1911 = vmatprep.subr.bf16.mxu0 %v1445
        %1912 = vmatpush1.bf16.msra.mxu0 %v1444
        %1913 = vmatprep.subr.bf16.mxu0 %v1441
        %1914 = vmatpush1.bf16.msra.mxu0 %v1440
        %1915 = vmatprep.subr.bf16.mxu0 %v1437
        %1916 = vmatpush1.bf16.msra.mxu0 %v1436
        %1917 = vmatprep.subr.bf16.mxu0 %v1433
        %1918 = vmatpush1.bf16.msra.mxu0 %v1432
        %1919 = vmatprep.subr.bf16.mxu0 %v1429
        %1920 = vmatpush1.bf16.msra.mxu0 %v1428
        %1921 = vmatprep.subr.bf16.mxu0 %v1425
        %1922 = vmatpush1.bf16.msra.mxu0 %v1424
        %1923 = vmatprep.subr.bf16.mxu0 %v1421
        %1924 = vmatpush1.bf16.msra.mxu0 %v1420
        %1925 = vmatprep.subr.bf16.mxu0 %v1481
        %1926 = vmatpush2.bf16.msra.mxu0 %v1480
        %1927 = vmatprep.subr.bf16.mxu0 %v1477
        %1928 = vmatpush2.bf16.msra.mxu0 %v1476
        %1929 = vmatprep.subr.bf16.mxu0 %v1473
        %1930 = vmatpush2.bf16.msra.mxu0 %v1472
        %1931 = vmatprep.subr.bf16.mxu0 %v1469
        %1932 = vmatpush2.bf16.msra.mxu0 %v1468
        %1933 = vmatprep.subr.bf16.mxu0 %v1465
        %1934 = vmatpush2.bf16.msra.mxu0 %v1464
        %1935 = vmatprep.subr.bf16.mxu0 %v1461
        %1936 = vmatpush2.bf16.msra.mxu0 %v1460
        %1937 = vmatprep.subr.bf16.mxu0 %v1457
        %1938 = vmatpush2.bf16.msra.mxu0 %v1456
        %1939 = vmatprep.subr.bf16.mxu0 %v1453
        %1940 = vmatpush2.bf16.msra.mxu0 %v1452
        %1941 = vmatprep.mubr.bf16.mxu0 %v578
        %1942 = vmatmul.mubr.bf16.gmra.mxu0 %v576
        %v1943 = vpop.f32.mrf.mxu0
        %v1944 = vadd.f32 %v1903, %v1943
        %v1945 = vpop.f32.mrf.mxu0
        %v1946 = vadd.f32 %v1905, %v1945
        %v1947 = vpop.f32.mrf.mxu0
        %v1948 = vpop.f32.mrf.mxu0
        %1949 = vdwg.mxu0
        %1950 = vmatprep.subr.bf16.mxu0 %v1513
        %1951 = vmatpush1.bf16.msra.mxu0 %v1512
        %1952 = vmatprep.subr.bf16.mxu0 %v1509
        %1953 = vmatpush1.bf16.msra.mxu0 %v1508
        %1954 = vmatprep.subr.bf16.mxu0 %v1505
        %1955 = vmatpush1.bf16.msra.mxu0 %v1504
        %1956 = vmatprep.subr.bf16.mxu0 %v1501
        %1957 = vmatpush1.bf16.msra.mxu0 %v1500
        %1958 = vmatprep.subr.bf16.mxu0 %v1497
        %1959 = vmatpush1.bf16.msra.mxu0 %v1496
        %1960 = vmatprep.subr.bf16.mxu0 %v1493
        %1961 = vmatpush1.bf16.msra.mxu0 %v1492
        %1962 = vmatprep.subr.bf16.mxu0 %v1489
        %1963 = vmatpush1.bf16.msra.mxu0 %v1488
        %1964 = vmatprep.subr.bf16.mxu0 %v1485
        %1965 = vmatpush1.bf16.msra.mxu0 %v1484
        %1966 = vmatprep.subr.bf16.mxu0 %v1545
        %1967 = vmatpush2.bf16.msra.mxu0 %v1544
        %1968 = vmatprep.subr.bf16.mxu0 %v1541
        %1969 = vmatpush2.bf16.msra.mxu0 %v1540
        %1970 = vmatprep.subr.bf16.mxu0 %v1537
        %1971 = vmatpush2.bf16.msra.mxu0 %v1536
        %1972 = vmatprep.subr.bf16.mxu0 %v1533
        %1973 = vmatpush2.bf16.msra.mxu0 %v1532
        %1974 = vmatprep.subr.bf16.mxu0 %v1529
        %1975 = vmatpush2.bf16.msra.mxu0 %v1528
        %1976 = vmatprep.subr.bf16.mxu0 %v1525
        %1977 = vmatpush2.bf16.msra.mxu0 %v1524
        %1978 = vmatprep.subr.bf16.mxu0 %v1521
        %1979 = vmatpush2.bf16.msra.mxu0 %v1520
        %1980 = vmatprep.subr.bf16.mxu0 %v1517
        %1981 = vmatpush2.bf16.msra.mxu0 %v1516
        %1982 = vmatprep.mubr.bf16.mxu0 %v575
        %1983 = vmatmul.mubr.bf16.gmra.mxu0 %v561
        %v1984 = vpop.f32.mrf.mxu0
        %v1985 = vadd.f32 %v1944, %v1984
        %v1986 = vpop.f32.mrf.mxu0
        %v1987 = vadd.f32 %v1946, %v1986
        %v1988 = vpop.f32.mrf.mxu0
        %v1989 = vpop.f32.mrf.mxu0
        %1990 = vdwg.mxu0
        %1991 = vmatprep.subr.bf16.mxu0 %v1577
        %1992 = vmatpush1.bf16.msra.mxu0 %v1576
        %1993 = vmatprep.subr.bf16.mxu0 %v1573
        %1994 = vmatpush1.bf16.msra.mxu0 %v1572
        %1995 = vmatprep.subr.bf16.mxu0 %v1569
        %1996 = vmatpush1.bf16.msra.mxu0 %v1568
        %1997 = vmatprep.subr.bf16.mxu0 %v1565
        %1998 = vmatpush1.bf16.msra.mxu0 %v1564
        %1999 = vmatprep.subr.bf16.mxu0 %v1561
        %2000 = vmatpush1.bf16.msra.mxu0 %v1560
        %2001 = vmatprep.subr.bf16.mxu0 %v1557
        %2002 = vmatpush1.bf16.msra.mxu0 %v1556
        %2003 = vmatprep.subr.bf16.mxu0 %v1553
        %2004 = vmatpush1.bf16.msra.mxu0 %v1552
        %2005 = vmatprep.subr.bf16.mxu0 %v1549
        %2006 = vmatpush1.bf16.msra.mxu0 %v1548
        %2007 = vmatprep.subr.bf16.mxu0 %v1609
        %2008 = vmatpush2.bf16.msra.mxu0 %v1608
        %2009 = vmatprep.subr.bf16.mxu0 %v1605
        %2010 = vmatpush2.bf16.msra.mxu0 %v1604
        %2011 = vmatprep.subr.bf16.mxu0 %v1601
        %2012 = vmatpush2.bf16.msra.mxu0 %v1600
        %2013 = vmatprep.subr.bf16.mxu0 %v1597
        %2014 = vmatpush2.bf16.msra.mxu0 %v1596
        %2015 = vmatprep.subr.bf16.mxu0 %v1593
        %2016 = vmatpush2.bf16.msra.mxu0 %v1592
        %2017 = vmatprep.subr.bf16.mxu0 %v1589
        %2018 = vmatpush2.bf16.msra.mxu0 %v1588
        %2019 = vmatprep.subr.bf16.mxu0 %v1585
        %2020 = vmatpush2.bf16.msra.mxu0 %v1584
        %2021 = vmatprep.subr.bf16.mxu0 %v1581
        %2022 = vmatpush2.bf16.msra.mxu0 %v1580
        %2023 = vmatprep.mubr.bf16.mxu0 %v579
        %2024 = vmatmul.mubr.bf16.gmra.mxu0 %v577
        %v2025 = vpop.f32.mrf.mxu0
        %v2026 = vadd.f32 %v1985, %v2025
        %v2027 = vpop.f32.mrf.mxu0
        %v2028 = vadd.f32 %v1987, %v2027
        %v2029 = vpop.f32.mrf.mxu0
        %v2030 = vpop.f32.mrf.mxu0
        %2031 = vdwg.mxu0
        %2032 = vmatprep.subr.bf16.mxu0 %v1387
        %2033 = vmatpush1.bf16.msra.mxu0 %v1386
        %2034 = vmatprep.subr.bf16.mxu0 %v1383
        %2035 = vmatpush1.bf16.msra.mxu0 %v1382
        %2036 = vmatprep.subr.bf16.mxu0 %v1379
        %2037 = vmatpush1.bf16.msra.mxu0 %v1378
        %2038 = vmatprep.subr.bf16.mxu0 %v1375
        %2039 = vmatpush1.bf16.msra.mxu0 %v1374
        %2040 = vmatprep.subr.bf16.mxu0 %v1371
        %2041 = vmatpush1.bf16.msra.mxu0 %v1370
        %2042 = vmatprep.subr.bf16.mxu0 %v1367
        %2043 = vmatpush1.bf16.msra.mxu0 %v1366
        %2044 = vmatprep.subr.bf16.mxu0 %v1363
        %2045 = vmatpush1.bf16.msra.mxu0 %v1362
        %2046 = vmatprep.subr.bf16.mxu0 %v1359
        %2047 = vmatpush1.bf16.msra.mxu0 %v1358
        %2048 = vmatprep.subr.bf16.mxu0 %v1419
        %2049 = vmatpush2.bf16.msra.mxu0 %v1418
        %2050 = vmatprep.subr.bf16.mxu0 %v1415
        %2051 = vmatpush2.bf16.msra.mxu0 %v1414
        %2052 = vmatprep.subr.bf16.mxu0 %v1411
        %2053 = vmatpush2.bf16.msra.mxu0 %v1410
        %2054 = vmatprep.subr.bf16.mxu0 %v1407
        %2055 = vmatpush2.bf16.msra.mxu0 %v1406
        %2056 = vmatprep.subr.bf16.mxu0 %v1403
        %2057 = vmatpush2.bf16.msra.mxu0 %v1402
        %2058 = vmatprep.subr.bf16.mxu0 %v1399
        %2059 = vmatpush2.bf16.msra.mxu0 %v1398
        %2060 = vmatprep.subr.bf16.mxu0 %v1395
        %2061 = vmatpush2.bf16.msra.mxu0 %v1394
        %2062 = vmatprep.subr.bf16.mxu0 %v1391
        %2063 = vmatpush2.bf16.msra.mxu0 %v1390
        %2064 = vmatprep.mubr.bf16.mxu0 %v568
        %2065 = vmatmul.mubr.bf16.gmra.mxu0 %v554
        %v2066 = vpop.f32.mrf.mxu0
        %v2067 = vadd.f32 0.0, %v2066
        %v2068 = vpop.f32.mrf.mxu0
        %v2069 = vadd.f32 0.0, %v2068
        %v2070 = vpop.f32.mrf.mxu0
        %v2071 = vpop.f32.mrf.mxu0
        %2072 = vdwg.mxu0
        %2073 = vmatprep.subr.bf16.mxu0 %v1451
        %2074 = vmatpush1.bf16.msra.mxu0 %v1450
        %2075 = vmatprep.subr.bf16.mxu0 %v1447
        %2076 = vmatpush1.bf16.msra.mxu0 %v1446
        %2077 = vmatprep.subr.bf16.mxu0 %v1443
        %2078 = vmatpush1.bf16.msra.mxu0 %v1442
        %2079 = vmatprep.subr.bf16.mxu0 %v1439
        %2080 = vmatpush1.bf16.msra.mxu0 %v1438
        %2081 = vmatprep.subr.bf16.mxu0 %v1435
        %2082 = vmatpush1.bf16.msra.mxu0 %v1434
        %2083 = vmatprep.subr.bf16.mxu0 %v1431
        %2084 = vmatpush1.bf16.msra.mxu0 %v1430
        %2085 = vmatprep.subr.bf16.mxu0 %v1427
        %2086 = vmatpush1.bf16.msra.mxu0 %v1426
        %2087 = vmatprep.subr.bf16.mxu0 %v1423
        %2088 = vmatpush1.bf16.msra.mxu0 %v1422
        %2089 = vmatprep.subr.bf16.mxu0 %v1483
        %2090 = vmatpush2.bf16.msra.mxu0 %v1482
        %2091 = vmatprep.subr.bf16.mxu0 %v1479
        %2092 = vmatpush2.bf16.msra.mxu0 %v1478
        %2093 = vmatprep.subr.bf16.mxu0 %v1475
        %2094 = vmatpush2.bf16.msra.mxu0 %v1474
        %2095 = vmatprep.subr.bf16.mxu0 %v1471
        %2096 = vmatpush2.bf16.msra.mxu0 %v1470
        %2097 = vmatprep.subr.bf16.mxu0 %v1467
        %2098 = vmatpush2.bf16.msra.mxu0 %v1466
        %2099 = vmatprep.subr.bf16.mxu0 %v1463
        %2100 = vmatpush2.bf16.msra.mxu0 %v1462
        %2101 = vmatprep.subr.bf16.mxu0 %v1459
        %2102 = vmatpush2.bf16.msra.mxu0 %v1458
        %2103 = vmatprep.subr.bf16.mxu0 %v1455
        %2104 = vmatpush2.bf16.msra.mxu0 %v1454
        %2105 = vmatprep.mubr.bf16.mxu0 %v578
        %2106 = vmatmul.mubr.bf16.gmra.mxu0 %v576
        %v2107 = vpop.f32.mrf.mxu0
        %v2108 = vadd.f32 %v2067, %v2107
        %v2109 = vpop.f32.mrf.mxu0
        %v2110 = vadd.f32 %v2069, %v2109
        %v2111 = vpop.f32.mrf.mxu0
        %v2112 = vpop.f32.mrf.mxu0
        %2113 = vdwg.mxu0
        %2114 = vmatprep.subr.bf16.mxu0 %v1515
        %2115 = vmatpush1.bf16.msra.mxu0 %v1514
        %2116 = vmatprep.subr.bf16.mxu0 %v1511
        %2117 = vmatpush1.bf16.msra.mxu0 %v1510
        %2118 = vmatprep.subr.bf16.mxu0 %v1507
        %2119 = vmatpush1.bf16.msra.mxu0 %v1506
        %2120 = vmatprep.subr.bf16.mxu0 %v1503
        %2121 = vmatpush1.bf16.msra.mxu0 %v1502
        %2122 = vmatprep.subr.bf16.mxu0 %v1499
        %2123 = vmatpush1.bf16.msra.mxu0 %v1498
        %2124 = vmatprep.subr.bf16.mxu0 %v1495
        %2125 = vmatpush1.bf16.msra.mxu0 %v1494
        %2126 = vmatprep.subr.bf16.mxu0 %v1491
        %2127 = vmatpush1.bf16.msra.mxu0 %v1490
        %2128 = vmatprep.subr.bf16.mxu0 %v1487
        %2129 = vmatpush1.bf16.msra.mxu0 %v1486
        %2130 = vmatprep.subr.bf16.mxu0 %v1547
        %2131 = vmatpush2.bf16.msra.mxu0 %v1546
        %2132 = vmatprep.subr.bf16.mxu0 %v1543
        %2133 = vmatpush2.bf16.msra.mxu0 %v1542
        %2134 = vmatprep.subr.bf16.mxu0 %v1539
        %2135 = vmatpush2.bf16.msra.mxu0 %v1538
        %2136 = vmatprep.subr.bf16.mxu0 %v1535
        %2137 = vmatpush2.bf16.msra.mxu0 %v1534
        %2138 = vmatprep.subr.bf16.mxu0 %v1531
        %2139 = vmatpush2.bf16.msra.mxu0 %v1530
        %2140 = vmatprep.subr.bf16.mxu0 %v1527
        %2141 = vmatpush2.bf16.msra.mxu0 %v1526
        %2142 = vmatprep.subr.bf16.mxu0 %v1523
        %2143 = vmatpush2.bf16.msra.mxu0 %v1522
        %2144 = vmatprep.subr.bf16.mxu0 %v1519
        %2145 = vmatpush2.bf16.msra.mxu0 %v1518
        %2146 = vmatprep.mubr.bf16.mxu0 %v575
        %2147 = vmatmul.mubr.bf16.gmra.mxu0 %v561
        %v2148 = vpop.f32.mrf.mxu0
        %v2149 = vadd.f32 %v2108, %v2148
        %v2150 = vpop.f32.mrf.mxu0
        %v2151 = vadd.f32 %v2110, %v2150
        %v2152 = vpop.f32.mrf.mxu0
        %v2153 = vpop.f32.mrf.mxu0
        %2154 = vdwg.mxu0
        %2155 = vmatprep.subr.bf16.mxu0 %v1579
        %2156 = vmatpush1.bf16.msra.mxu0 %v1578
        %2157 = vmatprep.subr.bf16.mxu0 %v1575
        %2158 = vmatpush1.bf16.msra.mxu0 %v1574
        %2159 = vmatprep.subr.bf16.mxu0 %v1571
        %2160 = vmatpush1.bf16.msra.mxu0 %v1570
        %2161 = vmatprep.subr.bf16.mxu0 %v1567
        %2162 = vmatpush1.bf16.msra.mxu0 %v1566
        %2163 = vmatprep.subr.bf16.mxu0 %v1563
        %2164 = vmatpush1.bf16.msra.mxu0 %v1562
        %2165 = vmatprep.subr.bf16.mxu0 %v1559
        %2166 = vmatpush1.bf16.msra.mxu0 %v1558
        %2167 = vmatprep.subr.bf16.mxu0 %v1555
        %2168 = vmatpush1.bf16.msra.mxu0 %v1554
        %2169 = vmatprep.subr.bf16.mxu0 %v1551
        %2170 = vmatpush1.bf16.msra.mxu0 %v1550
        %2171 = vmatprep.subr.bf16.mxu0 %v1611
        %2172 = vmatpush2.bf16.msra.mxu0 %v1610
        %2173 = vmatprep.subr.bf16.mxu0 %v1607
        %2174 = vmatpush2.bf16.msra.mxu0 %v1606
        %2175 = vmatprep.subr.bf16.mxu0 %v1603
        %2176 = vmatpush2.bf16.msra.mxu0 %v1602
        %2177 = vmatprep.subr.bf16.mxu0 %v1599
        %2178 = vmatpush2.bf16.msra.mxu0 %v1598
        %2179 = vmatprep.subr.bf16.mxu0 %v1595
        %2180 = vmatpush2.bf16.msra.mxu0 %v1594
        %2181 = vmatprep.subr.bf16.mxu0 %v1591
        %2182 = vmatpush2.bf16.msra.mxu0 %v1590
        %2183 = vmatprep.subr.bf16.mxu0 %v1587
        %2184 = vmatpush2.bf16.msra.mxu0 %v1586
        %2185 = vmatprep.subr.bf16.mxu0 %v1583
        %2186 = vmatpush2.bf16.msra.mxu0 %v1582
        %2187 = vmatprep.mubr.bf16.mxu0 %v579
        %2188 = vmatmul.mubr.bf16.gmra.mxu0 %v577
        %v2189 = vpop.f32.mrf.mxu0
        %v2190 = vadd.f32 %v2149, %v2189
        %v2191 = vpop.f32.mrf.mxu0
        %v2192 = vadd.f32 %v2151, %v2191
        %v2193 = vpop.f32.mrf.mxu0
        %v2194 = vpop.f32.mrf.mxu0
        %2195 = vdwg.mxu0
        %v2200 = vcombine.low %v2026, %v2028
        %v2201 = vcombine.low %v2190, %v2192
        %v2203 = vunpack.c.l.s4 1983009808
        %v2204 = vunpack.c.0.s8 %v2203
        %v2205 = vlaneseq
        %v2206 = vshrl.u32 %v2205, 7
        %v2207 = vsub.s32 %v2204, %v2206
        %v2208 = vrot.slane %v2200, %v2207
        %v2210 = vunpack.c.l.s4 1983009808
        %v2211 = vunpack.c.0.s8 %v2210
        %v2212 = vlaneseq
        %v2213 = vshrl.u32 %v2212, 7
        %v2214 = vsub.s32 %v2211, %v2213
        %v2215 = vrot.slane %v2201, %v2214
        %v2216 = vcombine.low %v2208, %v2215
        %v2218 = vadd.f32 %v272, %v2216
        %2219 = vst [vmem:[#allocation2] sm:$0xff] %v2218
        %p2220 = scmp.eq.s32.totalorder %s25, 2
        // Predicated region
        $region45: #{mobilenet_with_texture_hist.4} parent=31 // pred_check
          %p2221 = pneg %p2220
        $region46: #{mobilenet_with_texture_hist.4} parent=31 // pred_check_branch
          %2223 = sbr.rel (%p2221) target = $region48
        $region47: #{mobilenet_with_texture_hist.4} parent=31 // pred_region
          %v2224 = vld [vmem:[#allocation2] sm:$0xff]
          %v2225 = vld [vmem:[%s223] sm:$0xf]
          %v2227 = vlaneseq
          %v2228 = vshrl.u32 %v2227, 7
          %v2229 = vsub.s32 0, %v2228
          %v2230 = vrot.slane %v2225, %v2229
          %v2231 = vlaneseq
          %v2232 = vshrl.u32 %v2231, 7
          %v2233 = vsub.s32 1, %v2232
          %v2234 = vrot.slane %v2225, %v2233
          %v2235 = vlaneseq
          %v2236 = vshrl.u32 %v2235, 7
          %v2237 = vsub.s32 2, %v2236
          %v2238 = vrot.slane %v2225, %v2237
          %v2239 = vlaneseq
          %v2240 = vshrl.u32 %v2239, 7
          %v2241 = vsub.s32 3, %v2240
          %v2242 = vrot.slane %v2225, %v2241
          %v2243 = vcombine.low %v2230, %v2234
          %v2244 = vcombine.low %v2238, %v2242
          %v2246 = vunpack.c.l.s4 1983009808
          %v2247 = vunpack.c.0.s8 %v2246
          %v2248 = vlaneseq
          %v2249 = vshrl.u32 %v2248, 7
          %v2250 = vsub.s32 %v2247, %v2249
          %v2251 = vrot.slane %v2243, %v2250
          %v2253 = vunpack.c.l.s4 1983009808
          %v2254 = vunpack.c.0.s8 %v2253
          %v2255 = vlaneseq
          %v2256 = vshrl.u32 %v2255, 7
          %v2257 = vsub.s32 %v2254, %v2256
          %v2258 = vrot.slane %v2244, %v2257
          %v2259 = vcombine.low %v2251, %v2258
          %v2261 = vadd.f32 %v2224, %v2259
          %v2262 = vmax.f32 %v2261, 0.0
          %v2264 = vcombine.high %v2262, %v2262
          %v2266 = vunpack.c.l.s4 1983009808
          %v2267 = vunpack.c.0.s8 %v2266
          %v2268 = vlaneseq
          %v2269 = vshrl.u32 %v2268, 7
          %v2270 = vsub.s32 %v2267, %v2269
          %v2271 = vrot.slane %v2262, %v2270
          %v2273 = vunpack.c.l.s4 1983009808
          %v2274 = vunpack.c.0.s8 %v2273
          %v2275 = vlaneseq
          %v2276 = vshrl.u32 %v2275, 7
          %v2277 = vsub.s32 %v2274, %v2276
          %v2278 = vrot.slane %v2264, %v2277
          %v2279 = vcombine.high %v2271, %v2271
          %v2280 = vcombine.high %v2278, %v2278
          %v2285 = vpack.c.bf16 %v2271, %v2271
          %v2286 = vpack.c.bf16 %v2279, %v2279
          %v2287 = vpack.c.bf16 %v2278, %v2278
          %v2288 = vpack.c.bf16 %v2280, %v2280
          %v2293 = vcombine.low %v2285, %v2286
          %v2294 = vcombine.low %v2287, %v2288
          %v2296 = vunpack.c.l.s4 1966171168
          %v2297 = vunpack.c.0.s8 %v2296
          %v2298 = vlaneseq
          %v2299 = vshrl.u32 %v2298, 7
          %v2300 = vsub.s32 %v2297, %v2299
          %v2301 = vrot.slane %v2293, %v2300
          %v2303 = vunpack.c.l.s4 1966171168
          %v2304 = vunpack.c.0.s8 %v2303
          %v2305 = vlaneseq
          %v2306 = vshrl.u32 %v2305, 7
          %v2307 = vsub.s32 %v2304, %v2306
          %v2308 = vrot.slane %v2294, %v2307
          %v2309 = vcombine.low %v2301, %v2308
          %v2311 = vunpack.c.l.s4 1966171168
          %v2312 = vunpack.c.0.s8 %v2311
          %v2313 = vlaneseq
          %v2314 = vshrl.u32 %v2313, 7
          %v2315 = vsub.s32 %v2312, %v2314
          %v2316 = vrot.slane %v2309, %v2315
          %2318 = vst [vmem:[%s265] sm:$0xf] %v2316
        $region48: #{mobilenet_with_texture_hist.4} parent=31 // pred_fallthru
          _
        %s2319 = smul.u32 4, %s24
        %p2320 = scmp.lt.s32.totalorder %s2319, 7
        %s2321 = scalar_select %p2320, %s2319, 7
        %s2322 = scalar_lea.vmem %s3, %s2321
        // Predicated region
        $region49: #{mobilenet_with_texture_hist.4} parent=31 // pred_check
          %p2323 = pneg %p130
        $region50: #{mobilenet_with_texture_hist.4} parent=31 // pred_check_branch
          %2325 = sbr.rel (%p2323) target = $region52
        $region51: #{mobilenet_with_texture_hist.4} parent=31 // pred_region
          %s2326 = smul.u32 4, %s24
        $region52: #{mobilenet_with_texture_hist.4} parent=31 // pred_fallthru
          _
      $region32: #{mobilenet_with_texture_hist.4} parent=5 // pred_fallthru
        _
      %p2327 = scmp.le.s32.totalorder 2, %s15
      // Predicated region
      $region53: #{mobilenet_with_texture_hist.4} parent=5 // pred_check
        %p2328 = pneg %p2327
      $region54: #{mobilenet_with_texture_hist.4} parent=5 // pred_check_branch
        %2330 = sbr.rel (%p2328) target = $region56
      $region55: #{mobilenet_with_texture_hist.4} parent=5 // pred_region
        %s2331 = ssub.s32 %s15, 2
        // Predicated region
        $region57: #{mobilenet_with_texture_hist.4} parent=55 // pred_check
          %p2332 = pneg %p136
        $region58: #{mobilenet_with_texture_hist.4} parent=55 // pred_check_branch
          %2334 = sbr.rel (%p2332) target = $region60
        $region59: #{mobilenet_with_texture_hist.4} parent=55 // pred_region
          %s2335 = smul.u32 4, %s26
          %p2336 = scmp.lt.s32.totalorder %s2335, 7
          %s2337 = scalar_select %p2336, %s2335, 7
          %s2338 = scalar_lea.vmem %s3, %s2337
        $region60: #{mobilenet_with_texture_hist.4} parent=55 // pred_fallthru
          _
      $region56: #{mobilenet_with_texture_hist.4} parent=5 // pred_fallthru
        _
    $region6: #{mobilenet_with_texture_hist.4} parent=1 // loop_footer
      %s19 = sadd.s32 1, %s15
    $region7: #{mobilenet_with_texture_hist.4} parent=1 // loop_footer_branch
      %14 = sbr.rel target = $region3
    $region8: #{mobilenet_with_texture_hist.4} parent=1 // loop_exit
      _
    %2339 = vsyncpa [#allocation4], 1
    %s2340 = scalar_lea.sflag [#allocation4], 1
    %2341 = vsyncpa %s2340, 1
    %2342 = vsyncpa [#allocation6], 1
    %s2343 = scalar_lea.sflag [#allocation6], 1
    %2344 = vsyncpa %s2343, 1

</llo_original>
